<compile_context>
chip_gen: v7x
topology: tpu7x:2x2x1
jax: 0.10.0
libtpu: 0.0.40
codegen_flags: <defaults>
</compile_context>

<pallas_src>
import math
import functools

import jax
import jax.numpy as jnp
from jax import lax
from jax.experimental import pallas as pl
from jax.experimental.pallas import tpu as pltpu

DROP_P = 0.6
KEEP_P = 1.0 - DROP_P                        # Python float -> jaxpr literal (no captured jnp const)
KEEP_THRESHOLD_31 = int(KEEP_P * (1 << 31))  # compare against 31 uniform hash bits


def _signed32(v: int) -> int:
    v &= 0xFFFFFFFF
    return v - (1 << 32) if v >= (1 << 31) else v


# Python ints only: they lower to jaxpr literals. (jnp.uint32(...) constants were the cause of the
# previous "kernel captures constants" trace failure.)
_C_ROW = _signed32(0x9E3779B1)
_C_HEAD = _signed32(0x85EBCA77)
_C_SEED = _signed32(0xC2B2AE3D)
_C_MIX1 = _signed32(0x85EBCA6B)
_C_MIX2 = _signed32(0xC2B2AE35)


def _keep_mask(head, row, col, seed):
    """Deterministic counter-based Bernoulli(KEEP_P) mask; pure int32 VPU ops (wraps mod 2^32)."""
    x = col + row * _C_ROW + head * _C_HEAD + seed * _C_SEED
    x = x ^ ((x >> 16) & 0xFFFF)   # (arith shift + mask) == logical shift
    x = x * _C_MIX1
    x = x ^ ((x >> 16) & 0xFFFF)
    x = x * _C_MIX2
    x = x ^ ((x >> 16) & 0xFFFF)
    return (x & 0x7FFFFFFF) < KEEP_THRESHOLD_31


def _attn_kernel(seed_ref, q_ref, k_ref, v_ref, mask_ref, o_ref, *, dim):
    # One (batch, head-block) pair per grid step. Blocks: qkv (1, Hb, S, D), mask (1, 1, S, S).
    q = q_ref[0]            # (Hb, S, D)
    k = k_ref[0]            # (Hb, S, D)
    v = v_ref[0]            # (Hb, S, D)
    mask = mask_ref[0, 0]   # (S, S)
    hb = q.shape[0]

    # Fold 1/sqrt(d) into Q (S*D multiplies instead of S*S), keep operands in their input dtype
    # (bf16 inputs stay bf16 for the MXU); accumulate in f32 via preferred_element_type.
    q_scaled = q * (1.0 / math.sqrt(dim))

    # Q @ K^T expressed as a contraction over D (no explicit transpose/relayout of K).
    s = lax.dot_general(
        q_scaled, k,
        dimension_numbers=(((2,), (2,)), ((0,), (0,))),
        preferred_element_type=jnp.float32,
    )                                                     # (Hb, S, S) f32
    s = s + mask.astype(jnp.float32)

    # Numerically stable softmax over the key axis.
    m = jnp.max(s, axis=-1, keepdims=True)
    p = jnp.exp(s - m)
    denom = jnp.sum(p, axis=-1, keepdims=True)
    # Fold the dropout rescale 1/KEEP_P into the (cheap, length-S) denominator reciprocal.
    inv = 1.0 / (denom * KEEP_P)                          # (Hb, S, 1)

    # dropout(p=0.6, train=True): keep with prob 0.4; kept values already rescaled via `inv`.
    head_base = (pl.program_id(0) * pl.num_programs(1) + pl.program_id(1)) * hb
    row = lax.broadcasted_iota(jnp.int32, s.shape, 1)
    col = lax.broadcasted_iota(jnp.int32, s.shape, 2)
    head = lax.broadcasted_iota(jnp.int32, s.shape, 0) + head_base
    keep = _keep_mask(head, row, col, seed_ref[0])

    attn = jnp.where(keep, p * inv, 0.0)

    out = lax.dot_general(
        attn.astype(v.dtype), v,
        dimension_numbers=(((2,), (1,)), ((0,), (0,))),
        preferred_element_type=jnp.float32,
    )                                                     # (Hb, S, D)
    o_ref[0] = out.astype(o_ref.dtype)


def _pick_head_block(H, max_block=4):
    hb = min(H, max_block)
    while H % hb != 0:
        hb -= 1
    return hb


def attention(query, key, value, attn_mask, seed=0, block_heads=None):
    B, H, S, D = query.shape
    assert key.shape == (B, H, S, D) and value.shape == (B, H, S, D)
    assert attn_mask.shape == (1, 1, S, S)

    if block_heads is None:
        block_heads = _pick_head_block(H)
    assert H % block_heads == 0

    seed_arr = jnp.array([seed], dtype=jnp.int32)

    qkv_spec = pl.BlockSpec((1, block_heads, S, D), lambda b, h, seed_ref: (b, h, 0, 0))
    mask_spec = pl.BlockSpec((1, 1, S, S), lambda b, h, seed_ref: (0, 0, 0, 0))
    out_spec = pl.BlockSpec((1, block_heads, S, D), lambda b, h, seed_ref: (b, h, 0, 0))

    grid_spec = pltpu.PrefetchScalarGridSpec(
        num_scalar_prefetch=1,
        grid=(B, H // block_heads),
        in_specs=[qkv_spec, qkv_spec, qkv_spec, mask_spec],
        out_specs=out_spec,
    )

    kernel = functools.partial(_attn_kernel, dim=D)
    # TODO(synk): for seq_len >= ~1024, switch to a KV-tiled (flash-style online-softmax) variant so
    # the full (S, S) scores/mask never materialize in VMEM (needed to fit v7x's 64 MiB VMEM).
    return pl.pallas_call(
        kernel,
        out_shape=jax.ShapeDtypeStruct((B, H, S, D), query.dtype),
        grid_spec=grid_spec,
        compiler_params=pltpu.CompilerParams(
            dimension_semantics=("parallel", "parallel"),  # (batch, head-block) fully independent
            vmem_limit_bytes=64 * 1024 * 1024,
        ),
    )(seed_arr, query, key, value, attn_mask)


def _reference_attention(query, key, value, attn_mask, seed):
    """Pure-JAX reference using the identical dropout hash (for exact mask parity)."""
    B, H, S, D = query.shape
    scale = 1.0 / math.sqrt(D)
    s = jnp.einsum(
        "bhqd,bhkd->bhqk",
        query.astype(jnp.float32) * scale, key.astype(jnp.float32),
        precision=lax.Precision.HIGHEST, preferred_element_type=jnp.float32,
    )
    s = s + attn_mask.astype(jnp.float32)
    m = jnp.max(s, axis=-1, keepdims=True)
    p = jnp.exp(s - m)
    denom = jnp.sum(p, axis=-1, keepdims=True)

    head = jnp.arange(B * H, dtype=jnp.int32).reshape(B, H, 1, 1)
    row = jnp.arange(S, dtype=jnp.int32).reshape(1, 1, S, 1)
    col = jnp.arange(S, dtype=jnp.int32).reshape(1, 1, 1, S)
    keep = _keep_mask(head, row, col, jnp.int32(seed))

    attn = jnp.where(keep, p / (denom * KEEP_P), 0.0)
    out = jnp.einsum(
        "bhqk,bhkd->bhqd", attn, value.astype(jnp.float32),
        precision=lax.Precision.HIGHEST, preferred_element_type=jnp.float32,
    )
    return out.astype(query.dtype)


if __name__ == "__main__":
    # Small shapes consistent with the module's (batch, heads, seq, dim) convention.
    B, H, S, D = 1, 8, 128, 128
    key0 = jax.random.PRNGKey(0)
    k1, k2, k3, k4 = jax.random.split(key0, 4)
    query = jax.random.normal(k1, (B, H, S, D), dtype=jnp.float32)
    key_t = jax.random.normal(k2, (B, H, S, D), dtype=jnp.float32)
    value = jax.random.normal(k3, (B, H, S, D), dtype=jnp.float32)
    attn_mask = jax.random.normal(k4, (1, 1, S, S), dtype=jnp.float32)

    out = attention(query, key_t, value, attn_mask, seed=42)
    out = jax.block_until_ready(out)
    assert out.shape == (B, H, S, D)
    assert bool(jnp.all(jnp.isfinite(out)))

    ref = jax.block_until_ready(_reference_attention(query, key_t, value, attn_mask, seed=42))
    max_err = float(jnp.max(jnp.abs(out - ref)))
    assert jnp.allclose(out, ref, rtol=2e-3, atol=2e-3), f"max abs err {max_err}"
    print("KERNEL_OK")
</pallas_src>

<mosaic_0001>
module attributes {stable_mosaic.version = 11 : i64} {
  func.func @_attn_kernel(%arg0: i32, %arg1: i32, %arg2: memref<1xi32, #tpu.memory_space<smem>>, %arg3: memref<1x4x128x128xf32, #tpu.memory_space<vmem>>, %arg4: memref<1x4x128x128xf32, #tpu.memory_space<vmem>>, %arg5: memref<1x4x128x128xf32, #tpu.memory_space<vmem>>, %arg6: memref<1x1x128x128xf32, #tpu.memory_space<vmem>>, %arg7: memref<1x4x128x128xf32, #tpu.memory_space<vmem>>) attributes {dimension_semantics = [#tpu.dimension_semantics<parallel>, #tpu.dimension_semantics<parallel>], iteration_bounds = array<i64: 1, 2>, scalar_prefetch = 1 : i64, scratch_operands = 0 : i64, tpu.core_type = #tpu.core_type<tc>, window_params = [{transform_indices = @transform_0, window_bounds = array<i64: 1, 4, 128, 128>}, {transform_indices = @transform_1, window_bounds = array<i64: 1, 4, 128, 128>}, {transform_indices = @transform_2, window_bounds = array<i64: 1, 4, 128, 128>}, {pipeline_mode = #tpu.pipeline_mode<synchronous>, transform_indices = @transform_3, window_bounds = array<i64: 1, 1, 128, 128>}, {transform_indices = @transform_4, window_bounds = array<i64: 1, 4, 128, 128>}]} {
    %c0 = arith.constant 0 : index
    %c0_0 = arith.constant 0 : index
    %c0_1 = arith.constant 0 : index
    %c0_2 = arith.constant 0 : index
    %0 = vector.load %arg3[%c0, %c0_0, %c0_1, %c0_2] : memref<1x4x128x128xf32, #tpu.memory_space<vmem>>, vector<1x4x128x128xf32>
    %1 = vector.shape_cast %0 : vector<1x4x128x128xf32> to vector<4x128x128xf32>
    %c0_3 = arith.constant 0 : index
    %c0_4 = arith.constant 0 : index
    %c0_5 = arith.constant 0 : index
    %c0_6 = arith.constant 0 : index
    %2 = vector.load %arg4[%c0_3, %c0_4, %c0_5, %c0_6] : memref<1x4x128x128xf32, #tpu.memory_space<vmem>>, vector<1x4x128x128xf32>
    %3 = vector.shape_cast %2 : vector<1x4x128x128xf32> to vector<4x128x128xf32>
    %c0_7 = arith.constant 0 : index
    %c0_8 = arith.constant 0 : index
    %c0_9 = arith.constant 0 : index
    %c0_10 = arith.constant 0 : index
    %4 = vector.load %arg5[%c0_7, %c0_8, %c0_9, %c0_10] : memref<1x4x128x128xf32, #tpu.memory_space<vmem>>, vector<1x4x128x128xf32>
    %5 = vector.shape_cast %4 : vector<1x4x128x128xf32> to vector<4x128x128xf32>
    %c0_11 = arith.constant 0 : index
    %c0_12 = arith.constant 0 : index
    %c0_13 = arith.constant 0 : index
    %c0_14 = arith.constant 0 : index
    %6 = vector.load %arg6[%c0_11, %c0_12, %c0_13, %c0_14] : memref<1x1x128x128xf32, #tpu.memory_space<vmem>>, vector<1x1x128x128xf32>
    %7 = vector.shape_cast %6 : vector<1x1x128x128xf32> to vector<128x128xf32>
    %cst = arith.constant 0.0883883461 : f32
    %8 = vector.broadcast %cst : f32 to vector<4x128x128xf32>
    %9 = arith.mulf %1, %8 : vector<4x128x128xf32>
    %cst_15 = arith.constant dense<0.000000e+00> : vector<4x128x128xf32>
    %10 = tpu.matmul %9, %3, %cst_15 {dimension_numbers = #tpu.dot_dimension_numbers<[2], [2], [1], [1], [0, 0, 0, 1, 1, 1], [0], [0]>} : vector<4x128x128xf32>, vector<4x128x128xf32>, vector<4x128x128xf32> -> vector<4x128x128xf32>
    %11 = vector.shape_cast %7 : vector<128x128xf32> to vector<1x128x128xf32>
    %12 = vector.broadcast %11 : vector<1x128x128xf32> to vector<4x128x128xf32>
    %13 = arith.addf %10, %12 : vector<4x128x128xf32>
    %cst_16 = arith.constant dense<0xFF800000> : vector<4x128xf32>
    %14 = vector.multi_reduction <maximumf>, %13, %cst_16 [2] : vector<4x128x128xf32> to vector<4x128xf32>
    %15 = vector.shape_cast %14 : vector<4x128xf32> to vector<4x128x1xf32>
    %16 = vector.broadcast %15 : vector<4x128x1xf32> to vector<4x128x128xf32>
    %17 = arith.subf %13, %16 : vector<4x128x128xf32>
    %18 = math.exp %17 : vector<4x128x128xf32>
    %cst_17 = arith.constant dense<0.000000e+00> : vector<4x128xf32>
    %19 = vector.multi_reduction <add>, %18, %cst_17 [2] : vector<4x128x128xf32> to vector<4x128xf32>
    %20 = vector.shape_cast %19 : vector<4x128xf32> to vector<4x128x1xf32>
    %cst_18 = arith.constant 4.000000e-01 : f32
    %21 = vector.broadcast %cst_18 : f32 to vector<4x128x1xf32>
    %22 = arith.mulf %20, %21 : vector<4x128x1xf32>
    %cst_19 = arith.constant 1.000000e+00 : f32
    %23 = vector.broadcast %cst_19 : f32 to vector<4x128x1xf32>
    %24 = arith.divf %23, %22 : vector<4x128x1xf32>
    %c2_i32 = arith.constant 2 : i32
    %25 = arith.muli %arg0, %c2_i32 : i32
    %26 = arith.addi %25, %arg1 : i32
    %c4_i32 = arith.constant 4 : i32
    %27 = arith.muli %26, %c4_i32 : i32
    %28 = tpu.iota {dimensions = array<i32: 1>} : vector<4x128x128xi32>
    %29 = tpu.iota {dimensions = array<i32: 2>} : vector<4x128x128xi32>
    %30 = tpu.iota {dimensions = array<i32: 0>} : vector<4x128x128xi32>
    %31 = vector.broadcast %27 : i32 to vector<4x128x128xi32>
    %32 = arith.addi %30, %31 : vector<4x128x128xi32>
    %c0_20 = arith.constant 0 : index
    %33 = memref.load %arg2[%c0_20] : memref<1xi32, #tpu.memory_space<smem>>
    %c-1640531535_i32 = arith.constant -1640531535 : i32
    %34 = vector.broadcast %c-1640531535_i32 : i32 to vector<4x128x128xi32>
    %35 = arith.muli %28, %34 : vector<4x128x128xi32>
    %36 = arith.addi %29, %35 : vector<4x128x128xi32>
    %c-2048144777_i32 = arith.constant -2048144777 : i32
    %37 = vector.broadcast %c-2048144777_i32 : i32 to vector<4x128x128xi32>
    %38 = arith.muli %32, %37 : vector<4x128x128xi32>
    %39 = arith.addi %36, %38 : vector<4x128x128xi32>
    %c-1028477379_i32 = arith.constant -1028477379 : i32
    %40 = arith.muli %33, %c-1028477379_i32 : i32
    %41 = vector.broadcast %40 : i32 to vector<4x128x128xi32>
    %42 = arith.addi %39, %41 : vector<4x128x128xi32>
    %c16_i32 = arith.constant 16 : i32
    %43 = vector.broadcast %c16_i32 : i32 to vector<4x128x128xi32>
    %44 = arith.shrsi %42, %43 : vector<4x128x128xi32>
    %c65535_i32 = arith.constant 65535 : i32
    %45 = vector.broadcast %c65535_i32 : i32 to vector<4x128x128xi32>
    %46 = arith.andi %44, %45 : vector<4x128x128xi32>
    %47 = arith.xori %42, %46 : vector<4x128x128xi32>
    %c-2048144789_i32 = arith.constant -2048144789 : i32
    %48 = vector.broadcast %c-2048144789_i32 : i32 to vector<4x128x128xi32>
    %49 = arith.muli %47, %48 : vector<4x128x128xi32>
    %c16_i32_21 = arith.constant 16 : i32
    %50 = vector.broadcast %c16_i32_21 : i32 to vector<4x128x128xi32>
    %51 = arith.shrsi %49, %50 : vector<4x128x128xi32>
    %c65535_i32_22 = arith.constant 65535 : i32
    %52 = vector.broadcast %c65535_i32_22 : i32 to vector<4x128x128xi32>
    %53 = arith.andi %51, %52 : vector<4x128x128xi32>
    %54 = arith.xori %49, %53 : vector<4x128x128xi32>
    %c-1028477387_i32 = arith.constant -1028477387 : i32
    %55 = vector.broadcast %c-1028477387_i32 : i32 to vector<4x128x128xi32>
    %56 = arith.muli %54, %55 : vector<4x128x128xi32>
    %c16_i32_23 = arith.constant 16 : i32
    %57 = vector.broadcast %c16_i32_23 : i32 to vector<4x128x128xi32>
    %58 = arith.shrsi %56, %57 : vector<4x128x128xi32>
    %c65535_i32_24 = arith.constant 65535 : i32
    %59 = vector.broadcast %c65535_i32_24 : i32 to vector<4x128x128xi32>
    %60 = arith.andi %58, %59 : vector<4x128x128xi32>
    %61 = arith.xori %56, %60 : vector<4x128x128xi32>
    %c2147483647_i32 = arith.constant 2147483647 : i32
    %62 = vector.broadcast %c2147483647_i32 : i32 to vector<4x128x128xi32>
    %63 = arith.andi %61, %62 : vector<4x128x128xi32>
    %c858993459_i32 = arith.constant 858993459 : i32
    %64 = vector.broadcast %c858993459_i32 : i32 to vector<4x128x128xi32>
    %65 = arith.cmpi slt, %63, %64 : vector<4x128x128xi32>
    %66 = vector.broadcast %24 : vector<4x128x1xf32> to vector<4x128x128xf32>
    %67 = arith.mulf %18, %66 : vector<4x128x128xf32>
    %cst_25 = arith.constant 0.000000e+00 : f32
    %68 = vector.broadcast %cst_25 : f32 to vector<4x128x128xf32>
    %69 = arith.select %65, %67, %68 : vector<4x128x128xi1>, vector<4x128x128xf32>
    %cst_26 = arith.constant dense<0.000000e+00> : vector<4x128x128xf32>
    %70 = tpu.matmul %69, %5, %cst_26 {dimension_numbers = #tpu.dot_dimension_numbers<[2], [1], [1], [2], [0, 0, 0, 1, 1, 2], [0], [0]>} : vector<4x128x128xf32>, vector<4x128x128xf32>, vector<4x128x128xf32> -> vector<4x128x128xf32>
    %c0_27 = arith.constant 0 : index
    %c0_28 = arith.constant 0 : index
    %c0_29 = arith.constant 0 : index
    %c0_30 = arith.constant 0 : index
    %71 = vector.load %arg7[%c0_27, %c0_28, %c0_29, %c0_30] : memref<1x4x128x128xf32, #tpu.memory_space<vmem>>, vector<1x4x128x128xf32>
    %72 = vector.shape_cast %71 : vector<1x4x128x128xf32> to vector<4x128x128xf32>
    %73 = vector.shape_cast %70 : vector<4x128x128xf32> to vector<1x4x128x128xf32>
    tpu.vector_store %arg7[%c0_27, %c0_28, %c0_29, %c0_30], %73 {strides = array<i32>} : memref<1x4x128x128xf32, #tpu.memory_space<vmem>>, vector<1x4x128x128xf32>,
    return
  }
  func.func @transform_0(%arg0: i32, %arg1: i32, %arg2: memref<1xi32, #tpu.memory_space<smem>>) -> (i32, i32, i32, i32) {
    %c0_i32 = arith.constant 0 : i32
    %c0_i32_0 = arith.constant 0 : i32
    %c0_i32_1 = arith.constant 0 : i32
    return %arg0, %arg1, %c0_i32, %c0_i32_0 : i32, i32, i32, i32
  }
  func.func @transform_1(%arg0: i32, %arg1: i32, %arg2: memref<1xi32, #tpu.memory_space<smem>>) -> (i32, i32, i32, i32) {
    %c0_i32 = arith.constant 0 : i32
    %c0_i32_0 = arith.constant 0 : i32
    %c0_i32_1 = arith.constant 0 : i32
    return %arg0, %arg1, %c0_i32, %c0_i32_0 : i32, i32, i32, i32
  }
  func.func @transform_2(%arg0: i32, %arg1: i32, %arg2: memref<1xi32, #tpu.memory_space<smem>>) -> (i32, i32, i32, i32) {
    %c0_i32 = arith.constant 0 : i32
    %c0_i32_0 = arith.constant 0 : i32
    %c0_i32_1 = arith.constant 0 : i32
    return %arg0, %arg1, %c0_i32, %c0_i32_0 : i32, i32, i32, i32
  }
  func.func @transform_3(%arg0: i32, %arg1: i32, %arg2: memref<1xi32, #tpu.memory_space<smem>>) -> (i32, i32, i32, i32) {
    %c0_i32 = arith.constant 0 : i32
    %c0_i32_0 = arith.constant 0 : i32
    %c0_i32_1 = arith.constant 0 : i32
    %c0_i32_2 = arith.constant 0 : i32
    %c0_i32_3 = arith.constant 0 : i32
    return %c0_i32, %c0_i32_0, %c0_i32_1, %c0_i32_2 : i32, i32, i32, i32
  }
  func.func @transform_4(%arg0: i32, %arg1: i32, %arg2: memref<1xi32, #tpu.memory_space<smem>>) -> (i32, i32, i32, i32) {
    %c0_i32 = arith.constant 0 : i32
    %c0_i32_0 = arith.constant 0 : i32
    %c0_i32_1 = arith.constant 0 : i32
    return %arg0, %arg1, %c0_i32, %c0_i32_0 : i32, i32, i32, i32
  }
}

</mosaic_0001>

<llo_original>
// kernel: tpu_custom_call.1
$region0: #{tpu_custom_call.1}
  #allocation0 [shape = 'u32[]', space=smem, size = 0x4, offset = 0x4, fixed_abs, tag = 'smem constant byte address 0x4 - core index']
  #allocation1 [shape = 'u32[144,128]{1,0:T(1,128)}', space=vmem, size = 0x12000, scoped, tag = 'internal scratch']
  #allocation2 [shape = 's32[1]{0}', space=sflag, size = 0x4, scoped, tag = 'scoped memory for tpu_custom_call.1']
  #allocation3 [shape = 's32[1]{0:T(128)S(6)}', space=smem, size = 0x200, scoped, tag = 'prefetched SMEM operand 0']
  %s0 = inlined_call_operand.<no memory space> [shape: s32[1], index: 0, kind: input, shape index: {}]
  %s1 = inlined_call_operand.hbm [shape: f32[1,8,128,128], index: 1, kind: input, shape index: {}]
  %s2 = inlined_call_operand.hbm [shape: f32[1,8,128,128], index: 2, kind: input, shape index: {}]
  %s3 = inlined_call_operand.hbm [shape: f32[1,8,128,128], index: 3, kind: input, shape index: {}]
  %s4 = inlined_call_operand.hbm [shape: f32[1,1,128,128], index: 4, kind: input, shape index: {}]
  %s5 = inlined_call_operand.hbm [shape: f32[1,8,128,128], index: 5, kind: output, shape index: {}]
  %s6 = sld [smem:[#allocation0]]
  $region65: #{tpu_custom_call.1} parent=0
    _
  %s8 = ssub.s32 1, %s6
  %s9 = scalar_select 0, %s8, %s6
  %10 = sst [smem:[#allocation3]] %s0
  $region1: #{tpu_custom_call.1} parent=0
    #allocation4 [shape = 'u8[524288]{0}', space=vmem, size = 0x80000, scoped, tag = 'input window, operand 1']
    #allocation5 [shape = 's32[2]{0}', space=sflag, size = 0x8, scoped, tag = 'scoped memory for tpu_custom_call.1']
    #allocation6 [shape = 's32[2]{0}', space=sflag, size = 0x8, scoped, tag = 'scoped memory for tpu_custom_call.1']
    #allocation7 [shape = 'u8[524288]{0}', space=vmem, size = 0x80000, scoped, tag = 'input window, operand 2']
    #allocation8 [shape = 's32[2]{0}', space=sflag, size = 0x8, scoped, tag = 'scoped memory for tpu_custom_call.1']
    #allocation9 [shape = 'u8[524288]{0}', space=vmem, size = 0x80000, scoped, tag = 'input window, operand 3']
    #allocation10 [shape = 'u8[65536]{0}', space=vmem, size = 0x10000, scoped, tag = 'input window, operand 4, single buffered']
    #allocation11 [shape = 's32[1]{0}', space=sflag, size = 0x4, scoped, tag = 'scoped memory for tpu_custom_call.1']
    #allocation12 [shape = 'u8[524288]{0}', space=vmem, size = 0x80000, scoped, tag = 'output window, operand 0']
    %11 = vsyncpa [#allocation5], 0
    %s12 = scalar_lea.sflag [#allocation5], 1
    %13 = vsyncpa %s12, 0
    %14 = vsyncpa [#allocation8], 0
    %s15 = scalar_lea.sflag [#allocation8], 1
    %16 = vsyncpa %s15, 0
    %17 = vsyncpa [#allocation11], 0
    %18 = vsyncpa [#allocation6], 0
    %s19 = scalar_lea.sflag [#allocation6], 1
    %20 = vsyncpa %s19, 0
    loop: start=0, step=1, limit=4
    $region2: #{tpu_custom_call.1} parent=1 // loop_pre_header
      _
    $region3: #{tpu_custom_call.1} parent=1 // loop_header
      %s22 = sphi 0, %s26
      %p23 = scmp.ge.s32.totalorder %s22, 4
      %s29 = sphi 0, %s41
      %s30 = sphi 0, %s37
      %s31 = sphi 0, %s29
      %s32 = sphi 0, %s30
      %s33 = sphi 0, %s31
      %s34 = sphi 0, %s32
      %s46 = sphi 0, %s48
      %s49 = sphi 0, %s46
      %s50 = sphi 0, %s49
      %s66 = sphi 0, %s50
      %s74 = sphi 0, %s76
      %s77 = sphi 0, %s74
      %s78 = sphi 0, %s77
      %s94 = sphi 0, %s78
      %s102 = sphi 0, %s104
      %s105 = sphi 0, %s102
      %s106 = sphi 0, %s105
      %s122 = sphi 0, %s106
      %s126 = sphi 0, %s126
      %s128 = sphi 0, %s126
      %s129 = sphi 0, %s128
      %s143 = sphi 0, %s129
      %s151 = sphi 0, %s153
      %s154 = sphi 0, %s151
      %s155 = sphi 0, %s154
      %s171 = sphi 0, %s155
    $region4: #{tpu_custom_call.1} parent=1 // loop_header_branch
      %25 = sbr.rel (%p23) target = $region8
    $region5: #{tpu_custom_call.1} parent=1 // loop_body
      %s27 = ssub.s32 %s22, 1
      %s28 = ssub.s32 %s22, 2
      %s35 = sadd.s32 1, %s30
      %p36 = scmp.ge.s32.totalorder %s35, 2
      %s37 = scalar_select %p36, 0, %s35
      %s38 = sadd.s32 1, %s29
      %s39 = scalar_select %p36, %s38, %s29
      %p40 = scmp.ge.s32.totalorder %s39, 1
      %s41 = scalar_select %p40, 0, %s39
      %s42 = ssub.s32 %s29, %s41
      %s43 = ssub.s32 %s30, %s37
      %s44 = sor.u32 %s42, %s43
      %p45 = scmp.eq.s32.totalorder %s44, 0
      %s47 = sadd.s32 %s46, 1
      %s48 = scalar_select %p45, %s46, %s47
      %p51 = pneg %p45
      %p52 = scmp.eq.s32.totalorder %s22, 1
      %p53 = por %p51, %p52
      %p54 = scmp.ne.s32.totalorder %s46, %s49
      %p55 = scmp.eq.s32.totalorder %s22, 0
      %p56 = por %p54, %p55
      %p57 = scmp.ne.s32.totalorder %s46, %s49
      %p58 = scmp.eq.s32.totalorder %s27, 1
      %p59 = por %p57, %p58
      %p60 = scmp.ne.s32.totalorder %s49, %s50
      %p61 = scmp.eq.s32.totalorder %s27, 0
      %p62 = por %p60, %p61
      %p63 = scmp.ne.s32.totalorder %s49, %s50
      %p64 = scmp.eq.s32.totalorder %s28, 1
      %p65 = por %p63, %p64
      %p67 = scmp.ne.s32.totalorder %s50, %s66
      %p68 = scmp.eq.s32.totalorder %s28, 0
      %p69 = por %p67, %p68
      %s70 = ssub.s32 %s29, %s41
      %s71 = ssub.s32 %s30, %s37
      %s72 = sor.u32 %s70, %s71
      %p73 = scmp.eq.s32.totalorder %s72, 0
      %s75 = sadd.s32 %s74, 1
      %s76 = scalar_select %p73, %s74, %s75
      %p79 = pneg %p73
      %p80 = scmp.eq.s32.totalorder %s22, 1
      %p81 = por %p79, %p80
      %p82 = scmp.ne.s32.totalorder %s74, %s77
      %p83 = scmp.eq.s32.totalorder %s22, 0
      %p84 = por %p82, %p83
      %p85 = scmp.ne.s32.totalorder %s74, %s77
      %p86 = scmp.eq.s32.totalorder %s27, 1
      %p87 = por %p85, %p86
      %p88 = scmp.ne.s32.totalorder %s77, %s78
      %p89 = scmp.eq.s32.totalorder %s27, 0
      %p90 = por %p88, %p89
      %p91 = scmp.ne.s32.totalorder %s77, %s78
      %p92 = scmp.eq.s32.totalorder %s28, 1
      %p93 = por %p91, %p92
      %p95 = scmp.ne.s32.totalorder %s78, %s94
      %p96 = scmp.eq.s32.totalorder %s28, 0
      %p97 = por %p95, %p96
      %s98 = ssub.s32 %s29, %s41
      %s99 = ssub.s32 %s30, %s37
      %s100 = sor.u32 %s98, %s99
      %p101 = scmp.eq.s32.totalorder %s100, 0
      %s103 = sadd.s32 %s102, 1
      %s104 = scalar_select %p101, %s102, %s103
      %p107 = pneg %p101
      %p108 = scmp.eq.s32.totalorder %s22, 1
      %p109 = por %p107, %p108
      %p110 = scmp.ne.s32.totalorder %s102, %s105
      %p111 = scmp.eq.s32.totalorder %s22, 0
      %p112 = por %p110, %p111
      %p113 = scmp.ne.s32.totalorder %s102, %s105
      %p114 = scmp.eq.s32.totalorder %s27, 1
      %p115 = por %p113, %p114
      %p116 = scmp.ne.s32.totalorder %s105, %s106
      %p117 = scmp.eq.s32.totalorder %s27, 0
      %p118 = por %p116, %p117
      %p119 = scmp.ne.s32.totalorder %s105, %s106
      %p120 = scmp.eq.s32.totalorder %s28, 1
      %p121 = por %p119, %p120
      %p123 = scmp.ne.s32.totalorder %s106, %s122
      %p124 = scmp.eq.s32.totalorder %s28, 0
      %p125 = por %p123, %p124
      %s127 = sadd.s32 %s126, 1
      %p130 = scmp.eq.s32.totalorder %s22, 1
      %p131 = scmp.ne.s32.totalorder %s126, %s128
      %p132 = scmp.eq.s32.totalorder %s22, 0
      %p133 = por %p131, %p132
      %p134 = scmp.ne.s32.totalorder %s126, %s128
      %p135 = scmp.eq.s32.totalorder %s27, 1
      %p136 = por %p134, %p135
      %p137 = scmp.ne.s32.totalorder %s128, %s129
      %p138 = scmp.eq.s32.totalorder %s27, 0
      %p139 = por %p137, %p138
      %p140 = scmp.ne.s32.totalorder %s128, %s129
      %p141 = scmp.eq.s32.totalorder %s28, 1
      %p142 = por %p140, %p141
      %p144 = scmp.ne.s32.totalorder %s129, %s143
      %p145 = scmp.eq.s32.totalorder %s28, 0
      %p146 = por %p144, %p145
      %s147 = ssub.s32 %s29, %s41
      %s148 = ssub.s32 %s30, %s37
      %s149 = sor.u32 %s147, %s148
      %p150 = scmp.eq.s32.totalorder %s149, 0
      %s152 = sadd.s32 %s151, 1
      %s153 = scalar_select %p150, %s151, %s152
      %p156 = pneg %p150
      %p157 = scmp.eq.s32.totalorder %s22, 1
      %p158 = por %p156, %p157
      %p159 = scmp.ne.s32.totalorder %s151, %s154
      %p160 = scmp.eq.s32.totalorder %s22, 0
      %p161 = por %p159, %p160
      %p162 = scmp.ne.s32.totalorder %s151, %s154
      %p163 = scmp.eq.s32.totalorder %s27, 1
      %p164 = por %p162, %p163
      %p165 = scmp.ne.s32.totalorder %s154, %s155
      %p166 = scmp.eq.s32.totalorder %s27, 0
      %p167 = por %p165, %p166
      %p168 = scmp.ne.s32.totalorder %s154, %s155
      %p169 = scmp.eq.s32.totalorder %s28, 1
      %p170 = por %p168, %p169
      %p172 = scmp.ne.s32.totalorder %s155, %s171
      %p173 = scmp.eq.s32.totalorder %s28, 0
      %p174 = por %p172, %p173
      %p175 = scmp.le.s32.totalorder 1, %s22
      %p176 = scmp.lt.s32.totalorder %s22, 3
      %p177 = pnand %p175, %p176
      %p178 = pneg %p177
      // Predicated region
      $region9: #{tpu_custom_call.1} parent=5 // pred_check
        _
      $region10: #{tpu_custom_call.1} parent=5 // pred_check_branch
        %180 = sbr.rel (%p177) target = $region12
      $region11: #{tpu_custom_call.1} parent=5 // pred_region
        %s181 = ssub.s32 %s22, 1
        // Predicated region
        $region13: #{tpu_custom_call.1} parent=11 // pred_check
          %p182 = pneg %p139
        $region14: #{tpu_custom_call.1} parent=11 // pred_check_branch
          %184 = sbr.rel (%p182) target = $region16
        $region15: #{tpu_custom_call.1} parent=11 // pred_region
          %s186 = ssub.s32 2048, 2048
          %187 = vsyncadd [#allocation11], %s186
          %s188 = sshll.u32 [#allocation10], 4
          %s189 = int_to_ptr.vmem [resolvable:$true] %s188
          %194 = dma.hbm_to_vmem [thread:$0]  %s4, 2048, %s189, [#allocation11], 128, 128, 8
        $region16: #{tpu_custom_call.1} parent=11 // pred_fallthru
          _
      $region12: #{tpu_custom_call.1} parent=5 // pred_fallthru
        _
      %p195 = scmp.lt.s32.totalorder %s22, 2
      // Predicated region
      $region17: #{tpu_custom_call.1} parent=5 // pred_check
        %p196 = pneg %p195
      $region18: #{tpu_custom_call.1} parent=5 // pred_check_branch
        %198 = sbr.rel (%p196) target = $region20
      $region19: #{tpu_custom_call.1} parent=5 // pred_region
        // Predicated region
        $region21: #{tpu_custom_call.1} parent=19 // pred_check
          %p199 = pneg %p56
        $region22: #{tpu_custom_call.1} parent=19 // pred_check_branch
          %201 = sbr.rel (%p199) target = $region24
        $region23: #{tpu_custom_call.1} parent=19 // pred_region
          %s202 = sand.u32 %s46, 1
          %s203 = scalar_lea.sflag [#allocation5], %s202
          %s204 = sand.u32 %s46, 1
          %s205 = smul.addr %s204, 512
          %s206 = scalar_lea.vmem [#allocation4], %s205
          %s207 = smul.u32 4, %s30
          %s209 = ssub.s32 8192, 8192
          %210 = vsyncadd %s203, %s209
          %s211 = smul.addr %s207, 16
          %s212 = smul.addr %s29, 128
          %s213 = sadd.s32 %s211, %s212
          %s214 = smul.addr %s213, 128
          %s215 = scalar_lea.hbm %s1, %s214
          %s216 = sshll.u32 %s206, 4
          %s217 = int_to_ptr.vmem [resolvable:$true] %s216
          %222 = dma.hbm_to_vmem [thread:$0]  %s215, 8192, %s217, %s203, 128, 128, 8
        $region24: #{tpu_custom_call.1} parent=19 // pred_fallthru
          _
        // Predicated region
        $region25: #{tpu_custom_call.1} parent=19 // pred_check
          %p223 = pneg %p84
        $region26: #{tpu_custom_call.1} parent=19 // pred_check_branch
          %225 = sbr.rel (%p223) target = $region28
        $region27: #{tpu_custom_call.1} parent=19 // pred_region
          %s226 = sand.u32 %s22, 1
          %s227 = scalar_lea.sflag [#allocation8], %s226
          %s228 = sand.u32 %s74, 1
          %s229 = smul.addr %s228, 512
          %s230 = scalar_lea.vmem [#allocation7], %s229
          %s231 = smul.u32 4, %s30
          %s233 = ssub.s32 8192, 8192
          %234 = vsyncadd %s227, %s233
          %s235 = smul.addr %s231, 16
          %s236 = smul.addr %s29, 128
          %s237 = sadd.s32 %s235, %s236
          %s238 = smul.addr %s237, 128
          %s239 = scalar_lea.hbm %s2, %s238
          %s240 = sshll.u32 %s230, 4
          %s241 = int_to_ptr.vmem [resolvable:$true] %s240
          %246 = dma.hbm_to_vmem [thread:$0]  %s239, 8192, %s241, %s227, 128, 128, 8
        $region28: #{tpu_custom_call.1} parent=19 // pred_fallthru
          _
        // Predicated region
        $region29: #{tpu_custom_call.1} parent=19 // pred_check
          %p247 = pneg %p112
        $region30: #{tpu_custom_call.1} parent=19 // pred_check_branch
          %249 = sbr.rel (%p247) target = $region32
        $region31: #{tpu_custom_call.1} parent=19 // pred_region
          %s250 = sand.u32 %s22, 1
          %s251 = scalar_lea.sflag [#allocation8], %s250
          %s252 = sand.u32 %s102, 1
          %s253 = smul.addr %s252, 512
          %s254 = scalar_lea.vmem [#allocation9], %s253
          %s255 = smul.u32 4, %s30
          %s257 = ssub.s32 8192, 8192
          %258 = vsyncadd %s251, %s257
          %s259 = smul.addr %s255, 16
          %s260 = smul.addr %s29, 128
          %s261 = sadd.s32 %s259, %s260
          %s262 = smul.addr %s261, 128
          %s263 = scalar_lea.hbm %s3, %s262
          %s264 = sshll.u32 %s254, 4
          %s265 = int_to_ptr.vmem [resolvable:$true] %s264
          %270 = dma.hbm_to_vmem [thread:$0]  %s263, 8192, %s265, %s251, 128, 128, 8
        $region32: #{tpu_custom_call.1} parent=19 // pred_fallthru
          _
      $region20: #{tpu_custom_call.1} parent=5 // pred_fallthru
        _
      %p271 = scmp.le.s32.totalorder 1, %s22
      %p272 = scmp.lt.s32.totalorder %s22, 3
      %p273 = pnand %p271, %p272
      %p274 = pneg %p273
      // Predicated region
      $region33: #{tpu_custom_call.1} parent=5 // pred_check
        _
      $region34: #{tpu_custom_call.1} parent=5 // pred_check_branch
        %276 = sbr.rel (%p273) target = $region36
      $region35: #{tpu_custom_call.1} parent=5 // pred_region
        %s277 = ssub.s32 %s22, 1
        %s278 = sand.u32 %s49, 1
        %s279 = scalar_lea.sflag [#allocation5], %s278
        %s280 = sand.u32 %s49, 1
        %s281 = smul.addr %s280, 512
        %s282 = scalar_lea.vmem [#allocation4], %s281
        // Predicated region
        $region37: #{tpu_custom_call.1} parent=35 // pred_check
          %p283 = pneg %p62
        $region38: #{tpu_custom_call.1} parent=35 // pred_check_branch
          %285 = sbr.rel (%p283) target = $region40
        $region39: #{tpu_custom_call.1} parent=35 // pred_region
          %286 = dma.done %s279, 8192
        $region40: #{tpu_custom_call.1} parent=35 // pred_fallthru
          _
        %s287 = sand.u32 %s27, 1
        %s288 = scalar_lea.sflag [#allocation8], %s287
        %s289 = sand.u32 %s77, 1
        %s290 = smul.addr %s289, 512
        %s291 = scalar_lea.vmem [#allocation7], %s290
        // Predicated region
        $region41: #{tpu_custom_call.1} parent=35 // pred_check
          %p292 = pneg %p90
        $region42: #{tpu_custom_call.1} parent=35 // pred_check_branch
          %294 = sbr.rel (%p292) target = $region44
        $region43: #{tpu_custom_call.1} parent=35 // pred_region
          %295 = dma.done %s288, 8192
        $region44: #{tpu_custom_call.1} parent=35 // pred_fallthru
          _
        %s296 = sand.u32 %s27, 1
        %s297 = scalar_lea.sflag [#allocation8], %s296
        %s298 = sand.u32 %s105, 1
        %s299 = smul.addr %s298, 512
        %s300 = scalar_lea.vmem [#allocation9], %s299
        // Predicated region
        $region45: #{tpu_custom_call.1} parent=35 // pred_check
          %p301 = pneg %p118
        $region46: #{tpu_custom_call.1} parent=35 // pred_check_branch
          %303 = sbr.rel (%p301) target = $region48
        $region47: #{tpu_custom_call.1} parent=35 // pred_region
          %304 = dma.done %s297, 8192
        $region48: #{tpu_custom_call.1} parent=35 // pred_fallthru
          _
        // Predicated region
        $region49: #{tpu_custom_call.1} parent=35 // pred_check
          %p305 = pneg %p139
        $region50: #{tpu_custom_call.1} parent=35 // pred_check_branch
          %307 = sbr.rel (%p305) target = $region52
        $region51: #{tpu_custom_call.1} parent=35 // pred_region
          %308 = dma.done [#allocation11], 2048
        $region52: #{tpu_custom_call.1} parent=35 // pred_fallthru
          _
        %s309 = sand.u32 %s49, 1
        %s310 = scalar_lea.sflag [#allocation5], %s309
        %s311 = sand.u32 %s49, 1
        %s312 = smul.addr %s311, 512
        %s313 = scalar_lea.vmem [#allocation4], %s312
        %p314 = pneg %p62
        %p315 = pneg %p59
        %s316 = sand.u32 %s27, 1
        %s317 = scalar_lea.sflag [#allocation8], %s316
        %s318 = sand.u32 %s77, 1
        %s319 = smul.addr %s318, 512
        %s320 = scalar_lea.vmem [#allocation7], %s319
        %p321 = pneg %p90
        %p322 = pneg %p87
        %s323 = sand.u32 %s27, 1
        %s324 = scalar_lea.sflag [#allocation8], %s323
        %s325 = sand.u32 %s105, 1
        %s326 = smul.addr %s325, 512
        %s327 = scalar_lea.vmem [#allocation9], %s326
        %p328 = pneg %p118
        %p329 = pneg %p115
        %p330 = pneg %p139
        %p331 = pneg %p136
        %p332 = pneg %p167
        %p333 = pneg %p164
        %s334 = sand.u32 %s154, 1
        %s335 = scalar_lea.sflag [#allocation6], %s334
        %s336 = sand.u32 %s154, 1
        %s337 = smul.addr %s336, 512
        %s338 = scalar_lea.vmem [#allocation12], %s337
        %s339 = smul.u32 4, %s32
        %s340 = smul.u32 4, %s32
        %s341 = smul.u32 4, %s32
        %s342 = smul.u32 4, %s32
        %v343 = vld [vmem:[%s282] sm:$0xff]
        %v344 = vld [vmem:[%s282 + $0x8] sm:$0xff]
        %v345 = vld [vmem:[%s282 + $0x10] sm:$0xff]
        %v346 = vld [vmem:[%s282 + $0x18] sm:$0xff]
        %v347 = vld [vmem:[%s282 + $0x20] sm:$0xff]
        %v348 = vld [vmem:[%s282 + $0x28] sm:$0xff]
        %v349 = vld [vmem:[%s282 + $0x30] sm:$0xff]
        %v350 = vld [vmem:[%s282 + $0x38] sm:$0xff]
        %v351 = vld [vmem:[%s282 + $0x40] sm:$0xff]
        %v352 = vld [vmem:[%s282 + $0x48] sm:$0xff]
        %v353 = vld [vmem:[%s282 + $0x50] sm:$0xff]
        %v354 = vld [vmem:[%s282 + $0x58] sm:$0xff]
        %v355 = vld [vmem:[%s282 + $0x60] sm:$0xff]
        %v356 = vld [vmem:[%s282 + $0x68] sm:$0xff]
        %v357 = vld [vmem:[%s282 + $0x70] sm:$0xff]
        %v358 = vld [vmem:[%s282 + $0x78] sm:$0xff]
        %v359 = vld [vmem:[%s282 + $0x80] sm:$0xff]
        %v360 = vld [vmem:[%s282 + $0x88] sm:$0xff]
        %v361 = vld [vmem:[%s282 + $0x90] sm:$0xff]
        %v362 = vld [vmem:[%s282 + $0x98] sm:$0xff]
        %v363 = vld [vmem:[%s282 + $0xa0] sm:$0xff]
        %v364 = vld [vmem:[%s282 + $0xa8] sm:$0xff]
        %v365 = vld [vmem:[%s282 + $0xb0] sm:$0xff]
        %v366 = vld [vmem:[%s282 + $0xb8] sm:$0xff]
        %v367 = vld [vmem:[%s282 + $0xc0] sm:$0xff]
        %v368 = vld [vmem:[%s282 + $0xc8] sm:$0xff]
        %v369 = vld [vmem:[%s282 + $0xd0] sm:$0xff]
        %v370 = vld [vmem:[%s282 + $0xd8] sm:$0xff]
        %v371 = vld [vmem:[%s282 + $0xe0] sm:$0xff]
        %v372 = vld [vmem:[%s282 + $0xe8] sm:$0xff]
        %v373 = vld [vmem:[%s282 + $0xf0] sm:$0xff]
        %v374 = vld [vmem:[%s282 + $0xf8] sm:$0xff]
        %v375 = vld [vmem:[%s282 + $0x100] sm:$0xff]
        %v376 = vld [vmem:[%s282 + $0x108] sm:$0xff]
        %v377 = vld [vmem:[%s282 + $0x110] sm:$0xff]
        %v378 = vld [vmem:[%s282 + $0x118] sm:$0xff]
        %v379 = vld [vmem:[%s282 + $0x120] sm:$0xff]
        %v380 = vld [vmem:[%s282 + $0x128] sm:$0xff]
        %v381 = vld [vmem:[%s282 + $0x130] sm:$0xff]
        %v382 = vld [vmem:[%s282 + $0x138] sm:$0xff]
        %v383 = vld [vmem:[%s282 + $0x140] sm:$0xff]
        %v384 = vld [vmem:[%s282 + $0x148] sm:$0xff]
        %v385 = vld [vmem:[%s282 + $0x150] sm:$0xff]
        %v386 = vld [vmem:[%s282 + $0x158] sm:$0xff]
        %v387 = vld [vmem:[%s282 + $0x160] sm:$0xff]
        %v388 = vld [vmem:[%s282 + $0x168] sm:$0xff]
        %v389 = vld [vmem:[%s282 + $0x170] sm:$0xff]
        %v390 = vld [vmem:[%s282 + $0x178] sm:$0xff]
        %v391 = vld [vmem:[%s282 + $0x180] sm:$0xff]
        %v392 = vld [vmem:[%s282 + $0x188] sm:$0xff]
        %v393 = vld [vmem:[%s282 + $0x190] sm:$0xff]
        %v394 = vld [vmem:[%s282 + $0x198] sm:$0xff]
        %v395 = vld [vmem:[%s282 + $0x1a0] sm:$0xff]
        %v396 = vld [vmem:[%s282 + $0x1a8] sm:$0xff]
        %v397 = vld [vmem:[%s282 + $0x1b0] sm:$0xff]
        %v398 = vld [vmem:[%s282 + $0x1b8] sm:$0xff]
        %v399 = vld [vmem:[%s282 + $0x1c0] sm:$0xff]
        %v400 = vld [vmem:[%s282 + $0x1c8] sm:$0xff]
        %v401 = vld [vmem:[%s282 + $0x1d0] sm:$0xff]
        %v402 = vld [vmem:[%s282 + $0x1d8] sm:$0xff]
        %v403 = vld [vmem:[%s282 + $0x1e0] sm:$0xff]
        %v404 = vld [vmem:[%s282 + $0x1e8] sm:$0xff]
        %v405 = vld [vmem:[%s282 + $0x1f0] sm:$0xff]
        %v406 = vld [vmem:[%s282 + $0x1f8] sm:$0xff]
        %v407 = vld [vmem:[%s291] sm:$0xff]
        %v408 = vld [vmem:[%s291 + $0x8] sm:$0xff]
        %v409 = vld [vmem:[%s291 + $0x10] sm:$0xff]
        %v410 = vld [vmem:[%s291 + $0x18] sm:$0xff]
        %v411 = vld [vmem:[%s291 + $0x20] sm:$0xff]
        %v412 = vld [vmem:[%s291 + $0x28] sm:$0xff]
        %v413 = vld [vmem:[%s291 + $0x30] sm:$0xff]
        %v414 = vld [vmem:[%s291 + $0x38] sm:$0xff]
        %v415 = vld [vmem:[%s291 + $0x40] sm:$0xff]
        %v416 = vld [vmem:[%s291 + $0x48] sm:$0xff]
        %v417 = vld [vmem:[%s291 + $0x50] sm:$0xff]
        %v418 = vld [vmem:[%s291 + $0x58] sm:$0xff]
        %v419 = vld [vmem:[%s291 + $0x60] sm:$0xff]
        %v420 = vld [vmem:[%s291 + $0x68] sm:$0xff]
        %v421 = vld [vmem:[%s291 + $0x70] sm:$0xff]
        %v422 = vld [vmem:[%s291 + $0x78] sm:$0xff]
        %v423 = vld [vmem:[%s291 + $0x80] sm:$0xff]
        %v424 = vld [vmem:[%s291 + $0x88] sm:$0xff]
        %v425 = vld [vmem:[%s291 + $0x90] sm:$0xff]
        %v426 = vld [vmem:[%s291 + $0x98] sm:$0xff]
        %v427 = vld [vmem:[%s291 + $0xa0] sm:$0xff]
        %v428 = vld [vmem:[%s291 + $0xa8] sm:$0xff]
        %v429 = vld [vmem:[%s291 + $0xb0] sm:$0xff]
        %v430 = vld [vmem:[%s291 + $0xb8] sm:$0xff]
        %v431 = vld [vmem:[%s291 + $0xc0] sm:$0xff]
        %v432 = vld [vmem:[%s291 + $0xc8] sm:$0xff]
        %v433 = vld [vmem:[%s291 + $0xd0] sm:$0xff]
        %v434 = vld [vmem:[%s291 + $0xd8] sm:$0xff]
        %v435 = vld [vmem:[%s291 + $0xe0] sm:$0xff]
        %v436 = vld [vmem:[%s291 + $0xe8] sm:$0xff]
        %v437 = vld [vmem:[%s291 + $0xf0] sm:$0xff]
        %v438 = vld [vmem:[%s291 + $0xf8] sm:$0xff]
        %v439 = vld [vmem:[%s291 + $0x100] sm:$0xff]
        %v440 = vld [vmem:[%s291 + $0x108] sm:$0xff]
        %v441 = vld [vmem:[%s291 + $0x110] sm:$0xff]
        %v442 = vld [vmem:[%s291 + $0x118] sm:$0xff]
        %v443 = vld [vmem:[%s291 + $0x120] sm:$0xff]
        %v444 = vld [vmem:[%s291 + $0x128] sm:$0xff]
        %v445 = vld [vmem:[%s291 + $0x130] sm:$0xff]
        %v446 = vld [vmem:[%s291 + $0x138] sm:$0xff]
        %v447 = vld [vmem:[%s291 + $0x140] sm:$0xff]
        %v448 = vld [vmem:[%s291 + $0x148] sm:$0xff]
        %v449 = vld [vmem:[%s291 + $0x150] sm:$0xff]
        %v450 = vld [vmem:[%s291 + $0x158] sm:$0xff]
        %v451 = vld [vmem:[%s291 + $0x160] sm:$0xff]
        %v452 = vld [vmem:[%s291 + $0x168] sm:$0xff]
        %v453 = vld [vmem:[%s291 + $0x170] sm:$0xff]
        %v454 = vld [vmem:[%s291 + $0x178] sm:$0xff]
        %v455 = vld [vmem:[%s291 + $0x180] sm:$0xff]
        %v456 = vld [vmem:[%s291 + $0x188] sm:$0xff]
        %v457 = vld [vmem:[%s291 + $0x190] sm:$0xff]
        %v458 = vld [vmem:[%s291 + $0x198] sm:$0xff]
        %v459 = vld [vmem:[%s291 + $0x1a0] sm:$0xff]
        %v460 = vld [vmem:[%s291 + $0x1a8] sm:$0xff]
        %v461 = vld [vmem:[%s291 + $0x1b0] sm:$0xff]
        %v462 = vld [vmem:[%s291 + $0x1b8] sm:$0xff]
        %v463 = vld [vmem:[%s291 + $0x1c0] sm:$0xff]
        %v464 = vld [vmem:[%s291 + $0x1c8] sm:$0xff]
        %v465 = vld [vmem:[%s291 + $0x1d0] sm:$0xff]
        %v466 = vld [vmem:[%s291 + $0x1d8] sm:$0xff]
        %v467 = vld [vmem:[%s291 + $0x1e0] sm:$0xff]
        %v468 = vld [vmem:[%s291 + $0x1e8] sm:$0xff]
        %v469 = vld [vmem:[%s291 + $0x1f0] sm:$0xff]
        %v470 = vld [vmem:[%s291 + $0x1f8] sm:$0xff]
        %v471 = vld [vmem:[%s300] sm:$0xff]
        %v472 = vld [vmem:[%s300 + $0x8] sm:$0xff]
        %v473 = vld [vmem:[%s300 + $0x10] sm:$0xff]
        %v474 = vld [vmem:[%s300 + $0x18] sm:$0xff]
        %v475 = vld [vmem:[%s300 + $0x20] sm:$0xff]
        %v476 = vld [vmem:[%s300 + $0x28] sm:$0xff]
        %v477 = vld [vmem:[%s300 + $0x30] sm:$0xff]
        %v478 = vld [vmem:[%s300 + $0x38] sm:$0xff]
        %v479 = vld [vmem:[%s300 + $0x40] sm:$0xff]
        %v480 = vld [vmem:[%s300 + $0x48] sm:$0xff]
        %v481 = vld [vmem:[%s300 + $0x50] sm:$0xff]
        %v482 = vld [vmem:[%s300 + $0x58] sm:$0xff]
        %v483 = vld [vmem:[%s300 + $0x60] sm:$0xff]
        %v484 = vld [vmem:[%s300 + $0x68] sm:$0xff]
        %v485 = vld [vmem:[%s300 + $0x70] sm:$0xff]
        %v486 = vld [vmem:[%s300 + $0x78] sm:$0xff]
        %v487 = vld [vmem:[%s300 + $0x80] sm:$0xff]
        %v488 = vld [vmem:[%s300 + $0x88] sm:$0xff]
        %v489 = vld [vmem:[%s300 + $0x90] sm:$0xff]
        %v490 = vld [vmem:[%s300 + $0x98] sm:$0xff]
        %v491 = vld [vmem:[%s300 + $0xa0] sm:$0xff]
        %v492 = vld [vmem:[%s300 + $0xa8] sm:$0xff]
        %v493 = vld [vmem:[%s300 + $0xb0] sm:$0xff]
        %v494 = vld [vmem:[%s300 + $0xb8] sm:$0xff]
        %v495 = vld [vmem:[%s300 + $0xc0] sm:$0xff]
        %v496 = vld [vmem:[%s300 + $0xc8] sm:$0xff]
        %v497 = vld [vmem:[%s300 + $0xd0] sm:$0xff]
        %v498 = vld [vmem:[%s300 + $0xd8] sm:$0xff]
        %v499 = vld [vmem:[%s300 + $0xe0] sm:$0xff]
        %v500 = vld [vmem:[%s300 + $0xe8] sm:$0xff]
        %v501 = vld [vmem:[%s300 + $0xf0] sm:$0xff]
        %v502 = vld [vmem:[%s300 + $0xf8] sm:$0xff]
        %v503 = vld [vmem:[%s300 + $0x100] sm:$0xff]
        %v504 = vld [vmem:[%s300 + $0x108] sm:$0xff]
        %v505 = vld [vmem:[%s300 + $0x110] sm:$0xff]
        %v506 = vld [vmem:[%s300 + $0x118] sm:$0xff]
        %v507 = vld [vmem:[%s300 + $0x120] sm:$0xff]
        %v508 = vld [vmem:[%s300 + $0x128] sm:$0xff]
        %v509 = vld [vmem:[%s300 + $0x130] sm:$0xff]
        %v510 = vld [vmem:[%s300 + $0x138] sm:$0xff]
        %v511 = vld [vmem:[%s300 + $0x140] sm:$0xff]
        %v512 = vld [vmem:[%s300 + $0x148] sm:$0xff]
        %v513 = vld [vmem:[%s300 + $0x150] sm:$0xff]
        %v514 = vld [vmem:[%s300 + $0x158] sm:$0xff]
        %v515 = vld [vmem:[%s300 + $0x160] sm:$0xff]
        %v516 = vld [vmem:[%s300 + $0x168] sm:$0xff]
        %v517 = vld [vmem:[%s300 + $0x170] sm:$0xff]
        %v518 = vld [vmem:[%s300 + $0x178] sm:$0xff]
        %v519 = vld [vmem:[%s300 + $0x180] sm:$0xff]
        %v520 = vld [vmem:[%s300 + $0x188] sm:$0xff]
        %v521 = vld [vmem:[%s300 + $0x190] sm:$0xff]
        %v522 = vld [vmem:[%s300 + $0x198] sm:$0xff]
        %v523 = vld [vmem:[%s300 + $0x1a0] sm:$0xff]
        %v524 = vld [vmem:[%s300 + $0x1a8] sm:$0xff]
        %v525 = vld [vmem:[%s300 + $0x1b0] sm:$0xff]
        %v526 = vld [vmem:[%s300 + $0x1b8] sm:$0xff]
        %v527 = vld [vmem:[%s300 + $0x1c0] sm:$0xff]
        %v528 = vld [vmem:[%s300 + $0x1c8] sm:$0xff]
        %v529 = vld [vmem:[%s300 + $0x1d0] sm:$0xff]
        %v530 = vld [vmem:[%s300 + $0x1d8] sm:$0xff]
        %v531 = vld [vmem:[%s300 + $0x1e0] sm:$0xff]
        %v532 = vld [vmem:[%s300 + $0x1e8] sm:$0xff]
        %v533 = vld [vmem:[%s300 + $0x1f0] sm:$0xff]
        %v534 = vld [vmem:[%s300 + $0x1f8] sm:$0xff]
        %v535 = vld [vmem:[#allocation10] sm:$0xff]
        %v536 = vld [vmem:[#allocation10 + $0x8] sm:$0xff]
        %v537 = vld [vmem:[#allocation10 + $0x10] sm:$0xff]
        %v538 = vld [vmem:[#allocation10 + $0x18] sm:$0xff]
        %v539 = vld [vmem:[#allocation10 + $0x20] sm:$0xff]
        %v540 = vld [vmem:[#allocation10 + $0x28] sm:$0xff]
        %v541 = vld [vmem:[#allocation10 + $0x30] sm:$0xff]
        %v542 = vld [vmem:[#allocation10 + $0x38] sm:$0xff]
        %v543 = vld [vmem:[#allocation10 + $0x40] sm:$0xff]
        %v544 = vld [vmem:[#allocation10 + $0x48] sm:$0xff]
        %v545 = vld [vmem:[#allocation10 + $0x50] sm:$0xff]
        %v546 = vld [vmem:[#allocation10 + $0x58] sm:$0xff]
        %v547 = vld [vmem:[#allocation10 + $0x60] sm:$0xff]
        %v548 = vld [vmem:[#allocation10 + $0x68] sm:$0xff]
        %v549 = vld [vmem:[#allocation10 + $0x70] sm:$0xff]
        %v550 = vld [vmem:[#allocation10 + $0x78] sm:$0xff]
        %v551 = vmul.f32 %v343, 0.088388346
        %v552 = vmul.f32 %v344, 0.088388346
        %v553 = vmul.f32 %v345, 0.088388346
        %v554 = vmul.f32 %v346, 0.088388346
        %v555 = vmul.f32 %v347, 0.088388346
        %v556 = vmul.f32 %v348, 0.088388346
        %v557 = vmul.f32 %v349, 0.088388346
        %v558 = vmul.f32 %v350, 0.088388346
        %v559 = vmul.f32 %v351, 0.088388346
        %v560 = vmul.f32 %v352, 0.088388346
        %v561 = vmul.f32 %v353, 0.088388346
        %v562 = vmul.f32 %v354, 0.088388346
        %v563 = vmul.f32 %v355, 0.088388346
        %v564 = vmul.f32 %v356, 0.088388346
        %v565 = vmul.f32 %v357, 0.088388346
        %v566 = vmul.f32 %v358, 0.088388346
        %v567 = vmul.f32 %v359, 0.088388346
        %v568 = vmul.f32 %v360, 0.088388346
        %v569 = vmul.f32 %v361, 0.088388346
        %v570 = vmul.f32 %v362, 0.088388346
        %v571 = vmul.f32 %v363, 0.088388346
        %v572 = vmul.f32 %v364, 0.088388346
        %v573 = vmul.f32 %v365, 0.088388346
        %v574 = vmul.f32 %v366, 0.088388346
        %v575 = vmul.f32 %v367, 0.088388346
        %v576 = vmul.f32 %v368, 0.088388346
        %v577 = vmul.f32 %v369, 0.088388346
        %v578 = vmul.f32 %v370, 0.088388346
        %v579 = vmul.f32 %v371, 0.088388346
        %v580 = vmul.f32 %v372, 0.088388346
        %v581 = vmul.f32 %v373, 0.088388346
        %v582 = vmul.f32 %v374, 0.088388346
        %v583 = vmul.f32 %v375, 0.088388346
        %v584 = vmul.f32 %v376, 0.088388346
        %v585 = vmul.f32 %v377, 0.088388346
        %v586 = vmul.f32 %v378, 0.088388346
        %v587 = vmul.f32 %v379, 0.088388346
        %v588 = vmul.f32 %v380, 0.088388346
        %v589 = vmul.f32 %v381, 0.088388346
        %v590 = vmul.f32 %v382, 0.088388346
        %v591 = vmul.f32 %v383, 0.088388346
        %v592 = vmul.f32 %v384, 0.088388346
        %v593 = vmul.f32 %v385, 0.088388346
        %v594 = vmul.f32 %v386, 0.088388346
        %v595 = vmul.f32 %v387, 0.088388346
        %v596 = vmul.f32 %v388, 0.088388346
        %v597 = vmul.f32 %v389, 0.088388346
        %v598 = vmul.f32 %v390, 0.088388346
        %v599 = vmul.f32 %v391, 0.088388346
        %v600 = vmul.f32 %v392, 0.088388346
        %v601 = vmul.f32 %v393, 0.088388346
        %v602 = vmul.f32 %v394, 0.088388346
        %v603 = vmul.f32 %v395, 0.088388346
        %v604 = vmul.f32 %v396, 0.088388346
        %v605 = vmul.f32 %v397, 0.088388346
        %v606 = vmul.f32 %v398, 0.088388346
        %v607 = vmul.f32 %v399, 0.088388346
        %v608 = vmul.f32 %v400, 0.088388346
        %v609 = vmul.f32 %v401, 0.088388346
        %v610 = vmul.f32 %v402, 0.088388346
        %v611 = vmul.f32 %v403, 0.088388346
        %v612 = vmul.f32 %v404, 0.088388346
        %v613 = vmul.f32 %v405, 0.088388346
        %v614 = vmul.f32 %v406, 0.088388346
        %615 = vmatprep.subr.mxu0 0.0
        %616 = vmatpush1.xpose.msra.mxu0 %v407
        %617 = vmatprep.subr.mxu0 0.0
        %618 = vmatpush1.xpose.msra.mxu0 %v408
        %619 = vmatprep.subr.mxu0 0.0
        %620 = vmatpush1.xpose.msra.mxu0 %v409
        %621 = vmatprep.subr.mxu0 0.0
        %622 = vmatpush1.xpose.msra.mxu0 %v410
        %623 = vmatprep.subr.mxu0 0.0
        %624 = vmatpush1.xpose.msra.mxu0 %v411
        %625 = vmatprep.subr.mxu0 0.0
        %626 = vmatpush1.xpose.msra.mxu0 %v412
        %627 = vmatprep.subr.mxu0 0.0
        %628 = vmatpush1.xpose.msra.mxu0 %v413
        %629 = vmatprep.subr.mxu0 0.0
        %630 = vmatpush1.xpose.msra.mxu0 %v414
        %631 = vmatprep.subr.mxu0 0.0
        %632 = vmatpush1.xpose.msra.mxu0 %v415
        %633 = vmatprep.subr.mxu0 0.0
        %634 = vmatpush1.xpose.msra.mxu0 %v416
        %635 = vmatprep.subr.mxu0 0.0
        %636 = vmatpush1.xpose.msra.mxu0 %v417
        %637 = vmatprep.subr.mxu0 0.0
        %638 = vmatpush1.xpose.msra.mxu0 %v418
        %639 = vmatprep.subr.mxu0 0.0
        %640 = vmatpush1.xpose.msra.mxu0 %v419
        %641 = vmatprep.subr.mxu0 0.0
        %642 = vmatpush1.xpose.msra.mxu0 %v420
        %643 = vmatprep.subr.mxu0 0.0
        %644 = vmatpush1.xpose.msra.mxu0 %v421
        %645 = vmatprep.subr.mxu0 0.0
        %646 = vmatpush1.xpose.msra.mxu0 %v422
        %647 = vmatprep.subr.mxu0 0.0
        %648 = vmatpush1.xpose.msra.mxu0 0.0
        %649 = vmatprep.subr.mxu0 0.0
        %650 = vmatpush1.xpose.msra.mxu0 0.0
        %651 = vmatprep.subr.mxu0 0.0
        %652 = vmatpush1.xpose.msra.mxu0 0.0
        %653 = vmatprep.subr.mxu0 0.0
        %654 = vmatpush1.xpose.msra.mxu0 0.0
        %655 = vmatprep.subr.mxu0 0.0
        %656 = vmatpush1.xpose.msra.mxu0 0.0
        %657 = vmatprep.subr.mxu0 0.0
        %658 = vmatpush1.xpose.msra.mxu0 0.0
        %659 = vmatprep.subr.mxu0 0.0
        %660 = vmatpush1.xpose.msra.mxu0 0.0
        %661 = vmatprep.subr.mxu0 0.0
        %662 = vmatpush1.xpose.msra.mxu0 0.0
        %663 = vmatprep.subr.mxu0 0.0
        %664 = vmatpush1.xpose.msra.mxu0 0.0
        %665 = vmatprep.subr.mxu0 0.0
        %666 = vmatpush1.xpose.msra.mxu0 0.0
        %667 = vmatprep.subr.mxu0 0.0
        %668 = vmatpush1.xpose.msra.mxu0 0.0
        %669 = vmatprep.subr.mxu0 0.0
        %670 = vmatpush1.xpose.msra.mxu0 0.0
        %671 = vmatprep.subr.mxu0 0.0
        %672 = vmatpush1.xpose.msra.mxu0 0.0
        %673 = vmatprep.subr.mxu0 0.0
        %674 = vmatpush1.xpose.msra.mxu0 0.0
        %675 = vmatprep.subr.mxu0 0.0
        %676 = vmatpush1.xpose.msra.mxu0 0.0
        %677 = vmatprep.subr.mxu0 0.0
        %678 = vmatpush1.xpose.msra.mxu0 0.0
        %679 = vmatprep.mubr.f32.mxu0 0.0
        %680 = vmatmul.mubr.f32.gmra.mrb[0].mxu0 %v551
        %v681 = vpop.f32.mrb[0].mxu0
        %v682 = vadd.f32 %v535, %v681
        %v683 = vpop.f32.mrb[0].mxu0
        %684 = vmatprep.mubr.f32.mxu0 0.0
        %685 = vmatmul.mubr.f32.gmra.mrb[0].mxu0 %v552
        %v686 = vpop.f32.mrb[0].mxu0
        %v687 = vadd.f32 %v536, %v686
        %v688 = vpop.f32.mrb[0].mxu0
        %689 = vmatprep.mubr.f32.mxu0 0.0
        %690 = vmatmul.mubr.f32.gmra.mrb[0].mxu0 %v553
        %v691 = vpop.f32.mrb[0].mxu0
        %v692 = vadd.f32 %v537, %v691
        %v693 = vpop.f32.mrb[0].mxu0
        %694 = vmatprep.mubr.f32.mxu0 0.0
        %695 = vmatmul.mubr.f32.gmra.mrb[0].mxu0 %v554
        %v696 = vpop.f32.mrb[0].mxu0
        %v697 = vadd.f32 %v538, %v696
        %v698 = vpop.f32.mrb[0].mxu0
        %699 = vmatprep.mubr.f32.mxu0 0.0
        %700 = vmatmul.mubr.f32.gmra.mrb[0].mxu0 %v555
        %v701 = vpop.f32.mrb[0].mxu0
        %v702 = vadd.f32 %v539, %v701
        %v703 = vpop.f32.mrb[0].mxu0
        %704 = vmatprep.mubr.f32.mxu0 0.0
        %705 = vmatmul.mubr.f32.gmra.mrb[0].mxu0 %v556
        %v706 = vpop.f32.mrb[0].mxu0
        %v707 = vadd.f32 %v540, %v706
        %v708 = vpop.f32.mrb[0].mxu0
        %709 = vmatprep.mubr.f32.mxu0 0.0
        %710 = vmatmul.mubr.f32.gmra.mrb[0].mxu0 %v557
        %v711 = vpop.f32.mrb[0].mxu0
        %v712 = vadd.f32 %v541, %v711
        %v713 = vpop.f32.mrb[0].mxu0
        %714 = vmatprep.mubr.f32.mxu0 0.0
        %715 = vmatmul.mubr.f32.gmra.mrb[0].mxu0 %v558
        %v716 = vpop.f32.mrb[0].mxu0
        %v717 = vadd.f32 %v542, %v716
        %v718 = vpop.f32.mrb[0].mxu0
        %719 = vmatprep.mubr.f32.mxu0 0.0
        %720 = vmatmul.mubr.f32.gmra.mrb[0].mxu0 %v559
        %v721 = vpop.f32.mrb[0].mxu0
        %v722 = vadd.f32 %v543, %v721
        %v723 = vpop.f32.mrb[0].mxu0
        %724 = vmatprep.mubr.f32.mxu0 0.0
        %725 = vmatmul.mubr.f32.gmra.mrb[0].mxu0 %v560
        %v726 = vpop.f32.mrb[0].mxu0
        %v727 = vadd.f32 %v544, %v726
        %v728 = vpop.f32.mrb[0].mxu0
        %729 = vmatprep.mubr.f32.mxu0 0.0
        %730 = vmatmul.mubr.f32.gmra.mrb[0].mxu0 %v561
        %v731 = vpop.f32.mrb[0].mxu0
        %v732 = vadd.f32 %v545, %v731
        %v733 = vpop.f32.mrb[0].mxu0
        %734 = vmatprep.mubr.f32.mxu0 0.0
        %735 = vmatmul.mubr.f32.gmra.mrb[0].mxu0 %v562
        %v736 = vpop.f32.mrb[0].mxu0
        %v737 = vadd.f32 %v546, %v736
        %v738 = vpop.f32.mrb[0].mxu0
        %739 = vmatprep.mubr.f32.mxu0 0.0
        %740 = vmatmul.mubr.f32.gmra.mrb[0].mxu0 %v563
        %v741 = vpop.f32.mrb[0].mxu0
        %v742 = vadd.f32 %v547, %v741
        %v743 = vpop.f32.mrb[0].mxu0
        %744 = vmatprep.mubr.f32.mxu0 0.0
        %745 = vmatmul.mubr.f32.gmra.mrb[0].mxu0 %v564
        %v746 = vpop.f32.mrb[0].mxu0
        %v747 = vadd.f32 %v548, %v746
        %v748 = vpop.f32.mrb[0].mxu0
        %749 = vmatprep.mubr.f32.mxu0 0.0
        %750 = vmatmul.mubr.f32.gmra.mrb[0].mxu0 %v565
        %v751 = vpop.f32.mrb[0].mxu0
        %v752 = vadd.f32 %v549, %v751
        %v753 = vpop.f32.mrb[0].mxu0
        %754 = vmatprep.mubr.f32.mxu0 0.0
        %755 = vmatmul.mubr.f32.gmra.mrb[0].mxu0 %v566
        %v756 = vpop.f32.mrb[0].mxu0
        %v757 = vadd.f32 %v550, %v756
        %v758 = vpop.f32.mrb[0].mxu0
        %759 = vdwg.mxu0
        %760 = vmatprep.subr.mxu0 0.0
        %761 = vmatpush1.xpose.msra.mxu0 %v423
        %762 = vmatprep.subr.mxu0 0.0
        %763 = vmatpush1.xpose.msra.mxu0 %v424
        %764 = vmatprep.subr.mxu0 0.0
        %765 = vmatpush1.xpose.msra.mxu0 %v425
        %766 = vmatprep.subr.mxu0 0.0
        %767 = vmatpush1.xpose.msra.mxu0 %v426
        %768 = vmatprep.subr.mxu0 0.0
        %769 = vmatpush1.xpose.msra.mxu0 %v427
        %770 = vmatprep.subr.mxu0 0.0
        %771 = vmatpush1.xpose.msra.mxu0 %v428
        %772 = vmatprep.subr.mxu0 0.0
        %773 = vmatpush1.xpose.msra.mxu0 %v429
        %774 = vmatprep.subr.mxu0 0.0
        %775 = vmatpush1.xpose.msra.mxu0 %v430
        %776 = vmatprep.subr.mxu0 0.0
        %777 = vmatpush1.xpose.msra.mxu0 %v431
        %778 = vmatprep.subr.mxu0 0.0
        %779 = vmatpush1.xpose.msra.mxu0 %v432
        %780 = vmatprep.subr.mxu0 0.0
        %781 = vmatpush1.xpose.msra.mxu0 %v433
        %782 = vmatprep.subr.mxu0 0.0
        %783 = vmatpush1.xpose.msra.mxu0 %v434
        %784 = vmatprep.subr.mxu0 0.0
        %785 = vmatpush1.xpose.msra.mxu0 %v435
        %786 = vmatprep.subr.mxu0 0.0
        %787 = vmatpush1.xpose.msra.mxu0 %v436
        %788 = vmatprep.subr.mxu0 0.0
        %789 = vmatpush1.xpose.msra.mxu0 %v437
        %790 = vmatprep.subr.mxu0 0.0
        %791 = vmatpush1.xpose.msra.mxu0 %v438
        %792 = vmatprep.subr.mxu0 0.0
        %793 = vmatpush1.xpose.msra.mxu0 0.0
        %794 = vmatprep.subr.mxu0 0.0
        %795 = vmatpush1.xpose.msra.mxu0 0.0
        %796 = vmatprep.subr.mxu0 0.0
        %797 = vmatpush1.xpose.msra.mxu0 0.0
        %798 = vmatprep.subr.mxu0 0.0
        %799 = vmatpush1.xpose.msra.mxu0 0.0
        %800 = vmatprep.subr.mxu0 0.0
        %801 = vmatpush1.xpose.msra.mxu0 0.0
        %802 = vmatprep.subr.mxu0 0.0
        %803 = vmatpush1.xpose.msra.mxu0 0.0
        %804 = vmatprep.subr.mxu0 0.0
        %805 = vmatpush1.xpose.msra.mxu0 0.0
        %806 = vmatprep.subr.mxu0 0.0
        %807 = vmatpush1.xpose.msra.mxu0 0.0
        %808 = vmatprep.subr.mxu0 0.0
        %809 = vmatpush1.xpose.msra.mxu0 0.0
        %810 = vmatprep.subr.mxu0 0.0
        %811 = vmatpush1.xpose.msra.mxu0 0.0
        %812 = vmatprep.subr.mxu0 0.0
        %813 = vmatpush1.xpose.msra.mxu0 0.0
        %814 = vmatprep.subr.mxu0 0.0
        %815 = vmatpush1.xpose.msra.mxu0 0.0
        %816 = vmatprep.subr.mxu0 0.0
        %817 = vmatpush1.xpose.msra.mxu0 0.0
        %818 = vmatprep.subr.mxu0 0.0
        %819 = vmatpush1.xpose.msra.mxu0 0.0
        %820 = vmatprep.subr.mxu0 0.0
        %821 = vmatpush1.xpose.msra.mxu0 0.0
        %822 = vmatprep.subr.mxu0 0.0
        %823 = vmatpush1.xpose.msra.mxu0 0.0
        %824 = vmatprep.mubr.f32.mxu0 0.0
        %825 = vmatmul.mubr.f32.gmra.mrb[0].mxu0 %v567
        %v826 = vpop.f32.mrb[0].mxu0
        %v827 = vadd.f32 %v535, %v826
        %v828 = vpop.f32.mrb[0].mxu0
        %829 = vmatprep.mubr.f32.mxu0 0.0
        %830 = vmatmul.mubr.f32.gmra.mrb[0].mxu0 %v568
        %v831 = vpop.f32.mrb[0].mxu0
        %v832 = vadd.f32 %v536, %v831
        %v833 = vpop.f32.mrb[0].mxu0
        %834 = vmatprep.mubr.f32.mxu0 0.0
        %835 = vmatmul.mubr.f32.gmra.mrb[0].mxu0 %v569
        %v836 = vpop.f32.mrb[0].mxu0
        %v837 = vadd.f32 %v537, %v836
        %v838 = vpop.f32.mrb[0].mxu0
        %839 = vmatprep.mubr.f32.mxu0 0.0
        %840 = vmatmul.mubr.f32.gmra.mrb[0].mxu0 %v570
        %v841 = vpop.f32.mrb[0].mxu0
        %v842 = vadd.f32 %v538, %v841
        %v843 = vpop.f32.mrb[0].mxu0
        %844 = vmatprep.mubr.f32.mxu0 0.0
        %845 = vmatmul.mubr.f32.gmra.mrb[0].mxu0 %v571
        %v846 = vpop.f32.mrb[0].mxu0
        %v847 = vadd.f32 %v539, %v846
        %v848 = vpop.f32.mrb[0].mxu0
        %849 = vmatprep.mubr.f32.mxu0 0.0
        %850 = vmatmul.mubr.f32.gmra.mrb[0].mxu0 %v572
        %v851 = vpop.f32.mrb[0].mxu0
        %v852 = vadd.f32 %v540, %v851
        %v853 = vpop.f32.mrb[0].mxu0
        %854 = vmatprep.mubr.f32.mxu0 0.0
        %855 = vmatmul.mubr.f32.gmra.mrb[0].mxu0 %v573
        %v856 = vpop.f32.mrb[0].mxu0
        %v857 = vadd.f32 %v541, %v856
        %v858 = vpop.f32.mrb[0].mxu0
        %859 = vmatprep.mubr.f32.mxu0 0.0
        %860 = vmatmul.mubr.f32.gmra.mrb[0].mxu0 %v574
        %v861 = vpop.f32.mrb[0].mxu0
        %v862 = vadd.f32 %v542, %v861
        %v863 = vpop.f32.mrb[0].mxu0
        %864 = vmatprep.mubr.f32.mxu0 0.0
        %865 = vmatmul.mubr.f32.gmra.mrb[0].mxu0 %v575
        %v866 = vpop.f32.mrb[0].mxu0
        %v867 = vadd.f32 %v543, %v866
        %v868 = vpop.f32.mrb[0].mxu0
        %869 = vmatprep.mubr.f32.mxu0 0.0
        %870 = vmatmul.mubr.f32.gmra.mrb[0].mxu0 %v576
        %v871 = vpop.f32.mrb[0].mxu0
        %v872 = vadd.f32 %v544, %v871
        %v873 = vpop.f32.mrb[0].mxu0
        %874 = vmatprep.mubr.f32.mxu0 0.0
        %875 = vmatmul.mubr.f32.gmra.mrb[0].mxu0 %v577
        %v876 = vpop.f32.mrb[0].mxu0
        %v877 = vadd.f32 %v545, %v876
        %v878 = vpop.f32.mrb[0].mxu0
        %879 = vmatprep.mubr.f32.mxu0 0.0
        %880 = vmatmul.mubr.f32.gmra.mrb[0].mxu0 %v578
        %v881 = vpop.f32.mrb[0].mxu0
        %v882 = vadd.f32 %v546, %v881
        %v883 = vpop.f32.mrb[0].mxu0
        %884 = vmatprep.mubr.f32.mxu0 0.0
        %885 = vmatmul.mubr.f32.gmra.mrb[0].mxu0 %v579
        %v886 = vpop.f32.mrb[0].mxu0
        %v887 = vadd.f32 %v547, %v886
        %v888 = vpop.f32.mrb[0].mxu0
        %889 = vmatprep.mubr.f32.mxu0 0.0
        %890 = vmatmul.mubr.f32.gmra.mrb[0].mxu0 %v580
        %v891 = vpop.f32.mrb[0].mxu0
        %v892 = vadd.f32 %v548, %v891
        %v893 = vpop.f32.mrb[0].mxu0
        %894 = vmatprep.mubr.f32.mxu0 0.0
        %895 = vmatmul.mubr.f32.gmra.mrb[0].mxu0 %v581
        %v896 = vpop.f32.mrb[0].mxu0
        %v897 = vadd.f32 %v549, %v896
        %v898 = vpop.f32.mrb[0].mxu0
        %899 = vmatprep.mubr.f32.mxu0 0.0
        %900 = vmatmul.mubr.f32.gmra.mrb[0].mxu0 %v582
        %v901 = vpop.f32.mrb[0].mxu0
        %v902 = vadd.f32 %v550, %v901
        %v903 = vpop.f32.mrb[0].mxu0
        %904 = vdwg.mxu0
        %905 = vmatprep.subr.mxu0 0.0
        %906 = vmatpush1.xpose.msra.mxu0 %v439
        %907 = vmatprep.subr.mxu0 0.0
        %908 = vmatpush1.xpose.msra.mxu0 %v440
        %909 = vmatprep.subr.mxu0 0.0
        %910 = vmatpush1.xpose.msra.mxu0 %v441
        %911 = vmatprep.subr.mxu0 0.0
        %912 = vmatpush1.xpose.msra.mxu0 %v442
        %913 = vmatprep.subr.mxu0 0.0
        %914 = vmatpush1.xpose.msra.mxu0 %v443
        %915 = vmatprep.subr.mxu0 0.0
        %916 = vmatpush1.xpose.msra.mxu0 %v444
        %917 = vmatprep.subr.mxu0 0.0
        %918 = vmatpush1.xpose.msra.mxu0 %v445
        %919 = vmatprep.subr.mxu0 0.0
        %920 = vmatpush1.xpose.msra.mxu0 %v446
        %921 = vmatprep.subr.mxu0 0.0
        %922 = vmatpush1.xpose.msra.mxu0 %v447
        %923 = vmatprep.subr.mxu0 0.0
        %924 = vmatpush1.xpose.msra.mxu0 %v448
        %925 = vmatprep.subr.mxu0 0.0
        %926 = vmatpush1.xpose.msra.mxu0 %v449
        %927 = vmatprep.subr.mxu0 0.0
        %928 = vmatpush1.xpose.msra.mxu0 %v450
        %929 = vmatprep.subr.mxu0 0.0
        %930 = vmatpush1.xpose.msra.mxu0 %v451
        %931 = vmatprep.subr.mxu0 0.0
        %932 = vmatpush1.xpose.msra.mxu0 %v452
        %933 = vmatprep.subr.mxu0 0.0
        %934 = vmatpush1.xpose.msra.mxu0 %v453
        %935 = vmatprep.subr.mxu0 0.0
        %936 = vmatpush1.xpose.msra.mxu0 %v454
        %937 = vmatprep.subr.mxu0 0.0
        %938 = vmatpush1.xpose.msra.mxu0 0.0
        %939 = vmatprep.subr.mxu0 0.0
        %940 = vmatpush1.xpose.msra.mxu0 0.0
        %941 = vmatprep.subr.mxu0 0.0
        %942 = vmatpush1.xpose.msra.mxu0 0.0
        %943 = vmatprep.subr.mxu0 0.0
        %944 = vmatpush1.xpose.msra.mxu0 0.0
        %945 = vmatprep.subr.mxu0 0.0
        %946 = vmatpush1.xpose.msra.mxu0 0.0
        %947 = vmatprep.subr.mxu0 0.0
        %948 = vmatpush1.xpose.msra.mxu0 0.0
        %949 = vmatprep.subr.mxu0 0.0
        %950 = vmatpush1.xpose.msra.mxu0 0.0
        %951 = vmatprep.subr.mxu0 0.0
        %952 = vmatpush1.xpose.msra.mxu0 0.0
        %953 = vmatprep.subr.mxu0 0.0
        %954 = vmatpush1.xpose.msra.mxu0 0.0
        %955 = vmatprep.subr.mxu0 0.0
        %956 = vmatpush1.xpose.msra.mxu0 0.0
        %957 = vmatprep.subr.mxu0 0.0
        %958 = vmatpush1.xpose.msra.mxu0 0.0
        %959 = vmatprep.subr.mxu0 0.0
        %960 = vmatpush1.xpose.msra.mxu0 0.0
        %961 = vmatprep.subr.mxu0 0.0
        %962 = vmatpush1.xpose.msra.mxu0 0.0
        %963 = vmatprep.subr.mxu0 0.0
        %964 = vmatpush1.xpose.msra.mxu0 0.0
        %965 = vmatprep.subr.mxu0 0.0
        %966 = vmatpush1.xpose.msra.mxu0 0.0
        %967 = vmatprep.subr.mxu0 0.0
        %968 = vmatpush1.xpose.msra.mxu0 0.0
        %969 = vmatprep.mubr.f32.mxu0 0.0
        %970 = vmatmul.mubr.f32.gmra.mrb[0].mxu0 %v583
        %v971 = vpop.f32.mrb[0].mxu0
        %v972 = vadd.f32 %v535, %v971
        %v973 = vpop.f32.mrb[0].mxu0
        %974 = vmatprep.mubr.f32.mxu0 0.0
        %975 = vmatmul.mubr.f32.gmra.mrb[0].mxu0 %v584
        %v976 = vpop.f32.mrb[0].mxu0
        %v977 = vadd.f32 %v536, %v976
        %v978 = vpop.f32.mrb[0].mxu0
        %979 = vmatprep.mubr.f32.mxu0 0.0
        %980 = vmatmul.mubr.f32.gmra.mrb[0].mxu0 %v585
        %v981 = vpop.f32.mrb[0].mxu0
        %v982 = vadd.f32 %v537, %v981
        %v983 = vpop.f32.mrb[0].mxu0
        %984 = vmatprep.mubr.f32.mxu0 0.0
        %985 = vmatmul.mubr.f32.gmra.mrb[0].mxu0 %v586
        %v986 = vpop.f32.mrb[0].mxu0
        %v987 = vadd.f32 %v538, %v986
        %v988 = vpop.f32.mrb[0].mxu0
        %989 = vmatprep.mubr.f32.mxu0 0.0
        %990 = vmatmul.mubr.f32.gmra.mrb[0].mxu0 %v587
        %v991 = vpop.f32.mrb[0].mxu0
        %v992 = vadd.f32 %v539, %v991
        %v993 = vpop.f32.mrb[0].mxu0
        %994 = vmatprep.mubr.f32.mxu0 0.0
        %995 = vmatmul.mubr.f32.gmra.mrb[0].mxu0 %v588
        %v996 = vpop.f32.mrb[0].mxu0
        %v997 = vadd.f32 %v540, %v996
        %v998 = vpop.f32.mrb[0].mxu0
        %999 = vmatprep.mubr.f32.mxu0 0.0
        %1000 = vmatmul.mubr.f32.gmra.mrb[0].mxu0 %v589
        %v1001 = vpop.f32.mrb[0].mxu0
        %v1002 = vadd.f32 %v541, %v1001
        %v1003 = vpop.f32.mrb[0].mxu0
        %1004 = vmatprep.mubr.f32.mxu0 0.0
        %1005 = vmatmul.mubr.f32.gmra.mrb[0].mxu0 %v590
        %v1006 = vpop.f32.mrb[0].mxu0
        %v1007 = vadd.f32 %v542, %v1006
        %v1008 = vpop.f32.mrb[0].mxu0
        %1009 = vmatprep.mubr.f32.mxu0 0.0
        %1010 = vmatmul.mubr.f32.gmra.mrb[0].mxu0 %v591
        %v1011 = vpop.f32.mrb[0].mxu0
        %v1012 = vadd.f32 %v543, %v1011
        %v1013 = vpop.f32.mrb[0].mxu0
        %1014 = vmatprep.mubr.f32.mxu0 0.0
        %1015 = vmatmul.mubr.f32.gmra.mrb[0].mxu0 %v592
        %v1016 = vpop.f32.mrb[0].mxu0
        %v1017 = vadd.f32 %v544, %v1016
        %v1018 = vpop.f32.mrb[0].mxu0
        %1019 = vmatprep.mubr.f32.mxu0 0.0
        %1020 = vmatmul.mubr.f32.gmra.mrb[0].mxu0 %v593
        %v1021 = vpop.f32.mrb[0].mxu0
        %v1022 = vadd.f32 %v545, %v1021
        %v1023 = vpop.f32.mrb[0].mxu0
        %1024 = vmatprep.mubr.f32.mxu0 0.0
        %1025 = vmatmul.mubr.f32.gmra.mrb[0].mxu0 %v594
        %v1026 = vpop.f32.mrb[0].mxu0
        %v1027 = vadd.f32 %v546, %v1026
        %v1028 = vpop.f32.mrb[0].mxu0
        %1029 = vmatprep.mubr.f32.mxu0 0.0
        %1030 = vmatmul.mubr.f32.gmra.mrb[0].mxu0 %v595
        %v1031 = vpop.f32.mrb[0].mxu0
        %v1032 = vadd.f32 %v547, %v1031
        %v1033 = vpop.f32.mrb[0].mxu0
        %1034 = vmatprep.mubr.f32.mxu0 0.0
        %1035 = vmatmul.mubr.f32.gmra.mrb[0].mxu0 %v596
        %v1036 = vpop.f32.mrb[0].mxu0
        %v1037 = vadd.f32 %v548, %v1036
        %v1038 = vpop.f32.mrb[0].mxu0
        %1039 = vmatprep.mubr.f32.mxu0 0.0
        %1040 = vmatmul.mubr.f32.gmra.mrb[0].mxu0 %v597
        %v1041 = vpop.f32.mrb[0].mxu0
        %v1042 = vadd.f32 %v549, %v1041
        %v1043 = vpop.f32.mrb[0].mxu0
        %1044 = vmatprep.mubr.f32.mxu0 0.0
        %1045 = vmatmul.mubr.f32.gmra.mrb[0].mxu0 %v598
        %v1046 = vpop.f32.mrb[0].mxu0
        %v1047 = vadd.f32 %v550, %v1046
        %v1048 = vpop.f32.mrb[0].mxu0
        %1049 = vdwg.mxu0
        %1050 = vmatprep.subr.mxu0 0.0
        %1051 = vmatpush1.xpose.msra.mxu0 %v455
        %1052 = vmatprep.subr.mxu0 0.0
        %1053 = vmatpush1.xpose.msra.mxu0 %v456
        %1054 = vmatprep.subr.mxu0 0.0
        %1055 = vmatpush1.xpose.msra.mxu0 %v457
        %1056 = vmatprep.subr.mxu0 0.0
        %1057 = vmatpush1.xpose.msra.mxu0 %v458
        %1058 = vmatprep.subr.mxu0 0.0
        %1059 = vmatpush1.xpose.msra.mxu0 %v459
        %1060 = vmatprep.subr.mxu0 0.0
        %1061 = vmatpush1.xpose.msra.mxu0 %v460
        %1062 = vmatprep.subr.mxu0 0.0
        %1063 = vmatpush1.xpose.msra.mxu0 %v461
        %1064 = vmatprep.subr.mxu0 0.0
        %1065 = vmatpush1.xpose.msra.mxu0 %v462
        %1066 = vmatprep.subr.mxu0 0.0
        %1067 = vmatpush1.xpose.msra.mxu0 %v463
        %1068 = vmatprep.subr.mxu0 0.0
        %1069 = vmatpush1.xpose.msra.mxu0 %v464
        %1070 = vmatprep.subr.mxu0 0.0
        %1071 = vmatpush1.xpose.msra.mxu0 %v465
        %1072 = vmatprep.subr.mxu0 0.0
        %1073 = vmatpush1.xpose.msra.mxu0 %v466
        %1074 = vmatprep.subr.mxu0 0.0
        %1075 = vmatpush1.xpose.msra.mxu0 %v467
        %1076 = vmatprep.subr.mxu0 0.0
        %1077 = vmatpush1.xpose.msra.mxu0 %v468
        %1078 = vmatprep.subr.mxu0 0.0
        %1079 = vmatpush1.xpose.msra.mxu0 %v469
        %1080 = vmatprep.subr.mxu0 0.0
        %1081 = vmatpush1.xpose.msra.mxu0 %v470
        %1082 = vmatprep.subr.mxu0 0.0
        %1083 = vmatpush1.xpose.msra.mxu0 0.0
        %1084 = vmatprep.subr.mxu0 0.0
        %1085 = vmatpush1.xpose.msra.mxu0 0.0
        %1086 = vmatprep.subr.mxu0 0.0
        %1087 = vmatpush1.xpose.msra.mxu0 0.0
        %1088 = vmatprep.subr.mxu0 0.0
        %1089 = vmatpush1.xpose.msra.mxu0 0.0
        %1090 = vmatprep.subr.mxu0 0.0
        %1091 = vmatpush1.xpose.msra.mxu0 0.0
        %1092 = vmatprep.subr.mxu0 0.0
        %1093 = vmatpush1.xpose.msra.mxu0 0.0
        %1094 = vmatprep.subr.mxu0 0.0
        %1095 = vmatpush1.xpose.msra.mxu0 0.0
        %1096 = vmatprep.subr.mxu0 0.0
        %1097 = vmatpush1.xpose.msra.mxu0 0.0
        %1098 = vmatprep.subr.mxu0 0.0
        %1099 = vmatpush1.xpose.msra.mxu0 0.0
        %1100 = vmatprep.subr.mxu0 0.0
        %1101 = vmatpush1.xpose.msra.mxu0 0.0
        %1102 = vmatprep.subr.mxu0 0.0
        %1103 = vmatpush1.xpose.msra.mxu0 0.0
        %1104 = vmatprep.subr.mxu0 0.0
        %1105 = vmatpush1.xpose.msra.mxu0 0.0
        %1106 = vmatprep.subr.mxu0 0.0
        %1107 = vmatpush1.xpose.msra.mxu0 0.0
        %1108 = vmatprep.subr.mxu0 0.0
        %1109 = vmatpush1.xpose.msra.mxu0 0.0
        %1110 = vmatprep.subr.mxu0 0.0
        %1111 = vmatpush1.xpose.msra.mxu0 0.0
        %1112 = vmatprep.subr.mxu0 0.0
        %1113 = vmatpush1.xpose.msra.mxu0 0.0
        %1114 = vmatprep.mubr.f32.mxu0 0.0
        %1115 = vmatmul.mubr.f32.gmra.mrb[0].mxu0 %v599
        %v1116 = vpop.f32.mrb[0].mxu0
        %v1117 = vadd.f32 %v535, %v1116
        %v1118 = vpop.f32.mrb[0].mxu0
        %1119 = vmatprep.mubr.f32.mxu0 0.0
        %1120 = vmatmul.mubr.f32.gmra.mrb[0].mxu0 %v600
        %v1121 = vpop.f32.mrb[0].mxu0
        %v1122 = vadd.f32 %v536, %v1121
        %v1123 = vpop.f32.mrb[0].mxu0
        %1124 = vmatprep.mubr.f32.mxu0 0.0
        %1125 = vmatmul.mubr.f32.gmra.mrb[0].mxu0 %v601
        %v1126 = vpop.f32.mrb[0].mxu0
        %v1127 = vadd.f32 %v537, %v1126
        %v1128 = vpop.f32.mrb[0].mxu0
        %1129 = vmatprep.mubr.f32.mxu0 0.0
        %1130 = vmatmul.mubr.f32.gmra.mrb[0].mxu0 %v602
        %v1131 = vpop.f32.mrb[0].mxu0
        %v1132 = vadd.f32 %v538, %v1131
        %v1133 = vpop.f32.mrb[0].mxu0
        %1134 = vmatprep.mubr.f32.mxu0 0.0
        %1135 = vmatmul.mubr.f32.gmra.mrb[0].mxu0 %v603
        %v1136 = vpop.f32.mrb[0].mxu0
        %v1137 = vadd.f32 %v539, %v1136
        %v1138 = vpop.f32.mrb[0].mxu0
        %1139 = vmatprep.mubr.f32.mxu0 0.0
        %1140 = vmatmul.mubr.f32.gmra.mrb[0].mxu0 %v604
        %v1141 = vpop.f32.mrb[0].mxu0
        %v1142 = vadd.f32 %v540, %v1141
        %v1143 = vpop.f32.mrb[0].mxu0
        %1144 = vmatprep.mubr.f32.mxu0 0.0
        %1145 = vmatmul.mubr.f32.gmra.mrb[0].mxu0 %v605
        %v1146 = vpop.f32.mrb[0].mxu0
        %v1147 = vadd.f32 %v541, %v1146
        %v1148 = vpop.f32.mrb[0].mxu0
        %1149 = vmatprep.mubr.f32.mxu0 0.0
        %1150 = vmatmul.mubr.f32.gmra.mrb[0].mxu0 %v606
        %v1151 = vpop.f32.mrb[0].mxu0
        %v1152 = vadd.f32 %v542, %v1151
        %v1153 = vpop.f32.mrb[0].mxu0
        %1154 = vmatprep.mubr.f32.mxu0 0.0
        %1155 = vmatmul.mubr.f32.gmra.mrb[0].mxu0 %v607
        %v1156 = vpop.f32.mrb[0].mxu0
        %v1157 = vadd.f32 %v543, %v1156
        %v1158 = vpop.f32.mrb[0].mxu0
        %1159 = vmatprep.mubr.f32.mxu0 0.0
        %1160 = vmatmul.mubr.f32.gmra.mrb[0].mxu0 %v608
        %v1161 = vpop.f32.mrb[0].mxu0
        %v1162 = vadd.f32 %v544, %v1161
        %v1163 = vpop.f32.mrb[0].mxu0
        %1164 = vmatprep.mubr.f32.mxu0 0.0
        %1165 = vmatmul.mubr.f32.gmra.mrb[0].mxu0 %v609
        %v1166 = vpop.f32.mrb[0].mxu0
        %v1167 = vadd.f32 %v545, %v1166
        %v1168 = vpop.f32.mrb[0].mxu0
        %1169 = vmatprep.mubr.f32.mxu0 0.0
        %1170 = vmatmul.mubr.f32.gmra.mrb[0].mxu0 %v610
        %v1171 = vpop.f32.mrb[0].mxu0
        %v1172 = vadd.f32 %v546, %v1171
        %v1173 = vpop.f32.mrb[0].mxu0
        %1174 = vmatprep.mubr.f32.mxu0 0.0
        %1175 = vmatmul.mubr.f32.gmra.mrb[0].mxu0 %v611
        %v1176 = vpop.f32.mrb[0].mxu0
        %v1177 = vadd.f32 %v547, %v1176
        %v1178 = vpop.f32.mrb[0].mxu0
        %1179 = vmatprep.mubr.f32.mxu0 0.0
        %1180 = vmatmul.mubr.f32.gmra.mrb[0].mxu0 %v612
        %v1181 = vpop.f32.mrb[0].mxu0
        %v1182 = vadd.f32 %v548, %v1181
        %v1183 = vpop.f32.mrb[0].mxu0
        %1184 = vmatprep.mubr.f32.mxu0 0.0
        %1185 = vmatmul.mubr.f32.gmra.mrb[0].mxu0 %v613
        %v1186 = vpop.f32.mrb[0].mxu0
        %v1187 = vadd.f32 %v549, %v1186
        %v1188 = vpop.f32.mrb[0].mxu0
        %1189 = vmatprep.mubr.f32.mxu0 0.0
        %1190 = vmatmul.mubr.f32.gmra.mrb[0].mxu0 %v614
        %v1191 = vpop.f32.mrb[0].mxu0
        %v1192 = vadd.f32 %v550, %v1191
        %v1193 = vpop.f32.mrb[0].mxu0
        %1194 = vdwg.mxu0
        %1195 = vmax.xlane.f32.xlu0 %v682
        %v1196 = vpop.xlane.xlu0 %1195
        %1197 = vmax.xlane.f32.xlu0 %v687
        %v1198 = vpop.xlane.xlu0 %1197
        %1199 = vmax.xlane.f32.xlu0 %v692
        %v1200 = vpop.xlane.xlu0 %1199
        %1201 = vmax.xlane.f32.xlu0 %v697
        %v1202 = vpop.xlane.xlu0 %1201
        %1203 = vmax.xlane.f32.xlu0 %v702
        %v1204 = vpop.xlane.xlu0 %1203
        %1205 = vmax.xlane.f32.xlu0 %v707
        %v1206 = vpop.xlane.xlu0 %1205
        %1207 = vmax.xlane.f32.xlu0 %v712
        %v1208 = vpop.xlane.xlu0 %1207
        %1209 = vmax.xlane.f32.xlu0 %v717
        %v1210 = vpop.xlane.xlu0 %1209
        %1211 = vmax.xlane.f32.xlu0 %v722
        %v1212 = vpop.xlane.xlu0 %1211
        %1213 = vmax.xlane.f32.xlu0 %v727
        %v1214 = vpop.xlane.xlu0 %1213
        %1215 = vmax.xlane.f32.xlu0 %v732
        %v1216 = vpop.xlane.xlu0 %1215
        %1217 = vmax.xlane.f32.xlu0 %v737
        %v1218 = vpop.xlane.xlu0 %1217
        %1219 = vmax.xlane.f32.xlu0 %v742
        %v1220 = vpop.xlane.xlu0 %1219
        %1221 = vmax.xlane.f32.xlu0 %v747
        %v1222 = vpop.xlane.xlu0 %1221
        %1223 = vmax.xlane.f32.xlu0 %v752
        %v1224 = vpop.xlane.xlu0 %1223
        %1225 = vmax.xlane.f32.xlu0 %v757
        %v1226 = vpop.xlane.xlu0 %1225
        %1227 = vmax.xlane.f32.xlu0 %v827
        %v1228 = vpop.xlane.xlu0 %1227
        %1229 = vmax.xlane.f32.xlu0 %v832
        %v1230 = vpop.xlane.xlu0 %1229
        %1231 = vmax.xlane.f32.xlu0 %v837
        %v1232 = vpop.xlane.xlu0 %1231
        %1233 = vmax.xlane.f32.xlu0 %v842
        %v1234 = vpop.xlane.xlu0 %1233
        %1235 = vmax.xlane.f32.xlu0 %v847
        %v1236 = vpop.xlane.xlu0 %1235
        %1237 = vmax.xlane.f32.xlu0 %v852
        %v1238 = vpop.xlane.xlu0 %1237
        %1239 = vmax.xlane.f32.xlu0 %v857
        %v1240 = vpop.xlane.xlu0 %1239
        %1241 = vmax.xlane.f32.xlu0 %v862
        %v1242 = vpop.xlane.xlu0 %1241
        %1243 = vmax.xlane.f32.xlu0 %v867
        %v1244 = vpop.xlane.xlu0 %1243
        %1245 = vmax.xlane.f32.xlu0 %v872
        %v1246 = vpop.xlane.xlu0 %1245
        %1247 = vmax.xlane.f32.xlu0 %v877
        %v1248 = vpop.xlane.xlu0 %1247
        %1249 = vmax.xlane.f32.xlu0 %v882
        %v1250 = vpop.xlane.xlu0 %1249
        %1251 = vmax.xlane.f32.xlu0 %v887
        %v1252 = vpop.xlane.xlu0 %1251
        %1253 = vmax.xlane.f32.xlu0 %v892
        %v1254 = vpop.xlane.xlu0 %1253
        %1255 = vmax.xlane.f32.xlu0 %v897
        %v1256 = vpop.xlane.xlu0 %1255
        %1257 = vmax.xlane.f32.xlu0 %v902
        %v1258 = vpop.xlane.xlu0 %1257
        %1259 = vmax.xlane.f32.xlu0 %v972
        %v1260 = vpop.xlane.xlu0 %1259
        %1261 = vmax.xlane.f32.xlu0 %v977
        %v1262 = vpop.xlane.xlu0 %1261
        %1263 = vmax.xlane.f32.xlu0 %v982
        %v1264 = vpop.xlane.xlu0 %1263
        %1265 = vmax.xlane.f32.xlu0 %v987
        %v1266 = vpop.xlane.xlu0 %1265
        %1267 = vmax.xlane.f32.xlu0 %v992
        %v1268 = vpop.xlane.xlu0 %1267
        %1269 = vmax.xlane.f32.xlu0 %v997
        %v1270 = vpop.xlane.xlu0 %1269
        %1271 = vmax.xlane.f32.xlu0 %v1002
        %v1272 = vpop.xlane.xlu0 %1271
        %1273 = vmax.xlane.f32.xlu0 %v1007
        %v1274 = vpop.xlane.xlu0 %1273
        %1275 = vmax.xlane.f32.xlu0 %v1012
        %v1276 = vpop.xlane.xlu0 %1275
        %1277 = vmax.xlane.f32.xlu0 %v1017
        %v1278 = vpop.xlane.xlu0 %1277
        %1279 = vmax.xlane.f32.xlu0 %v1022
        %v1280 = vpop.xlane.xlu0 %1279
        %1281 = vmax.xlane.f32.xlu0 %v1027
        %v1282 = vpop.xlane.xlu0 %1281
        %1283 = vmax.xlane.f32.xlu0 %v1032
        %v1284 = vpop.xlane.xlu0 %1283
        %1285 = vmax.xlane.f32.xlu0 %v1037
        %v1286 = vpop.xlane.xlu0 %1285
        %1287 = vmax.xlane.f32.xlu0 %v1042
        %v1288 = vpop.xlane.xlu0 %1287
        %1289 = vmax.xlane.f32.xlu0 %v1047
        %v1290 = vpop.xlane.xlu0 %1289
        %1291 = vmax.xlane.f32.xlu0 %v1117
        %v1292 = vpop.xlane.xlu0 %1291
        %1293 = vmax.xlane.f32.xlu0 %v1122
        %v1294 = vpop.xlane.xlu0 %1293
        %1295 = vmax.xlane.f32.xlu0 %v1127
        %v1296 = vpop.xlane.xlu0 %1295
        %1297 = vmax.xlane.f32.xlu0 %v1132
        %v1298 = vpop.xlane.xlu0 %1297
        %1299 = vmax.xlane.f32.xlu0 %v1137
        %v1300 = vpop.xlane.xlu0 %1299
        %1301 = vmax.xlane.f32.xlu0 %v1142
        %v1302 = vpop.xlane.xlu0 %1301
        %1303 = vmax.xlane.f32.xlu0 %v1147
        %v1304 = vpop.xlane.xlu0 %1303
        %1305 = vmax.xlane.f32.xlu0 %v1152
        %v1306 = vpop.xlane.xlu0 %1305
        %1307 = vmax.xlane.f32.xlu0 %v1157
        %v1308 = vpop.xlane.xlu0 %1307
        %1309 = vmax.xlane.f32.xlu0 %v1162
        %v1310 = vpop.xlane.xlu0 %1309
        %1311 = vmax.xlane.f32.xlu0 %v1167
        %v1312 = vpop.xlane.xlu0 %1311
        %1313 = vmax.xlane.f32.xlu0 %v1172
        %v1314 = vpop.xlane.xlu0 %1313
        %1315 = vmax.xlane.f32.xlu0 %v1177
        %v1316 = vpop.xlane.xlu0 %1315
        %1317 = vmax.xlane.f32.xlu0 %v1182
        %v1318 = vpop.xlane.xlu0 %1317
        %1319 = vmax.xlane.f32.xlu0 %v1187
        %v1320 = vpop.xlane.xlu0 %1319
        %1321 = vmax.xlane.f32.xlu0 %v1192
        %v1322 = vpop.xlane.xlu0 %1321
        %v1323 = vsub.f32 %v682, %v1196
        %v1324 = vsub.f32 %v687, %v1198
        %v1325 = vsub.f32 %v692, %v1200
        %v1326 = vsub.f32 %v697, %v1202
        %v1327 = vsub.f32 %v702, %v1204
        %v1328 = vsub.f32 %v707, %v1206
        %v1329 = vsub.f32 %v712, %v1208
        %v1330 = vsub.f32 %v717, %v1210
        %v1331 = vsub.f32 %v722, %v1212
        %v1332 = vsub.f32 %v727, %v1214
        %v1333 = vsub.f32 %v732, %v1216
        %v1334 = vsub.f32 %v737, %v1218
        %v1335 = vsub.f32 %v742, %v1220
        %v1336 = vsub.f32 %v747, %v1222
        %v1337 = vsub.f32 %v752, %v1224
        %v1338 = vsub.f32 %v757, %v1226
        %v1339 = vsub.f32 %v827, %v1228
        %v1340 = vsub.f32 %v832, %v1230
        %v1341 = vsub.f32 %v837, %v1232
        %v1342 = vsub.f32 %v842, %v1234
        %v1343 = vsub.f32 %v847, %v1236
        %v1344 = vsub.f32 %v852, %v1238
        %v1345 = vsub.f32 %v857, %v1240
        %v1346 = vsub.f32 %v862, %v1242
        %v1347 = vsub.f32 %v867, %v1244
        %v1348 = vsub.f32 %v872, %v1246
        %v1349 = vsub.f32 %v877, %v1248
        %v1350 = vsub.f32 %v882, %v1250
        %v1351 = vsub.f32 %v887, %v1252
        %v1352 = vsub.f32 %v892, %v1254
        %v1353 = vsub.f32 %v897, %v1256
        %v1354 = vsub.f32 %v902, %v1258
        %v1355 = vsub.f32 %v972, %v1260
        %v1356 = vsub.f32 %v977, %v1262
        %v1357 = vsub.f32 %v982, %v1264
        %v1358 = vsub.f32 %v987, %v1266
        %v1359 = vsub.f32 %v992, %v1268
        %v1360 = vsub.f32 %v997, %v1270
        %v1361 = vsub.f32 %v1002, %v1272
        %v1362 = vsub.f32 %v1007, %v1274
        %v1363 = vsub.f32 %v1012, %v1276
        %v1364 = vsub.f32 %v1017, %v1278
        %v1365 = vsub.f32 %v1022, %v1280
        %v1366 = vsub.f32 %v1027, %v1282
        %v1367 = vsub.f32 %v1032, %v1284
        %v1368 = vsub.f32 %v1037, %v1286
        %v1369 = vsub.f32 %v1042, %v1288
        %v1370 = vsub.f32 %v1047, %v1290
        %v1371 = vsub.f32 %v1117, %v1292
        %v1372 = vsub.f32 %v1122, %v1294
        %v1373 = vsub.f32 %v1127, %v1296
        %v1374 = vsub.f32 %v1132, %v1298
        %v1375 = vsub.f32 %v1137, %v1300
        %v1376 = vsub.f32 %v1142, %v1302
        %v1377 = vsub.f32 %v1147, %v1304
        %v1378 = vsub.f32 %v1152, %v1306
        %v1379 = vsub.f32 %v1157, %v1308
        %v1380 = vsub.f32 %v1162, %v1310
        %v1381 = vsub.f32 %v1167, %v1312
        %v1382 = vsub.f32 %v1172, %v1314
        %v1383 = vsub.f32 %v1177, %v1316
        %v1384 = vsub.f32 %v1182, %v1318
        %v1385 = vsub.f32 %v1187, %v1320
        %v1386 = vsub.f32 %v1192, %v1322
        %v1387 = vmul.f32 %v1323, 1.442695
        %v1388 = vpow.pop %v1387
        %v1389 = vmul.f32 %v1324, 1.442695
        %v1390 = vpow.pop %v1389
        %v1391 = vmul.f32 %v1325, 1.442695
        %v1392 = vpow.pop %v1391
        %v1393 = vmul.f32 %v1326, 1.442695
        %v1394 = vpow.pop %v1393
        %v1395 = vmul.f32 %v1327, 1.442695
        %v1396 = vpow.pop %v1395
        %v1397 = vmul.f32 %v1328, 1.442695
        %v1398 = vpow.pop %v1397
        %v1399 = vmul.f32 %v1329, 1.442695
        %v1400 = vpow.pop %v1399
        %v1401 = vmul.f32 %v1330, 1.442695
        %v1402 = vpow.pop %v1401
        %v1403 = vmul.f32 %v1331, 1.442695
        %v1404 = vpow.pop %v1403
        %v1405 = vmul.f32 %v1332, 1.442695
        %v1406 = vpow.pop %v1405
        %v1407 = vmul.f32 %v1333, 1.442695
        %v1408 = vpow.pop %v1407
        %v1409 = vmul.f32 %v1334, 1.442695
        %v1410 = vpow.pop %v1409
        %v1411 = vmul.f32 %v1335, 1.442695
        %v1412 = vpow.pop %v1411
        %v1413 = vmul.f32 %v1336, 1.442695
        %v1414 = vpow.pop %v1413
        %v1415 = vmul.f32 %v1337, 1.442695
        %v1416 = vpow.pop %v1415
        %v1417 = vmul.f32 %v1338, 1.442695
        %v1418 = vpow.pop %v1417
        %v1419 = vmul.f32 %v1339, 1.442695
        %v1420 = vpow.pop %v1419
        %v1421 = vmul.f32 %v1340, 1.442695
        %v1422 = vpow.pop %v1421
        %v1423 = vmul.f32 %v1341, 1.442695
        %v1424 = vpow.pop %v1423
        %v1425 = vmul.f32 %v1342, 1.442695
        %v1426 = vpow.pop %v1425
        %v1427 = vmul.f32 %v1343, 1.442695
        %v1428 = vpow.pop %v1427
        %v1429 = vmul.f32 %v1344, 1.442695
        %v1430 = vpow.pop %v1429
        %v1431 = vmul.f32 %v1345, 1.442695
        %v1432 = vpow.pop %v1431
        %v1433 = vmul.f32 %v1346, 1.442695
        %v1434 = vpow.pop %v1433
        %v1435 = vmul.f32 %v1347, 1.442695
        %v1436 = vpow.pop %v1435
        %v1437 = vmul.f32 %v1348, 1.442695
        %v1438 = vpow.pop %v1437
        %v1439 = vmul.f32 %v1349, 1.442695
        %v1440 = vpow.pop %v1439
        %v1441 = vmul.f32 %v1350, 1.442695
        %v1442 = vpow.pop %v1441
        %v1443 = vmul.f32 %v1351, 1.442695
        %v1444 = vpow.pop %v1443
        %v1445 = vmul.f32 %v1352, 1.442695
        %v1446 = vpow.pop %v1445
        %v1447 = vmul.f32 %v1353, 1.442695
        %v1448 = vpow.pop %v1447
        %v1449 = vmul.f32 %v1354, 1.442695
        %v1450 = vpow.pop %v1449
        %v1451 = vmul.f32 %v1355, 1.442695
        %v1452 = vpow.pop %v1451
        %v1453 = vmul.f32 %v1356, 1.442695
        %v1454 = vpow.pop %v1453
        %v1455 = vmul.f32 %v1357, 1.442695
        %v1456 = vpow.pop %v1455
        %v1457 = vmul.f32 %v1358, 1.442695
        %v1458 = vpow.pop %v1457
        %v1459 = vmul.f32 %v1359, 1.442695
        %v1460 = vpow.pop %v1459
        %v1461 = vmul.f32 %v1360, 1.442695
        %v1462 = vpow.pop %v1461
        %v1463 = vmul.f32 %v1361, 1.442695
        %v1464 = vpow.pop %v1463
        %v1465 = vmul.f32 %v1362, 1.442695
        %v1466 = vpow.pop %v1465
        %v1467 = vmul.f32 %v1363, 1.442695
        %v1468 = vpow.pop %v1467
        %v1469 = vmul.f32 %v1364, 1.442695
        %v1470 = vpow.pop %v1469
        %v1471 = vmul.f32 %v1365, 1.442695
        %v1472 = vpow.pop %v1471
        %v1473 = vmul.f32 %v1366, 1.442695
        %v1474 = vpow.pop %v1473
        %v1475 = vmul.f32 %v1367, 1.442695
        %v1476 = vpow.pop %v1475
        %v1477 = vmul.f32 %v1368, 1.442695
        %v1478 = vpow.pop %v1477
        %v1479 = vmul.f32 %v1369, 1.442695
        %v1480 = vpow.pop %v1479
        %v1481 = vmul.f32 %v1370, 1.442695
        %v1482 = vpow.pop %v1481
        %v1483 = vmul.f32 %v1371, 1.442695
        %v1484 = vpow.pop %v1483
        %v1485 = vmul.f32 %v1372, 1.442695
        %v1486 = vpow.pop %v1485
        %v1487 = vmul.f32 %v1373, 1.442695
        %v1488 = vpow.pop %v1487
        %v1489 = vmul.f32 %v1374, 1.442695
        %v1490 = vpow.pop %v1489
        %v1491 = vmul.f32 %v1375, 1.442695
        %v1492 = vpow.pop %v1491
        %v1493 = vmul.f32 %v1376, 1.442695
        %v1494 = vpow.pop %v1493
        %v1495 = vmul.f32 %v1377, 1.442695
        %v1496 = vpow.pop %v1495
        %v1497 = vmul.f32 %v1378, 1.442695
        %v1498 = vpow.pop %v1497
        %v1499 = vmul.f32 %v1379, 1.442695
        %v1500 = vpow.pop %v1499
        %v1501 = vmul.f32 %v1380, 1.442695
        %v1502 = vpow.pop %v1501
        %v1503 = vmul.f32 %v1381, 1.442695
        %v1504 = vpow.pop %v1503
        %v1505 = vmul.f32 %v1382, 1.442695
        %v1506 = vpow.pop %v1505
        %v1507 = vmul.f32 %v1383, 1.442695
        %v1508 = vpow.pop %v1507
        %v1509 = vmul.f32 %v1384, 1.442695
        %v1510 = vpow.pop %v1509
        %v1511 = vmul.f32 %v1385, 1.442695
        %v1512 = vpow.pop %v1511
        %v1513 = vmul.f32 %v1386, 1.442695
        %v1514 = vpow.pop %v1513
        %1515 = vadd.xlane.f32.xlu0 %v1388
        %v1516 = vpop.xlane.xlu0 %1515
        %1517 = vadd.xlane.f32.xlu0 %v1390
        %v1518 = vpop.xlane.xlu0 %1517
        %1519 = vadd.xlane.f32.xlu0 %v1392
        %v1520 = vpop.xlane.xlu0 %1519
        %1521 = vadd.xlane.f32.xlu0 %v1394
        %v1522 = vpop.xlane.xlu0 %1521
        %1523 = vadd.xlane.f32.xlu0 %v1396
        %v1524 = vpop.xlane.xlu0 %1523
        %1525 = vadd.xlane.f32.xlu0 %v1398
        %v1526 = vpop.xlane.xlu0 %1525
        %1527 = vadd.xlane.f32.xlu0 %v1400
        %v1528 = vpop.xlane.xlu0 %1527
        %1529 = vadd.xlane.f32.xlu0 %v1402
        %v1530 = vpop.xlane.xlu0 %1529
        %1531 = vadd.xlane.f32.xlu0 %v1404
        %v1532 = vpop.xlane.xlu0 %1531
        %1533 = vadd.xlane.f32.xlu0 %v1406
        %v1534 = vpop.xlane.xlu0 %1533
        %1535 = vadd.xlane.f32.xlu0 %v1408
        %v1536 = vpop.xlane.xlu0 %1535
        %1537 = vadd.xlane.f32.xlu0 %v1410
        %v1538 = vpop.xlane.xlu0 %1537
        %1539 = vadd.xlane.f32.xlu0 %v1412
        %v1540 = vpop.xlane.xlu0 %1539
        %1541 = vadd.xlane.f32.xlu0 %v1414
        %v1542 = vpop.xlane.xlu0 %1541
        %1543 = vadd.xlane.f32.xlu0 %v1416
        %v1544 = vpop.xlane.xlu0 %1543
        %1545 = vadd.xlane.f32.xlu0 %v1418
        %v1546 = vpop.xlane.xlu0 %1545
        %1547 = vadd.xlane.f32.xlu0 %v1420
        %v1548 = vpop.xlane.xlu0 %1547
        %1549 = vadd.xlane.f32.xlu0 %v1422
        %v1550 = vpop.xlane.xlu0 %1549
        %1551 = vadd.xlane.f32.xlu0 %v1424
        %v1552 = vpop.xlane.xlu0 %1551
        %1553 = vadd.xlane.f32.xlu0 %v1426
        %v1554 = vpop.xlane.xlu0 %1553
        %1555 = vadd.xlane.f32.xlu0 %v1428
        %v1556 = vpop.xlane.xlu0 %1555
        %1557 = vadd.xlane.f32.xlu0 %v1430
        %v1558 = vpop.xlane.xlu0 %1557
        %1559 = vadd.xlane.f32.xlu0 %v1432
        %v1560 = vpop.xlane.xlu0 %1559
        %1561 = vadd.xlane.f32.xlu0 %v1434
        %v1562 = vpop.xlane.xlu0 %1561
        %1563 = vadd.xlane.f32.xlu0 %v1436
        %v1564 = vpop.xlane.xlu0 %1563
        %1565 = vadd.xlane.f32.xlu0 %v1438
        %v1566 = vpop.xlane.xlu0 %1565
        %1567 = vadd.xlane.f32.xlu0 %v1440
        %v1568 = vpop.xlane.xlu0 %1567
        %1569 = vadd.xlane.f32.xlu0 %v1442
        %v1570 = vpop.xlane.xlu0 %1569
        %1571 = vadd.xlane.f32.xlu0 %v1444
        %v1572 = vpop.xlane.xlu0 %1571
        %1573 = vadd.xlane.f32.xlu0 %v1446
        %v1574 = vpop.xlane.xlu0 %1573
        %1575 = vadd.xlane.f32.xlu0 %v1448
        %v1576 = vpop.xlane.xlu0 %1575
        %1577 = vadd.xlane.f32.xlu0 %v1450
        %v1578 = vpop.xlane.xlu0 %1577
        %1579 = vadd.xlane.f32.xlu0 %v1452
        %v1580 = vpop.xlane.xlu0 %1579
        %1581 = vadd.xlane.f32.xlu0 %v1454
        %v1582 = vpop.xlane.xlu0 %1581
        %1583 = vadd.xlane.f32.xlu0 %v1456
        %v1584 = vpop.xlane.xlu0 %1583
        %1585 = vadd.xlane.f32.xlu0 %v1458
        %v1586 = vpop.xlane.xlu0 %1585
        %1587 = vadd.xlane.f32.xlu0 %v1460
        %v1588 = vpop.xlane.xlu0 %1587
        %1589 = vadd.xlane.f32.xlu0 %v1462
        %v1590 = vpop.xlane.xlu0 %1589
        %1591 = vadd.xlane.f32.xlu0 %v1464
        %v1592 = vpop.xlane.xlu0 %1591
        %1593 = vadd.xlane.f32.xlu0 %v1466
        %v1594 = vpop.xlane.xlu0 %1593
        %1595 = vadd.xlane.f32.xlu0 %v1468
        %v1596 = vpop.xlane.xlu0 %1595
        %1597 = vadd.xlane.f32.xlu0 %v1470
        %v1598 = vpop.xlane.xlu0 %1597
        %1599 = vadd.xlane.f32.xlu0 %v1472
        %v1600 = vpop.xlane.xlu0 %1599
        %1601 = vadd.xlane.f32.xlu0 %v1474
        %v1602 = vpop.xlane.xlu0 %1601
        %1603 = vadd.xlane.f32.xlu0 %v1476
        %v1604 = vpop.xlane.xlu0 %1603
        %1605 = vadd.xlane.f32.xlu0 %v1478
        %v1606 = vpop.xlane.xlu0 %1605
        %1607 = vadd.xlane.f32.xlu0 %v1480
        %v1608 = vpop.xlane.xlu0 %1607
        %1609 = vadd.xlane.f32.xlu0 %v1482
        %v1610 = vpop.xlane.xlu0 %1609
        %1611 = vadd.xlane.f32.xlu0 %v1484
        %v1612 = vpop.xlane.xlu0 %1611
        %1613 = vadd.xlane.f32.xlu0 %v1486
        %v1614 = vpop.xlane.xlu0 %1613
        %1615 = vadd.xlane.f32.xlu0 %v1488
        %v1616 = vpop.xlane.xlu0 %1615
        %1617 = vadd.xlane.f32.xlu0 %v1490
        %v1618 = vpop.xlane.xlu0 %1617
        %1619 = vadd.xlane.f32.xlu0 %v1492
        %v1620 = vpop.xlane.xlu0 %1619
        %1621 = vadd.xlane.f32.xlu0 %v1494
        %v1622 = vpop.xlane.xlu0 %1621
        %1623 = vadd.xlane.f32.xlu0 %v1496
        %v1624 = vpop.xlane.xlu0 %1623
        %1625 = vadd.xlane.f32.xlu0 %v1498
        %v1626 = vpop.xlane.xlu0 %1625
        %1627 = vadd.xlane.f32.xlu0 %v1500
        %v1628 = vpop.xlane.xlu0 %1627
        %1629 = vadd.xlane.f32.xlu0 %v1502
        %v1630 = vpop.xlane.xlu0 %1629
        %1631 = vadd.xlane.f32.xlu0 %v1504
        %v1632 = vpop.xlane.xlu0 %1631
        %1633 = vadd.xlane.f32.xlu0 %v1506
        %v1634 = vpop.xlane.xlu0 %1633
        %1635 = vadd.xlane.f32.xlu0 %v1508
        %v1636 = vpop.xlane.xlu0 %1635
        %1637 = vadd.xlane.f32.xlu0 %v1510
        %v1638 = vpop.xlane.xlu0 %1637
        %1639 = vadd.xlane.f32.xlu0 %v1512
        %v1640 = vpop.xlane.xlu0 %1639
        %1641 = vadd.xlane.f32.xlu0 %v1514
        %v1642 = vpop.xlane.xlu0 %1641
        %v1643 = vmul.f32 %v1516, 0.4
        %v1644 = vmul.f32 %v1518, 0.4
        %v1645 = vmul.f32 %v1520, 0.4
        %v1646 = vmul.f32 %v1522, 0.4
        %v1647 = vmul.f32 %v1524, 0.4
        %v1648 = vmul.f32 %v1526, 0.4
        %v1649 = vmul.f32 %v1528, 0.4
        %v1650 = vmul.f32 %v1530, 0.4
        %v1651 = vmul.f32 %v1532, 0.4
        %v1652 = vmul.f32 %v1534, 0.4
        %v1653 = vmul.f32 %v1536, 0.4
        %v1654 = vmul.f32 %v1538, 0.4
        %v1655 = vmul.f32 %v1540, 0.4
        %v1656 = vmul.f32 %v1542, 0.4
        %v1657 = vmul.f32 %v1544, 0.4
        %v1658 = vmul.f32 %v1546, 0.4
        %v1659 = vmul.f32 %v1548, 0.4
        %v1660 = vmul.f32 %v1550, 0.4
        %v1661 = vmul.f32 %v1552, 0.4
        %v1662 = vmul.f32 %v1554, 0.4
        %v1663 = vmul.f32 %v1556, 0.4
        %v1664 = vmul.f32 %v1558, 0.4
        %v1665 = vmul.f32 %v1560, 0.4
        %v1666 = vmul.f32 %v1562, 0.4
        %v1667 = vmul.f32 %v1564, 0.4
        %v1668 = vmul.f32 %v1566, 0.4
        %v1669 = vmul.f32 %v1568, 0.4
        %v1670 = vmul.f32 %v1570, 0.4
        %v1671 = vmul.f32 %v1572, 0.4
        %v1672 = vmul.f32 %v1574, 0.4
        %v1673 = vmul.f32 %v1576, 0.4
        %v1674 = vmul.f32 %v1578, 0.4
        %v1675 = vmul.f32 %v1580, 0.4
        %v1676 = vmul.f32 %v1582, 0.4
        %v1677 = vmul.f32 %v1584, 0.4
        %v1678 = vmul.f32 %v1586, 0.4
        %v1679 = vmul.f32 %v1588, 0.4
        %v1680 = vmul.f32 %v1590, 0.4
        %v1681 = vmul.f32 %v1592, 0.4
        %v1682 = vmul.f32 %v1594, 0.4
        %v1683 = vmul.f32 %v1596, 0.4
        %v1684 = vmul.f32 %v1598, 0.4
        %v1685 = vmul.f32 %v1600, 0.4
        %v1686 = vmul.f32 %v1602, 0.4
        %v1687 = vmul.f32 %v1604, 0.4
        %v1688 = vmul.f32 %v1606, 0.4
        %v1689 = vmul.f32 %v1608, 0.4
        %v1690 = vmul.f32 %v1610, 0.4
        %v1691 = vmul.f32 %v1612, 0.4
        %v1692 = vmul.f32 %v1614, 0.4
        %v1693 = vmul.f32 %v1616, 0.4
        %v1694 = vmul.f32 %v1618, 0.4
        %v1695 = vmul.f32 %v1620, 0.4
        %v1696 = vmul.f32 %v1622, 0.4
        %v1697 = vmul.f32 %v1624, 0.4
        %v1698 = vmul.f32 %v1626, 0.4
        %v1699 = vmul.f32 %v1628, 0.4
        %v1700 = vmul.f32 %v1630, 0.4
        %v1701 = vmul.f32 %v1632, 0.4
        %v1702 = vmul.f32 %v1634, 0.4
        %v1703 = vmul.f32 %v1636, 0.4
        %v1704 = vmul.f32 %v1638, 0.4
        %v1705 = vmul.f32 %v1640, 0.4
        %v1706 = vmul.f32 %v1642, 0.4
        %v1707 = vrcp.pop %v1643
        %v1708 = vmul.f32 1.0, %v1707
        %v1709 = vrcp.pop %v1644
        %v1710 = vmul.f32 1.0, %v1709
        %v1711 = vrcp.pop %v1645
        %v1712 = vmul.f32 1.0, %v1711
        %v1713 = vrcp.pop %v1646
        %v1714 = vmul.f32 1.0, %v1713
        %v1715 = vrcp.pop %v1647
        %v1716 = vmul.f32 1.0, %v1715
        %v1717 = vrcp.pop %v1648
        %v1718 = vmul.f32 1.0, %v1717
        %v1719 = vrcp.pop %v1649
        %v1720 = vmul.f32 1.0, %v1719
        %v1721 = vrcp.pop %v1650
        %v1722 = vmul.f32 1.0, %v1721
        %v1723 = vrcp.pop %v1651
        %v1724 = vmul.f32 1.0, %v1723
        %v1725 = vrcp.pop %v1652
        %v1726 = vmul.f32 1.0, %v1725
        %v1727 = vrcp.pop %v1653
        %v1728 = vmul.f32 1.0, %v1727
        %v1729 = vrcp.pop %v1654
        %v1730 = vmul.f32 1.0, %v1729
        %v1731 = vrcp.pop %v1655
        %v1732 = vmul.f32 1.0, %v1731
        %v1733 = vrcp.pop %v1656
        %v1734 = vmul.f32 1.0, %v1733
        %v1735 = vrcp.pop %v1657
        %v1736 = vmul.f32 1.0, %v1735
        %v1737 = vrcp.pop %v1658
        %v1738 = vmul.f32 1.0, %v1737
        %v1739 = vrcp.pop %v1659
        %v1740 = vmul.f32 1.0, %v1739
        %v1741 = vrcp.pop %v1660
        %v1742 = vmul.f32 1.0, %v1741
        %v1743 = vrcp.pop %v1661
        %v1744 = vmul.f32 1.0, %v1743
        %v1745 = vrcp.pop %v1662
        %v1746 = vmul.f32 1.0, %v1745
        %v1747 = vrcp.pop %v1663
        %v1748 = vmul.f32 1.0, %v1747
        %v1749 = vrcp.pop %v1664
        %v1750 = vmul.f32 1.0, %v1749
        %v1751 = vrcp.pop %v1665
        %v1752 = vmul.f32 1.0, %v1751
        %v1753 = vrcp.pop %v1666
        %v1754 = vmul.f32 1.0, %v1753
        %v1755 = vrcp.pop %v1667
        %v1756 = vmul.f32 1.0, %v1755
        %v1757 = vrcp.pop %v1668
        %v1758 = vmul.f32 1.0, %v1757
        %v1759 = vrcp.pop %v1669
        %v1760 = vmul.f32 1.0, %v1759
        %v1761 = vrcp.pop %v1670
        %v1762 = vmul.f32 1.0, %v1761
        %v1763 = vrcp.pop %v1671
        %v1764 = vmul.f32 1.0, %v1763
        %v1765 = vrcp.pop %v1672
        %v1766 = vmul.f32 1.0, %v1765
        %v1767 = vrcp.pop %v1673
        %v1768 = vmul.f32 1.0, %v1767
        %v1769 = vrcp.pop %v1674
        %v1770 = vmul.f32 1.0, %v1769
        %v1771 = vrcp.pop %v1675
        %v1772 = vmul.f32 1.0, %v1771
        %v1773 = vrcp.pop %v1676
        %v1774 = vmul.f32 1.0, %v1773
        %v1775 = vrcp.pop %v1677
        %v1776 = vmul.f32 1.0, %v1775
        %v1777 = vrcp.pop %v1678
        %v1778 = vmul.f32 1.0, %v1777
        %v1779 = vrcp.pop %v1679
        %v1780 = vmul.f32 1.0, %v1779
        %v1781 = vrcp.pop %v1680
        %v1782 = vmul.f32 1.0, %v1781
        %v1783 = vrcp.pop %v1681
        %v1784 = vmul.f32 1.0, %v1783
        %v1785 = vrcp.pop %v1682
        %v1786 = vmul.f32 1.0, %v1785
        %v1787 = vrcp.pop %v1683
        %v1788 = vmul.f32 1.0, %v1787
        %v1789 = vrcp.pop %v1684
        %v1790 = vmul.f32 1.0, %v1789
        %v1791 = vrcp.pop %v1685
        %v1792 = vmul.f32 1.0, %v1791
        %v1793 = vrcp.pop %v1686
        %v1794 = vmul.f32 1.0, %v1793
        %v1795 = vrcp.pop %v1687
        %v1796 = vmul.f32 1.0, %v1795
        %v1797 = vrcp.pop %v1688
        %v1798 = vmul.f32 1.0, %v1797
        %v1799 = vrcp.pop %v1689
        %v1800 = vmul.f32 1.0, %v1799
        %v1801 = vrcp.pop %v1690
        %v1802 = vmul.f32 1.0, %v1801
        %v1803 = vrcp.pop %v1691
        %v1804 = vmul.f32 1.0, %v1803
        %v1805 = vrcp.pop %v1692
        %v1806 = vmul.f32 1.0, %v1805
        %v1807 = vrcp.pop %v1693
        %v1808 = vmul.f32 1.0, %v1807
        %v1809 = vrcp.pop %v1694
        %v1810 = vmul.f32 1.0, %v1809
        %v1811 = vrcp.pop %v1695
        %v1812 = vmul.f32 1.0, %v1811
        %v1813 = vrcp.pop %v1696
        %v1814 = vmul.f32 1.0, %v1813
        %v1815 = vrcp.pop %v1697
        %v1816 = vmul.f32 1.0, %v1815
        %v1817 = vrcp.pop %v1698
        %v1818 = vmul.f32 1.0, %v1817
        %v1819 = vrcp.pop %v1699
        %v1820 = vmul.f32 1.0, %v1819
        %v1821 = vrcp.pop %v1700
        %v1822 = vmul.f32 1.0, %v1821
        %v1823 = vrcp.pop %v1701
        %v1824 = vmul.f32 1.0, %v1823
        %v1825 = vrcp.pop %v1702
        %v1826 = vmul.f32 1.0, %v1825
        %v1827 = vrcp.pop %v1703
        %v1828 = vmul.f32 1.0, %v1827
        %v1829 = vrcp.pop %v1704
        %v1830 = vmul.f32 1.0, %v1829
        %v1831 = vrcp.pop %v1705
        %v1832 = vmul.f32 1.0, %v1831
        %v1833 = vrcp.pop %v1706
        %v1834 = vmul.f32 1.0, %v1833
        %s1835 = smul.u32 %s31, 2
        %s1836 = sadd.s32 %s1835, %s32
        %s1837 = smul.u32 %s1836, 4
        %v1838 = vlaneseq
        %v1839 = vshrl.u32 %v1838, 7
        %v1840 = vadd.s32 %v1839, 8
        %v1841 = vadd.s32 %v1839, 16
        %v1842 = vadd.s32 %v1839, 24
        %v1843 = vadd.s32 %v1839, 32
        %v1844 = vadd.s32 %v1839, 40
        %v1845 = vadd.s32 %v1839, 48
        %v1846 = vadd.s32 %v1839, 56
        %v1847 = vadd.s32 %v1839, 64
        %v1848 = vadd.s32 %v1839, 72
        %v1849 = vadd.s32 %v1839, 80
        %v1850 = vadd.s32 %v1839, 88
        %v1851 = vadd.s32 %v1839, 96
        %v1852 = vadd.s32 %v1839, 104
        %v1853 = vadd.s32 %v1839, 112
        %v1854 = vadd.s32 %v1839, 120
        %v1855 = vlaneseq
        %v1856 = vand.u32 %v1855, 127
        %v1857 = vstv %s1837
        %v1858 = vadd.s32 %v1857, 1
        %v1859 = vadd.s32 %v1857, 2
        %v1860 = vadd.s32 %v1857, 3
        %s1861 = sld [smem:[#allocation3]]
        %v1862 = vmul.u32 %v1839, 2654435761
        %v1863 = vmul.u32 %v1840, 2654435761
        %v1864 = vmul.u32 %v1841, 2654435761
        %v1865 = vmul.u32 %v1842, 2654435761
        %v1866 = vmul.u32 %v1843, 2654435761
        %v1867 = vmul.u32 %v1844, 2654435761
        %v1868 = vmul.u32 %v1845, 2654435761
        %v1869 = vmul.u32 %v1846, 2654435761
        %v1870 = vmul.u32 %v1847, 2654435761
        %v1871 = vmul.u32 %v1848, 2654435761
        %v1872 = vmul.u32 %v1849, 2654435761
        %v1873 = vmul.u32 %v1850, 2654435761
        %v1874 = vmul.u32 %v1851, 2654435761
        %v1875 = vmul.u32 %v1852, 2654435761
        %v1876 = vmul.u32 %v1853, 2654435761
        %v1877 = vmul.u32 %v1854, 2654435761
        %v1878 = vadd.s32 %v1856, %v1862
        %v1879 = vadd.s32 %v1856, %v1863
        %v1880 = vadd.s32 %v1856, %v1864
        %v1881 = vadd.s32 %v1856, %v1865
        %v1882 = vadd.s32 %v1856, %v1866
        %v1883 = vadd.s32 %v1856, %v1867
        %v1884 = vadd.s32 %v1856, %v1868
        %v1885 = vadd.s32 %v1856, %v1869
        %v1886 = vadd.s32 %v1856, %v1870
        %v1887 = vadd.s32 %v1856, %v1871
        %v1888 = vadd.s32 %v1856, %v1872
        %v1889 = vadd.s32 %v1856, %v1873
        %v1890 = vadd.s32 %v1856, %v1874
        %v1891 = vadd.s32 %v1856, %v1875
        %v1892 = vadd.s32 %v1856, %v1876
        %v1893 = vadd.s32 %v1856, %v1877
        %v1894 = vmul.u32 %v1857, 2246822519
        %v1895 = vmul.u32 %v1858, 2246822519
        %v1896 = vmul.u32 %v1859, 2246822519
        %v1897 = vmul.u32 %v1860, 2246822519
        %v1898 = vadd.s32 %v1878, %v1894
        %v1899 = vadd.s32 %v1879, %v1894
        %v1900 = vadd.s32 %v1880, %v1894
        %v1901 = vadd.s32 %v1881, %v1894
        %v1902 = vadd.s32 %v1882, %v1894
        %v1903 = vadd.s32 %v1883, %v1894
        %v1904 = vadd.s32 %v1884, %v1894
        %v1905 = vadd.s32 %v1885, %v1894
        %v1906 = vadd.s32 %v1886, %v1894
        %v1907 = vadd.s32 %v1887, %v1894
        %v1908 = vadd.s32 %v1888, %v1894
        %v1909 = vadd.s32 %v1889, %v1894
        %v1910 = vadd.s32 %v1890, %v1894
        %v1911 = vadd.s32 %v1891, %v1894
        %v1912 = vadd.s32 %v1892, %v1894
        %v1913 = vadd.s32 %v1893, %v1894
        %v1914 = vadd.s32 %v1878, %v1895
        %v1915 = vadd.s32 %v1879, %v1895
        %v1916 = vadd.s32 %v1880, %v1895
        %v1917 = vadd.s32 %v1881, %v1895
        %v1918 = vadd.s32 %v1882, %v1895
        %v1919 = vadd.s32 %v1883, %v1895
        %v1920 = vadd.s32 %v1884, %v1895
        %v1921 = vadd.s32 %v1885, %v1895
        %v1922 = vadd.s32 %v1886, %v1895
        %v1923 = vadd.s32 %v1887, %v1895
        %v1924 = vadd.s32 %v1888, %v1895
        %v1925 = vadd.s32 %v1889, %v1895
        %v1926 = vadd.s32 %v1890, %v1895
        %v1927 = vadd.s32 %v1891, %v1895
        %v1928 = vadd.s32 %v1892, %v1895
        %v1929 = vadd.s32 %v1893, %v1895
        %v1930 = vadd.s32 %v1878, %v1896
        %v1931 = vadd.s32 %v1879, %v1896
        %v1932 = vadd.s32 %v1880, %v1896
        %v1933 = vadd.s32 %v1881, %v1896
        %v1934 = vadd.s32 %v1882, %v1896
        %v1935 = vadd.s32 %v1883, %v1896
        %v1936 = vadd.s32 %v1884, %v1896
        %v1937 = vadd.s32 %v1885, %v1896
        %v1938 = vadd.s32 %v1886, %v1896
        %v1939 = vadd.s32 %v1887, %v1896
        %v1940 = vadd.s32 %v1888, %v1896
        %v1941 = vadd.s32 %v1889, %v1896
        %v1942 = vadd.s32 %v1890, %v1896
        %v1943 = vadd.s32 %v1891, %v1896
        %v1944 = vadd.s32 %v1892, %v1896
        %v1945 = vadd.s32 %v1893, %v1896
        %v1946 = vadd.s32 %v1878, %v1897
        %v1947 = vadd.s32 %v1879, %v1897
        %v1948 = vadd.s32 %v1880, %v1897
        %v1949 = vadd.s32 %v1881, %v1897
        %v1950 = vadd.s32 %v1882, %v1897
        %v1951 = vadd.s32 %v1883, %v1897
        %v1952 = vadd.s32 %v1884, %v1897
        %v1953 = vadd.s32 %v1885, %v1897
        %v1954 = vadd.s32 %v1886, %v1897
        %v1955 = vadd.s32 %v1887, %v1897
        %v1956 = vadd.s32 %v1888, %v1897
        %v1957 = vadd.s32 %v1889, %v1897
        %v1958 = vadd.s32 %v1890, %v1897
        %v1959 = vadd.s32 %v1891, %v1897
        %v1960 = vadd.s32 %v1892, %v1897
        %v1961 = vadd.s32 %v1893, %v1897
        %s1962 = smul.u32 %s1861, 3266489917
        %v1963 = vstv %s1962
        %v1964 = vadd.s32 %v1898, %v1963
        %v1965 = vadd.s32 %v1899, %v1963
        %v1966 = vadd.s32 %v1900, %v1963
        %v1967 = vadd.s32 %v1901, %v1963
        %v1968 = vadd.s32 %v1902, %v1963
        %v1969 = vadd.s32 %v1903, %v1963
        %v1970 = vadd.s32 %v1904, %v1963
        %v1971 = vadd.s32 %v1905, %v1963
        %v1972 = vadd.s32 %v1906, %v1963
        %v1973 = vadd.s32 %v1907, %v1963
        %v1974 = vadd.s32 %v1908, %v1963
        %v1975 = vadd.s32 %v1909, %v1963
        %v1976 = vadd.s32 %v1910, %v1963
        %v1977 = vadd.s32 %v1911, %v1963
        %v1978 = vadd.s32 %v1912, %v1963
        %v1979 = vadd.s32 %v1913, %v1963
        %v1980 = vadd.s32 %v1914, %v1963
        %v1981 = vadd.s32 %v1915, %v1963
        %v1982 = vadd.s32 %v1916, %v1963
        %v1983 = vadd.s32 %v1917, %v1963
        %v1984 = vadd.s32 %v1918, %v1963
        %v1985 = vadd.s32 %v1919, %v1963
        %v1986 = vadd.s32 %v1920, %v1963
        %v1987 = vadd.s32 %v1921, %v1963
        %v1988 = vadd.s32 %v1922, %v1963
        %v1989 = vadd.s32 %v1923, %v1963
        %v1990 = vadd.s32 %v1924, %v1963
        %v1991 = vadd.s32 %v1925, %v1963
        %v1992 = vadd.s32 %v1926, %v1963
        %v1993 = vadd.s32 %v1927, %v1963
        %v1994 = vadd.s32 %v1928, %v1963
        %v1995 = vadd.s32 %v1929, %v1963
        %v1996 = vadd.s32 %v1930, %v1963
        %v1997 = vadd.s32 %v1931, %v1963
        %v1998 = vadd.s32 %v1932, %v1963
        %v1999 = vadd.s32 %v1933, %v1963
        %v2000 = vadd.s32 %v1934, %v1963
        %v2001 = vadd.s32 %v1935, %v1963
        %v2002 = vadd.s32 %v1936, %v1963
        %v2003 = vadd.s32 %v1937, %v1963
        %v2004 = vadd.s32 %v1938, %v1963
        %v2005 = vadd.s32 %v1939, %v1963
        %v2006 = vadd.s32 %v1940, %v1963
        %v2007 = vadd.s32 %v1941, %v1963
        %v2008 = vadd.s32 %v1942, %v1963
        %v2009 = vadd.s32 %v1943, %v1963
        %v2010 = vadd.s32 %v1944, %v1963
        %v2011 = vadd.s32 %v1945, %v1963
        %v2012 = vadd.s32 %v1946, %v1963
        %v2013 = vadd.s32 %v1947, %v1963
        %v2014 = vadd.s32 %v1948, %v1963
        %v2015 = vadd.s32 %v1949, %v1963
        %v2016 = vadd.s32 %v1950, %v1963
        %v2017 = vadd.s32 %v1951, %v1963
        %v2018 = vadd.s32 %v1952, %v1963
        %v2019 = vadd.s32 %v1953, %v1963
        %v2020 = vadd.s32 %v1954, %v1963
        %v2021 = vadd.s32 %v1955, %v1963
        %v2022 = vadd.s32 %v1956, %v1963
        %v2023 = vadd.s32 %v1957, %v1963
        %v2024 = vadd.s32 %v1958, %v1963
        %v2025 = vadd.s32 %v1959, %v1963
        %v2026 = vadd.s32 %v1960, %v1963
        %v2027 = vadd.s32 %v1961, %v1963
        %v2028 = vshra.s32 %v1964, 16
        %v2029 = vshra.s32 %v1965, 16
        %v2030 = vshra.s32 %v1966, 16
        %v2031 = vshra.s32 %v1967, 16
        %v2032 = vshra.s32 %v1968, 16
        %v2033 = vshra.s32 %v1969, 16
        %v2034 = vshra.s32 %v1970, 16
        %v2035 = vshra.s32 %v1971, 16
        %v2036 = vshra.s32 %v1972, 16
        %v2037 = vshra.s32 %v1973, 16
        %v2038 = vshra.s32 %v1974, 16
        %v2039 = vshra.s32 %v1975, 16
        %v2040 = vshra.s32 %v1976, 16
        %v2041 = vshra.s32 %v1977, 16
        %v2042 = vshra.s32 %v1978, 16
        %v2043 = vshra.s32 %v1979, 16
        %v2044 = vshra.s32 %v1980, 16
        %v2045 = vshra.s32 %v1981, 16
        %v2046 = vshra.s32 %v1982, 16
        %v2047 = vshra.s32 %v1983, 16
        %v2048 = vshra.s32 %v1984, 16
        %v2049 = vshra.s32 %v1985, 16
        %v2050 = vshra.s32 %v1986, 16
        %v2051 = vshra.s32 %v1987, 16
        %v2052 = vshra.s32 %v1988, 16
        %v2053 = vshra.s32 %v1989, 16
        %v2054 = vshra.s32 %v1990, 16
        %v2055 = vshra.s32 %v1991, 16
        %v2056 = vshra.s32 %v1992, 16
        %v2057 = vshra.s32 %v1993, 16
        %v2058 = vshra.s32 %v1994, 16
        %v2059 = vshra.s32 %v1995, 16
        %v2060 = vshra.s32 %v1996, 16
        %v2061 = vshra.s32 %v1997, 16
        %v2062 = vshra.s32 %v1998, 16
        %v2063 = vshra.s32 %v1999, 16
        %v2064 = vshra.s32 %v2000, 16
        %v2065 = vshra.s32 %v2001, 16
        %v2066 = vshra.s32 %v2002, 16
        %v2067 = vshra.s32 %v2003, 16
        %v2068 = vshra.s32 %v2004, 16
        %v2069 = vshra.s32 %v2005, 16
        %v2070 = vshra.s32 %v2006, 16
        %v2071 = vshra.s32 %v2007, 16
        %v2072 = vshra.s32 %v2008, 16
        %v2073 = vshra.s32 %v2009, 16
        %v2074 = vshra.s32 %v2010, 16
        %v2075 = vshra.s32 %v2011, 16
        %v2076 = vshra.s32 %v2012, 16
        %v2077 = vshra.s32 %v2013, 16
        %v2078 = vshra.s32 %v2014, 16
        %v2079 = vshra.s32 %v2015, 16
        %v2080 = vshra.s32 %v2016, 16
        %v2081 = vshra.s32 %v2017, 16
        %v2082 = vshra.s32 %v2018, 16
        %v2083 = vshra.s32 %v2019, 16
        %v2084 = vshra.s32 %v2020, 16
        %v2085 = vshra.s32 %v2021, 16
        %v2086 = vshra.s32 %v2022, 16
        %v2087 = vshra.s32 %v2023, 16
        %v2088 = vshra.s32 %v2024, 16
        %v2089 = vshra.s32 %v2025, 16
        %v2090 = vshra.s32 %v2026, 16
        %v2091 = vshra.s32 %v2027, 16
        %v2092 = vand.u32 %v2028, 65535
        %v2093 = vand.u32 %v2029, 65535
        %v2094 = vand.u32 %v2030, 65535
        %v2095 = vand.u32 %v2031, 65535
        %v2096 = vand.u32 %v2032, 65535
        %v2097 = vand.u32 %v2033, 65535
        %v2098 = vand.u32 %v2034, 65535
        %v2099 = vand.u32 %v2035, 65535
        %v2100 = vand.u32 %v2036, 65535
        %v2101 = vand.u32 %v2037, 65535
        %v2102 = vand.u32 %v2038, 65535
        %v2103 = vand.u32 %v2039, 65535
        %v2104 = vand.u32 %v2040, 65535
        %v2105 = vand.u32 %v2041, 65535
        %v2106 = vand.u32 %v2042, 65535
        %v2107 = vand.u32 %v2043, 65535
        %v2108 = vand.u32 %v2044, 65535
        %v2109 = vand.u32 %v2045, 65535
        %v2110 = vand.u32 %v2046, 65535
        %v2111 = vand.u32 %v2047, 65535
        %v2112 = vand.u32 %v2048, 65535
        %v2113 = vand.u32 %v2049, 65535
        %v2114 = vand.u32 %v2050, 65535
        %v2115 = vand.u32 %v2051, 65535
        %v2116 = vand.u32 %v2052, 65535
        %v2117 = vand.u32 %v2053, 65535
        %v2118 = vand.u32 %v2054, 65535
        %v2119 = vand.u32 %v2055, 65535
        %v2120 = vand.u32 %v2056, 65535
        %v2121 = vand.u32 %v2057, 65535
        %v2122 = vand.u32 %v2058, 65535
        %v2123 = vand.u32 %v2059, 65535
        %v2124 = vand.u32 %v2060, 65535
        %v2125 = vand.u32 %v2061, 65535
        %v2126 = vand.u32 %v2062, 65535
        %v2127 = vand.u32 %v2063, 65535
        %v2128 = vand.u32 %v2064, 65535
        %v2129 = vand.u32 %v2065, 65535
        %v2130 = vand.u32 %v2066, 65535
        %v2131 = vand.u32 %v2067, 65535
        %v2132 = vand.u32 %v2068, 65535
        %v2133 = vand.u32 %v2069, 65535
        %v2134 = vand.u32 %v2070, 65535
        %v2135 = vand.u32 %v2071, 65535
        %v2136 = vand.u32 %v2072, 65535
        %v2137 = vand.u32 %v2073, 65535
        %v2138 = vand.u32 %v2074, 65535
        %v2139 = vand.u32 %v2075, 65535
        %v2140 = vand.u32 %v2076, 65535
        %v2141 = vand.u32 %v2077, 65535
        %v2142 = vand.u32 %v2078, 65535
        %v2143 = vand.u32 %v2079, 65535
        %v2144 = vand.u32 %v2080, 65535
        %v2145 = vand.u32 %v2081, 65535
        %v2146 = vand.u32 %v2082, 65535
        %v2147 = vand.u32 %v2083, 65535
        %v2148 = vand.u32 %v2084, 65535
        %v2149 = vand.u32 %v2085, 65535
        %v2150 = vand.u32 %v2086, 65535
        %v2151 = vand.u32 %v2087, 65535
        %v2152 = vand.u32 %v2088, 65535
        %v2153 = vand.u32 %v2089, 65535
        %v2154 = vand.u32 %v2090, 65535
        %v2155 = vand.u32 %v2091, 65535
        %v2156 = vxor.u32 %v1964, %v2092
        %v2157 = vxor.u32 %v1965, %v2093
        %v2158 = vxor.u32 %v1966, %v2094
        %v2159 = vxor.u32 %v1967, %v2095
        %v2160 = vxor.u32 %v1968, %v2096
        %v2161 = vxor.u32 %v1969, %v2097
        %v2162 = vxor.u32 %v1970, %v2098
        %v2163 = vxor.u32 %v1971, %v2099
        %v2164 = vxor.u32 %v1972, %v2100
        %v2165 = vxor.u32 %v1973, %v2101
        %v2166 = vxor.u32 %v1974, %v2102
        %v2167 = vxor.u32 %v1975, %v2103
        %v2168 = vxor.u32 %v1976, %v2104
        %v2169 = vxor.u32 %v1977, %v2105
        %v2170 = vxor.u32 %v1978, %v2106
        %v2171 = vxor.u32 %v1979, %v2107
        %v2172 = vxor.u32 %v1980, %v2108
        %v2173 = vxor.u32 %v1981, %v2109
        %v2174 = vxor.u32 %v1982, %v2110
        %v2175 = vxor.u32 %v1983, %v2111
        %v2176 = vxor.u32 %v1984, %v2112
        %v2177 = vxor.u32 %v1985, %v2113
        %v2178 = vxor.u32 %v1986, %v2114
        %v2179 = vxor.u32 %v1987, %v2115
        %v2180 = vxor.u32 %v1988, %v2116
        %v2181 = vxor.u32 %v1989, %v2117
        %v2182 = vxor.u32 %v1990, %v2118
        %v2183 = vxor.u32 %v1991, %v2119
        %v2184 = vxor.u32 %v1992, %v2120
        %v2185 = vxor.u32 %v1993, %v2121
        %v2186 = vxor.u32 %v1994, %v2122
        %v2187 = vxor.u32 %v1995, %v2123
        %v2188 = vxor.u32 %v1996, %v2124
        %v2189 = vxor.u32 %v1997, %v2125
        %v2190 = vxor.u32 %v1998, %v2126
        %v2191 = vxor.u32 %v1999, %v2127
        %v2192 = vxor.u32 %v2000, %v2128
        %v2193 = vxor.u32 %v2001, %v2129
        %v2194 = vxor.u32 %v2002, %v2130
        %v2195 = vxor.u32 %v2003, %v2131
        %v2196 = vxor.u32 %v2004, %v2132
        %v2197 = vxor.u32 %v2005, %v2133
        %v2198 = vxor.u32 %v2006, %v2134
        %v2199 = vxor.u32 %v2007, %v2135
        %v2200 = vxor.u32 %v2008, %v2136
        %v2201 = vxor.u32 %v2009, %v2137
        %v2202 = vxor.u32 %v2010, %v2138
        %v2203 = vxor.u32 %v2011, %v2139
        %v2204 = vxor.u32 %v2012, %v2140
        %v2205 = vxor.u32 %v2013, %v2141
        %v2206 = vxor.u32 %v2014, %v2142
        %v2207 = vxor.u32 %v2015, %v2143
        %v2208 = vxor.u32 %v2016, %v2144
        %v2209 = vxor.u32 %v2017, %v2145
        %v2210 = vxor.u32 %v2018, %v2146
        %v2211 = vxor.u32 %v2019, %v2147
        %v2212 = vxor.u32 %v2020, %v2148
        %v2213 = vxor.u32 %v2021, %v2149
        %v2214 = vxor.u32 %v2022, %v2150
        %v2215 = vxor.u32 %v2023, %v2151
        %v2216 = vxor.u32 %v2024, %v2152
        %v2217 = vxor.u32 %v2025, %v2153
        %v2218 = vxor.u32 %v2026, %v2154
        %v2219 = vxor.u32 %v2027, %v2155
        %v2220 = vmul.u32 %v2156, 2246822507
        %v2221 = vmul.u32 %v2157, 2246822507
        %v2222 = vmul.u32 %v2158, 2246822507
        %v2223 = vmul.u32 %v2159, 2246822507
        %v2224 = vmul.u32 %v2160, 2246822507
        %v2225 = vmul.u32 %v2161, 2246822507
        %v2226 = vmul.u32 %v2162, 2246822507
        %v2227 = vmul.u32 %v2163, 2246822507
        %v2228 = vmul.u32 %v2164, 2246822507
        %v2229 = vmul.u32 %v2165, 2246822507
        %v2230 = vmul.u32 %v2166, 2246822507
        %v2231 = vmul.u32 %v2167, 2246822507
        %v2232 = vmul.u32 %v2168, 2246822507
        %v2233 = vmul.u32 %v2169, 2246822507
        %v2234 = vmul.u32 %v2170, 2246822507
        %v2235 = vmul.u32 %v2171, 2246822507
        %v2236 = vmul.u32 %v2172, 2246822507
        %v2237 = vmul.u32 %v2173, 2246822507
        %v2238 = vmul.u32 %v2174, 2246822507
        %v2239 = vmul.u32 %v2175, 2246822507
        %v2240 = vmul.u32 %v2176, 2246822507
        %v2241 = vmul.u32 %v2177, 2246822507
        %v2242 = vmul.u32 %v2178, 2246822507
        %v2243 = vmul.u32 %v2179, 2246822507
        %v2244 = vmul.u32 %v2180, 2246822507
        %v2245 = vmul.u32 %v2181, 2246822507
        %v2246 = vmul.u32 %v2182, 2246822507
        %v2247 = vmul.u32 %v2183, 2246822507
        %v2248 = vmul.u32 %v2184, 2246822507
        %v2249 = vmul.u32 %v2185, 2246822507
        %v2250 = vmul.u32 %v2186, 2246822507
        %v2251 = vmul.u32 %v2187, 2246822507
        %v2252 = vmul.u32 %v2188, 2246822507
        %v2253 = vmul.u32 %v2189, 2246822507
        %v2254 = vmul.u32 %v2190, 2246822507
        %v2255 = vmul.u32 %v2191, 2246822507
        %v2256 = vmul.u32 %v2192, 2246822507
        %v2257 = vmul.u32 %v2193, 2246822507
        %v2258 = vmul.u32 %v2194, 2246822507
        %v2259 = vmul.u32 %v2195, 2246822507
        %v2260 = vmul.u32 %v2196, 2246822507
        %v2261 = vmul.u32 %v2197, 2246822507
        %v2262 = vmul.u32 %v2198, 2246822507
        %v2263 = vmul.u32 %v2199, 2246822507
        %v2264 = vmul.u32 %v2200, 2246822507
        %v2265 = vmul.u32 %v2201, 2246822507
        %v2266 = vmul.u32 %v2202, 2246822507
        %v2267 = vmul.u32 %v2203, 2246822507
        %v2268 = vmul.u32 %v2204, 2246822507
        %v2269 = vmul.u32 %v2205, 2246822507
        %v2270 = vmul.u32 %v2206, 2246822507
        %v2271 = vmul.u32 %v2207, 2246822507
        %v2272 = vmul.u32 %v2208, 2246822507
        %v2273 = vmul.u32 %v2209, 2246822507
        %v2274 = vmul.u32 %v2210, 2246822507
        %v2275 = vmul.u32 %v2211, 2246822507
        %v2276 = vmul.u32 %v2212, 2246822507
        %v2277 = vmul.u32 %v2213, 2246822507
        %v2278 = vmul.u32 %v2214, 2246822507
        %v2279 = vmul.u32 %v2215, 2246822507
        %v2280 = vmul.u32 %v2216, 2246822507
        %v2281 = vmul.u32 %v2217, 2246822507
        %v2282 = vmul.u32 %v2218, 2246822507
        %v2283 = vmul.u32 %v2219, 2246822507
        %v2284 = vshra.s32 %v2220, 16
        %v2285 = vshra.s32 %v2221, 16
        %v2286 = vshra.s32 %v2222, 16
        %v2287 = vshra.s32 %v2223, 16
        %v2288 = vshra.s32 %v2224, 16
        %v2289 = vshra.s32 %v2225, 16
        %v2290 = vshra.s32 %v2226, 16
        %v2291 = vshra.s32 %v2227, 16
        %v2292 = vshra.s32 %v2228, 16
        %v2293 = vshra.s32 %v2229, 16
        %v2294 = vshra.s32 %v2230, 16
        %v2295 = vshra.s32 %v2231, 16
        %v2296 = vshra.s32 %v2232, 16
        %v2297 = vshra.s32 %v2233, 16
        %v2298 = vshra.s32 %v2234, 16
        %v2299 = vshra.s32 %v2235, 16
        %v2300 = vshra.s32 %v2236, 16
        %v2301 = vshra.s32 %v2237, 16
        %v2302 = vshra.s32 %v2238, 16
        %v2303 = vshra.s32 %v2239, 16
        %v2304 = vshra.s32 %v2240, 16
        %v2305 = vshra.s32 %v2241, 16
        %v2306 = vshra.s32 %v2242, 16
        %v2307 = vshra.s32 %v2243, 16
        %v2308 = vshra.s32 %v2244, 16
        %v2309 = vshra.s32 %v2245, 16
        %v2310 = vshra.s32 %v2246, 16
        %v2311 = vshra.s32 %v2247, 16
        %v2312 = vshra.s32 %v2248, 16
        %v2313 = vshra.s32 %v2249, 16
        %v2314 = vshra.s32 %v2250, 16
        %v2315 = vshra.s32 %v2251, 16
        %v2316 = vshra.s32 %v2252, 16
        %v2317 = vshra.s32 %v2253, 16
        %v2318 = vshra.s32 %v2254, 16
        %v2319 = vshra.s32 %v2255, 16
        %v2320 = vshra.s32 %v2256, 16
        %v2321 = vshra.s32 %v2257, 16
        %v2322 = vshra.s32 %v2258, 16
        %v2323 = vshra.s32 %v2259, 16
        %v2324 = vshra.s32 %v2260, 16
        %v2325 = vshra.s32 %v2261, 16
        %v2326 = vshra.s32 %v2262, 16
        %v2327 = vshra.s32 %v2263, 16
        %v2328 = vshra.s32 %v2264, 16
        %v2329 = vshra.s32 %v2265, 16
        %v2330 = vshra.s32 %v2266, 16
        %v2331 = vshra.s32 %v2267, 16
        %v2332 = vshra.s32 %v2268, 16
        %v2333 = vshra.s32 %v2269, 16
        %v2334 = vshra.s32 %v2270, 16
        %v2335 = vshra.s32 %v2271, 16
        %v2336 = vshra.s32 %v2272, 16
        %v2337 = vshra.s32 %v2273, 16
        %v2338 = vshra.s32 %v2274, 16
        %v2339 = vshra.s32 %v2275, 16
        %v2340 = vshra.s32 %v2276, 16
        %v2341 = vshra.s32 %v2277, 16
        %v2342 = vshra.s32 %v2278, 16
        %v2343 = vshra.s32 %v2279, 16
        %v2344 = vshra.s32 %v2280, 16
        %v2345 = vshra.s32 %v2281, 16
        %v2346 = vshra.s32 %v2282, 16
        %v2347 = vshra.s32 %v2283, 16
        %v2348 = vand.u32 %v2284, 65535
        %v2349 = vand.u32 %v2285, 65535
        %v2350 = vand.u32 %v2286, 65535
        %v2351 = vand.u32 %v2287, 65535
        %v2352 = vand.u32 %v2288, 65535
        %v2353 = vand.u32 %v2289, 65535
        %v2354 = vand.u32 %v2290, 65535
        %v2355 = vand.u32 %v2291, 65535
        %v2356 = vand.u32 %v2292, 65535
        %v2357 = vand.u32 %v2293, 65535
        %v2358 = vand.u32 %v2294, 65535
        %v2359 = vand.u32 %v2295, 65535
        %v2360 = vand.u32 %v2296, 65535
        %v2361 = vand.u32 %v2297, 65535
        %v2362 = vand.u32 %v2298, 65535
        %v2363 = vand.u32 %v2299, 65535
        %v2364 = vand.u32 %v2300, 65535
        %v2365 = vand.u32 %v2301, 65535
        %v2366 = vand.u32 %v2302, 65535
        %v2367 = vand.u32 %v2303, 65535
        %v2368 = vand.u32 %v2304, 65535
        %v2369 = vand.u32 %v2305, 65535
        %v2370 = vand.u32 %v2306, 65535
        %v2371 = vand.u32 %v2307, 65535
        %v2372 = vand.u32 %v2308, 65535
        %v2373 = vand.u32 %v2309, 65535
        %v2374 = vand.u32 %v2310, 65535
        %v2375 = vand.u32 %v2311, 65535
        %v2376 = vand.u32 %v2312, 65535
        %v2377 = vand.u32 %v2313, 65535
        %v2378 = vand.u32 %v2314, 65535
        %v2379 = vand.u32 %v2315, 65535
        %v2380 = vand.u32 %v2316, 65535
        %v2381 = vand.u32 %v2317, 65535
        %v2382 = vand.u32 %v2318, 65535
        %v2383 = vand.u32 %v2319, 65535
        %v2384 = vand.u32 %v2320, 65535
        %v2385 = vand.u32 %v2321, 65535
        %v2386 = vand.u32 %v2322, 65535
        %v2387 = vand.u32 %v2323, 65535
        %v2388 = vand.u32 %v2324, 65535
        %v2389 = vand.u32 %v2325, 65535
        %v2390 = vand.u32 %v2326, 65535
        %v2391 = vand.u32 %v2327, 65535
        %v2392 = vand.u32 %v2328, 65535
        %v2393 = vand.u32 %v2329, 65535
        %v2394 = vand.u32 %v2330, 65535
        %v2395 = vand.u32 %v2331, 65535
        %v2396 = vand.u32 %v2332, 65535
        %v2397 = vand.u32 %v2333, 65535
        %v2398 = vand.u32 %v2334, 65535
        %v2399 = vand.u32 %v2335, 65535
        %v2400 = vand.u32 %v2336, 65535
        %v2401 = vand.u32 %v2337, 65535
        %v2402 = vand.u32 %v2338, 65535
        %v2403 = vand.u32 %v2339, 65535
        %v2404 = vand.u32 %v2340, 65535
        %v2405 = vand.u32 %v2341, 65535
        %v2406 = vand.u32 %v2342, 65535
        %v2407 = vand.u32 %v2343, 65535
        %v2408 = vand.u32 %v2344, 65535
        %v2409 = vand.u32 %v2345, 65535
        %v2410 = vand.u32 %v2346, 65535
        %v2411 = vand.u32 %v2347, 65535
        %v2412 = vxor.u32 %v2220, %v2348
        %v2413 = vxor.u32 %v2221, %v2349
        %v2414 = vxor.u32 %v2222, %v2350
        %v2415 = vxor.u32 %v2223, %v2351
        %v2416 = vxor.u32 %v2224, %v2352
        %v2417 = vxor.u32 %v2225, %v2353
        %v2418 = vxor.u32 %v2226, %v2354
        %v2419 = vxor.u32 %v2227, %v2355
        %v2420 = vxor.u32 %v2228, %v2356
        %v2421 = vxor.u32 %v2229, %v2357
        %v2422 = vxor.u32 %v2230, %v2358
        %v2423 = vxor.u32 %v2231, %v2359
        %v2424 = vxor.u32 %v2232, %v2360
        %v2425 = vxor.u32 %v2233, %v2361
        %v2426 = vxor.u32 %v2234, %v2362
        %v2427 = vxor.u32 %v2235, %v2363
        %v2428 = vxor.u32 %v2236, %v2364
        %v2429 = vxor.u32 %v2237, %v2365
        %v2430 = vxor.u32 %v2238, %v2366
        %v2431 = vxor.u32 %v2239, %v2367
        %v2432 = vxor.u32 %v2240, %v2368
        %v2433 = vxor.u32 %v2241, %v2369
        %v2434 = vxor.u32 %v2242, %v2370
        %v2435 = vxor.u32 %v2243, %v2371
        %v2436 = vxor.u32 %v2244, %v2372
        %v2437 = vxor.u32 %v2245, %v2373
        %v2438 = vxor.u32 %v2246, %v2374
        %v2439 = vxor.u32 %v2247, %v2375
        %v2440 = vxor.u32 %v2248, %v2376
        %v2441 = vxor.u32 %v2249, %v2377
        %v2442 = vxor.u32 %v2250, %v2378
        %v2443 = vxor.u32 %v2251, %v2379
        %v2444 = vxor.u32 %v2252, %v2380
        %v2445 = vxor.u32 %v2253, %v2381
        %v2446 = vxor.u32 %v2254, %v2382
        %v2447 = vxor.u32 %v2255, %v2383
        %v2448 = vxor.u32 %v2256, %v2384
        %v2449 = vxor.u32 %v2257, %v2385
        %v2450 = vxor.u32 %v2258, %v2386
        %v2451 = vxor.u32 %v2259, %v2387
        %v2452 = vxor.u32 %v2260, %v2388
        %v2453 = vxor.u32 %v2261, %v2389
        %v2454 = vxor.u32 %v2262, %v2390
        %v2455 = vxor.u32 %v2263, %v2391
        %v2456 = vxor.u32 %v2264, %v2392
        %v2457 = vxor.u32 %v2265, %v2393
        %v2458 = vxor.u32 %v2266, %v2394
        %v2459 = vxor.u32 %v2267, %v2395
        %v2460 = vxor.u32 %v2268, %v2396
        %v2461 = vxor.u32 %v2269, %v2397
        %v2462 = vxor.u32 %v2270, %v2398
        %v2463 = vxor.u32 %v2271, %v2399
        %v2464 = vxor.u32 %v2272, %v2400
        %v2465 = vxor.u32 %v2273, %v2401
        %v2466 = vxor.u32 %v2274, %v2402
        %v2467 = vxor.u32 %v2275, %v2403
        %v2468 = vxor.u32 %v2276, %v2404
        %v2469 = vxor.u32 %v2277, %v2405
        %v2470 = vxor.u32 %v2278, %v2406
        %v2471 = vxor.u32 %v2279, %v2407
        %v2472 = vxor.u32 %v2280, %v2408
        %v2473 = vxor.u32 %v2281, %v2409
        %v2474 = vxor.u32 %v2282, %v2410
        %v2475 = vxor.u32 %v2283, %v2411
        %v2476 = vmul.u32 %v2412, 3266489909
        %v2477 = vmul.u32 %v2413, 3266489909
        %v2478 = vmul.u32 %v2414, 3266489909
        %v2479 = vmul.u32 %v2415, 3266489909
        %v2480 = vmul.u32 %v2416, 3266489909
        %v2481 = vmul.u32 %v2417, 3266489909
        %v2482 = vmul.u32 %v2418, 3266489909
        %v2483 = vmul.u32 %v2419, 3266489909
        %v2484 = vmul.u32 %v2420, 3266489909
        %v2485 = vmul.u32 %v2421, 3266489909
        %v2486 = vmul.u32 %v2422, 3266489909
        %v2487 = vmul.u32 %v2423, 3266489909
        %v2488 = vmul.u32 %v2424, 3266489909
        %v2489 = vmul.u32 %v2425, 3266489909
        %v2490 = vmul.u32 %v2426, 3266489909
        %v2491 = vmul.u32 %v2427, 3266489909
        %v2492 = vmul.u32 %v2428, 3266489909
        %v2493 = vmul.u32 %v2429, 3266489909
        %v2494 = vmul.u32 %v2430, 3266489909
        %v2495 = vmul.u32 %v2431, 3266489909
        %v2496 = vmul.u32 %v2432, 3266489909
        %v2497 = vmul.u32 %v2433, 3266489909
        %v2498 = vmul.u32 %v2434, 3266489909
        %v2499 = vmul.u32 %v2435, 3266489909
        %v2500 = vmul.u32 %v2436, 3266489909
        %v2501 = vmul.u32 %v2437, 3266489909
        %v2502 = vmul.u32 %v2438, 3266489909
        %v2503 = vmul.u32 %v2439, 3266489909
        %v2504 = vmul.u32 %v2440, 3266489909
        %v2505 = vmul.u32 %v2441, 3266489909
        %v2506 = vmul.u32 %v2442, 3266489909
        %v2507 = vmul.u32 %v2443, 3266489909
        %v2508 = vmul.u32 %v2444, 3266489909
        %v2509 = vmul.u32 %v2445, 3266489909
        %v2510 = vmul.u32 %v2446, 3266489909
        %v2511 = vmul.u32 %v2447, 3266489909
        %v2512 = vmul.u32 %v2448, 3266489909
        %v2513 = vmul.u32 %v2449, 3266489909
        %v2514 = vmul.u32 %v2450, 3266489909
        %v2515 = vmul.u32 %v2451, 3266489909
        %v2516 = vmul.u32 %v2452, 3266489909
        %v2517 = vmul.u32 %v2453, 3266489909
        %v2518 = vmul.u32 %v2454, 3266489909
        %v2519 = vmul.u32 %v2455, 3266489909
        %v2520 = vmul.u32 %v2456, 3266489909
        %v2521 = vmul.u32 %v2457, 3266489909
        %v2522 = vmul.u32 %v2458, 3266489909
        %v2523 = vmul.u32 %v2459, 3266489909
        %v2524 = vmul.u32 %v2460, 3266489909
        %v2525 = vmul.u32 %v2461, 3266489909
        %v2526 = vmul.u32 %v2462, 3266489909
        %v2527 = vmul.u32 %v2463, 3266489909
        %v2528 = vmul.u32 %v2464, 3266489909
        %v2529 = vmul.u32 %v2465, 3266489909
        %v2530 = vmul.u32 %v2466, 3266489909
        %v2531 = vmul.u32 %v2467, 3266489909
        %v2532 = vmul.u32 %v2468, 3266489909
        %v2533 = vmul.u32 %v2469, 3266489909
        %v2534 = vmul.u32 %v2470, 3266489909
        %v2535 = vmul.u32 %v2471, 3266489909
        %v2536 = vmul.u32 %v2472, 3266489909
        %v2537 = vmul.u32 %v2473, 3266489909
        %v2538 = vmul.u32 %v2474, 3266489909
        %v2539 = vmul.u32 %v2475, 3266489909
        %v2540 = vshra.s32 %v2476, 16
        %v2541 = vshra.s32 %v2477, 16
        %v2542 = vshra.s32 %v2478, 16
        %v2543 = vshra.s32 %v2479, 16
        %v2544 = vshra.s32 %v2480, 16
        %v2545 = vshra.s32 %v2481, 16
        %v2546 = vshra.s32 %v2482, 16
        %v2547 = vshra.s32 %v2483, 16
        %v2548 = vshra.s32 %v2484, 16
        %v2549 = vshra.s32 %v2485, 16
        %v2550 = vshra.s32 %v2486, 16
        %v2551 = vshra.s32 %v2487, 16
        %v2552 = vshra.s32 %v2488, 16
        %v2553 = vshra.s32 %v2489, 16
        %v2554 = vshra.s32 %v2490, 16
        %v2555 = vshra.s32 %v2491, 16
        %v2556 = vshra.s32 %v2492, 16
        %v2557 = vshra.s32 %v2493, 16
        %v2558 = vshra.s32 %v2494, 16
        %v2559 = vshra.s32 %v2495, 16
        %v2560 = vshra.s32 %v2496, 16
        %v2561 = vshra.s32 %v2497, 16
        %v2562 = vshra.s32 %v2498, 16
        %v2563 = vshra.s32 %v2499, 16
        %v2564 = vshra.s32 %v2500, 16
        %v2565 = vshra.s32 %v2501, 16
        %v2566 = vshra.s32 %v2502, 16
        %v2567 = vshra.s32 %v2503, 16
        %v2568 = vshra.s32 %v2504, 16
        %v2569 = vshra.s32 %v2505, 16
        %v2570 = vshra.s32 %v2506, 16
        %v2571 = vshra.s32 %v2507, 16
        %v2572 = vshra.s32 %v2508, 16
        %v2573 = vshra.s32 %v2509, 16
        %v2574 = vshra.s32 %v2510, 16
        %v2575 = vshra.s32 %v2511, 16
        %v2576 = vshra.s32 %v2512, 16
        %v2577 = vshra.s32 %v2513, 16
        %v2578 = vshra.s32 %v2514, 16
        %v2579 = vshra.s32 %v2515, 16
        %v2580 = vshra.s32 %v2516, 16
        %v2581 = vshra.s32 %v2517, 16
        %v2582 = vshra.s32 %v2518, 16
        %v2583 = vshra.s32 %v2519, 16
        %v2584 = vshra.s32 %v2520, 16
        %v2585 = vshra.s32 %v2521, 16
        %v2586 = vshra.s32 %v2522, 16
        %v2587 = vshra.s32 %v2523, 16
        %v2588 = vshra.s32 %v2524, 16
        %v2589 = vshra.s32 %v2525, 16
        %v2590 = vshra.s32 %v2526, 16
        %v2591 = vshra.s32 %v2527, 16
        %v2592 = vshra.s32 %v2528, 16
        %v2593 = vshra.s32 %v2529, 16
        %v2594 = vshra.s32 %v2530, 16
        %v2595 = vshra.s32 %v2531, 16
        %v2596 = vshra.s32 %v2532, 16
        %v2597 = vshra.s32 %v2533, 16
        %v2598 = vshra.s32 %v2534, 16
        %v2599 = vshra.s32 %v2535, 16
        %v2600 = vshra.s32 %v2536, 16
        %v2601 = vshra.s32 %v2537, 16
        %v2602 = vshra.s32 %v2538, 16
        %v2603 = vshra.s32 %v2539, 16
        %v2604 = vand.u32 %v2540, 65535
        %v2605 = vand.u32 %v2541, 65535
        %v2606 = vand.u32 %v2542, 65535
        %v2607 = vand.u32 %v2543, 65535
        %v2608 = vand.u32 %v2544, 65535
        %v2609 = vand.u32 %v2545, 65535
        %v2610 = vand.u32 %v2546, 65535
        %v2611 = vand.u32 %v2547, 65535
        %v2612 = vand.u32 %v2548, 65535
        %v2613 = vand.u32 %v2549, 65535
        %v2614 = vand.u32 %v2550, 65535
        %v2615 = vand.u32 %v2551, 65535
        %v2616 = vand.u32 %v2552, 65535
        %v2617 = vand.u32 %v2553, 65535
        %v2618 = vand.u32 %v2554, 65535
        %v2619 = vand.u32 %v2555, 65535
        %v2620 = vand.u32 %v2556, 65535
        %v2621 = vand.u32 %v2557, 65535
        %v2622 = vand.u32 %v2558, 65535
        %v2623 = vand.u32 %v2559, 65535
        %v2624 = vand.u32 %v2560, 65535
        %v2625 = vand.u32 %v2561, 65535
        %v2626 = vand.u32 %v2562, 65535
        %v2627 = vand.u32 %v2563, 65535
        %v2628 = vand.u32 %v2564, 65535
        %v2629 = vand.u32 %v2565, 65535
        %v2630 = vand.u32 %v2566, 65535
        %v2631 = vand.u32 %v2567, 65535
        %v2632 = vand.u32 %v2568, 65535
        %v2633 = vand.u32 %v2569, 65535
        %v2634 = vand.u32 %v2570, 65535
        %v2635 = vand.u32 %v2571, 65535
        %v2636 = vand.u32 %v2572, 65535
        %v2637 = vand.u32 %v2573, 65535
        %v2638 = vand.u32 %v2574, 65535
        %v2639 = vand.u32 %v2575, 65535
        %v2640 = vand.u32 %v2576, 65535
        %v2641 = vand.u32 %v2577, 65535
        %v2642 = vand.u32 %v2578, 65535
        %v2643 = vand.u32 %v2579, 65535
        %v2644 = vand.u32 %v2580, 65535
        %v2645 = vand.u32 %v2581, 65535
        %v2646 = vand.u32 %v2582, 65535
        %v2647 = vand.u32 %v2583, 65535
        %v2648 = vand.u32 %v2584, 65535
        %v2649 = vand.u32 %v2585, 65535
        %v2650 = vand.u32 %v2586, 65535
        %v2651 = vand.u32 %v2587, 65535
        %v2652 = vand.u32 %v2588, 65535
        %v2653 = vand.u32 %v2589, 65535
        %v2654 = vand.u32 %v2590, 65535
        %v2655 = vand.u32 %v2591, 65535
        %v2656 = vand.u32 %v2592, 65535
        %v2657 = vand.u32 %v2593, 65535
        %v2658 = vand.u32 %v2594, 65535
        %v2659 = vand.u32 %v2595, 65535
        %v2660 = vand.u32 %v2596, 65535
        %v2661 = vand.u32 %v2597, 65535
        %v2662 = vand.u32 %v2598, 65535
        %v2663 = vand.u32 %v2599, 65535
        %v2664 = vand.u32 %v2600, 65535
        %v2665 = vand.u32 %v2601, 65535
        %v2666 = vand.u32 %v2602, 65535
        %v2667 = vand.u32 %v2603, 65535
        %v2668 = vxor.u32 %v2476, %v2604
        %v2669 = vxor.u32 %v2477, %v2605
        %v2670 = vxor.u32 %v2478, %v2606
        %v2671 = vxor.u32 %v2479, %v2607
        %v2672 = vxor.u32 %v2480, %v2608
        %v2673 = vxor.u32 %v2481, %v2609
        %v2674 = vxor.u32 %v2482, %v2610
        %v2675 = vxor.u32 %v2483, %v2611
        %v2676 = vxor.u32 %v2484, %v2612
        %v2677 = vxor.u32 %v2485, %v2613
        %v2678 = vxor.u32 %v2486, %v2614
        %v2679 = vxor.u32 %v2487, %v2615
        %v2680 = vxor.u32 %v2488, %v2616
        %v2681 = vxor.u32 %v2489, %v2617
        %v2682 = vxor.u32 %v2490, %v2618
        %v2683 = vxor.u32 %v2491, %v2619
        %v2684 = vxor.u32 %v2492, %v2620
        %v2685 = vxor.u32 %v2493, %v2621
        %v2686 = vxor.u32 %v2494, %v2622
        %v2687 = vxor.u32 %v2495, %v2623
        %v2688 = vxor.u32 %v2496, %v2624
        %v2689 = vxor.u32 %v2497, %v2625
        %v2690 = vxor.u32 %v2498, %v2626
        %v2691 = vxor.u32 %v2499, %v2627
        %v2692 = vxor.u32 %v2500, %v2628
        %v2693 = vxor.u32 %v2501, %v2629
        %v2694 = vxor.u32 %v2502, %v2630
        %v2695 = vxor.u32 %v2503, %v2631
        %v2696 = vxor.u32 %v2504, %v2632
        %v2697 = vxor.u32 %v2505, %v2633
        %v2698 = vxor.u32 %v2506, %v2634
        %v2699 = vxor.u32 %v2507, %v2635
        %v2700 = vxor.u32 %v2508, %v2636
        %v2701 = vxor.u32 %v2509, %v2637
        %v2702 = vxor.u32 %v2510, %v2638
        %v2703 = vxor.u32 %v2511, %v2639
        %v2704 = vxor.u32 %v2512, %v2640
        %v2705 = vxor.u32 %v2513, %v2641
        %v2706 = vxor.u32 %v2514, %v2642
        %v2707 = vxor.u32 %v2515, %v2643
        %v2708 = vxor.u32 %v2516, %v2644
        %v2709 = vxor.u32 %v2517, %v2645
        %v2710 = vxor.u32 %v2518, %v2646
        %v2711 = vxor.u32 %v2519, %v2647
        %v2712 = vxor.u32 %v2520, %v2648
        %v2713 = vxor.u32 %v2521, %v2649
        %v2714 = vxor.u32 %v2522, %v2650
        %v2715 = vxor.u32 %v2523, %v2651
        %v2716 = vxor.u32 %v2524, %v2652
        %v2717 = vxor.u32 %v2525, %v2653
        %v2718 = vxor.u32 %v2526, %v2654
        %v2719 = vxor.u32 %v2527, %v2655
        %v2720 = vxor.u32 %v2528, %v2656
        %v2721 = vxor.u32 %v2529, %v2657
        %v2722 = vxor.u32 %v2530, %v2658
        %v2723 = vxor.u32 %v2531, %v2659
        %v2724 = vxor.u32 %v2532, %v2660
        %v2725 = vxor.u32 %v2533, %v2661
        %v2726 = vxor.u32 %v2534, %v2662
        %v2727 = vxor.u32 %v2535, %v2663
        %v2728 = vxor.u32 %v2536, %v2664
        %v2729 = vxor.u32 %v2537, %v2665
        %v2730 = vxor.u32 %v2538, %v2666
        %v2731 = vxor.u32 %v2539, %v2667
        %v2732 = vand.u32 %v2668, 2147483647
        %v2733 = vand.u32 %v2669, 2147483647
        %v2734 = vand.u32 %v2670, 2147483647
        %v2735 = vand.u32 %v2671, 2147483647
        %v2736 = vand.u32 %v2672, 2147483647
        %v2737 = vand.u32 %v2673, 2147483647
        %v2738 = vand.u32 %v2674, 2147483647
        %v2739 = vand.u32 %v2675, 2147483647
        %v2740 = vand.u32 %v2676, 2147483647
        %v2741 = vand.u32 %v2677, 2147483647
        %v2742 = vand.u32 %v2678, 2147483647
        %v2743 = vand.u32 %v2679, 2147483647
        %v2744 = vand.u32 %v2680, 2147483647
        %v2745 = vand.u32 %v2681, 2147483647
        %v2746 = vand.u32 %v2682, 2147483647
        %v2747 = vand.u32 %v2683, 2147483647
        %v2748 = vand.u32 %v2684, 2147483647
        %v2749 = vand.u32 %v2685, 2147483647
        %v2750 = vand.u32 %v2686, 2147483647
        %v2751 = vand.u32 %v2687, 2147483647
        %v2752 = vand.u32 %v2688, 2147483647
        %v2753 = vand.u32 %v2689, 2147483647
        %v2754 = vand.u32 %v2690, 2147483647
        %v2755 = vand.u32 %v2691, 2147483647
        %v2756 = vand.u32 %v2692, 2147483647
        %v2757 = vand.u32 %v2693, 2147483647
        %v2758 = vand.u32 %v2694, 2147483647
        %v2759 = vand.u32 %v2695, 2147483647
        %v2760 = vand.u32 %v2696, 2147483647
        %v2761 = vand.u32 %v2697, 2147483647
        %v2762 = vand.u32 %v2698, 2147483647
        %v2763 = vand.u32 %v2699, 2147483647
        %v2764 = vand.u32 %v2700, 2147483647
        %v2765 = vand.u32 %v2701, 2147483647
        %v2766 = vand.u32 %v2702, 2147483647
        %v2767 = vand.u32 %v2703, 2147483647
        %v2768 = vand.u32 %v2704, 2147483647
        %v2769 = vand.u32 %v2705, 2147483647
        %v2770 = vand.u32 %v2706, 2147483647
        %v2771 = vand.u32 %v2707, 2147483647
        %v2772 = vand.u32 %v2708, 2147483647
        %v2773 = vand.u32 %v2709, 2147483647
        %v2774 = vand.u32 %v2710, 2147483647
        %v2775 = vand.u32 %v2711, 2147483647
        %v2776 = vand.u32 %v2712, 2147483647
        %v2777 = vand.u32 %v2713, 2147483647
        %v2778 = vand.u32 %v2714, 2147483647
        %v2779 = vand.u32 %v2715, 2147483647
        %v2780 = vand.u32 %v2716, 2147483647
        %v2781 = vand.u32 %v2717, 2147483647
        %v2782 = vand.u32 %v2718, 2147483647
        %v2783 = vand.u32 %v2719, 2147483647
        %v2784 = vand.u32 %v2720, 2147483647
        %v2785 = vand.u32 %v2721, 2147483647
        %v2786 = vand.u32 %v2722, 2147483647
        %v2787 = vand.u32 %v2723, 2147483647
        %v2788 = vand.u32 %v2724, 2147483647
        %v2789 = vand.u32 %v2725, 2147483647
        %v2790 = vand.u32 %v2726, 2147483647
        %v2791 = vand.u32 %v2727, 2147483647
        %v2792 = vand.u32 %v2728, 2147483647
        %v2793 = vand.u32 %v2729, 2147483647
        %v2794 = vand.u32 %v2730, 2147483647
        %v2795 = vand.u32 %v2731, 2147483647
        %vm2796 = vcmp.lt.s32.totalorder %v2732, 858993459
        %vm2797 = vcmp.lt.s32.totalorder %v2733, 858993459
        %vm2798 = vcmp.lt.s32.totalorder %v2734, 858993459
        %vm2799 = vcmp.lt.s32.totalorder %v2735, 858993459
        %vm2800 = vcmp.lt.s32.totalorder %v2736, 858993459
        %vm2801 = vcmp.lt.s32.totalorder %v2737, 858993459
        %vm2802 = vcmp.lt.s32.totalorder %v2738, 858993459
        %vm2803 = vcmp.lt.s32.totalorder %v2739, 858993459
        %vm2804 = vcmp.lt.s32.totalorder %v2740, 858993459
        %vm2805 = vcmp.lt.s32.totalorder %v2741, 858993459
        %vm2806 = vcmp.lt.s32.totalorder %v2742, 858993459
        %vm2807 = vcmp.lt.s32.totalorder %v2743, 858993459
        %vm2808 = vcmp.lt.s32.totalorder %v2744, 858993459
        %vm2809 = vcmp.lt.s32.totalorder %v2745, 858993459
        %vm2810 = vcmp.lt.s32.totalorder %v2746, 858993459
        %vm2811 = vcmp.lt.s32.totalorder %v2747, 858993459
        %vm2812 = vcmp.lt.s32.totalorder %v2748, 858993459
        %vm2813 = vcmp.lt.s32.totalorder %v2749, 858993459
        %vm2814 = vcmp.lt.s32.totalorder %v2750, 858993459
        %vm2815 = vcmp.lt.s32.totalorder %v2751, 858993459
        %vm2816 = vcmp.lt.s32.totalorder %v2752, 858993459
        %vm2817 = vcmp.lt.s32.totalorder %v2753, 858993459
        %vm2818 = vcmp.lt.s32.totalorder %v2754, 858993459
        %vm2819 = vcmp.lt.s32.totalorder %v2755, 858993459
        %vm2820 = vcmp.lt.s32.totalorder %v2756, 858993459
        %vm2821 = vcmp.lt.s32.totalorder %v2757, 858993459
        %vm2822 = vcmp.lt.s32.totalorder %v2758, 858993459
        %vm2823 = vcmp.lt.s32.totalorder %v2759, 858993459
        %vm2824 = vcmp.lt.s32.totalorder %v2760, 858993459
        %vm2825 = vcmp.lt.s32.totalorder %v2761, 858993459
        %vm2826 = vcmp.lt.s32.totalorder %v2762, 858993459
        %vm2827 = vcmp.lt.s32.totalorder %v2763, 858993459
        %vm2828 = vcmp.lt.s32.totalorder %v2764, 858993459
        %vm2829 = vcmp.lt.s32.totalorder %v2765, 858993459
        %vm2830 = vcmp.lt.s32.totalorder %v2766, 858993459
        %vm2831 = vcmp.lt.s32.totalorder %v2767, 858993459
        %vm2832 = vcmp.lt.s32.totalorder %v2768, 858993459
        %vm2833 = vcmp.lt.s32.totalorder %v2769, 858993459
        %vm2834 = vcmp.lt.s32.totalorder %v2770, 858993459
        %vm2835 = vcmp.lt.s32.totalorder %v2771, 858993459
        %vm2836 = vcmp.lt.s32.totalorder %v2772, 858993459
        %vm2837 = vcmp.lt.s32.totalorder %v2773, 858993459
        %vm2838 = vcmp.lt.s32.totalorder %v2774, 858993459
        %vm2839 = vcmp.lt.s32.totalorder %v2775, 858993459
        %vm2840 = vcmp.lt.s32.totalorder %v2776, 858993459
        %vm2841 = vcmp.lt.s32.totalorder %v2777, 858993459
        %vm2842 = vcmp.lt.s32.totalorder %v2778, 858993459
        %vm2843 = vcmp.lt.s32.totalorder %v2779, 858993459
        %vm2844 = vcmp.lt.s32.totalorder %v2780, 858993459
        %vm2845 = vcmp.lt.s32.totalorder %v2781, 858993459
        %vm2846 = vcmp.lt.s32.totalorder %v2782, 858993459
        %vm2847 = vcmp.lt.s32.totalorder %v2783, 858993459
        %vm2848 = vcmp.lt.s32.totalorder %v2784, 858993459
        %vm2849 = vcmp.lt.s32.totalorder %v2785, 858993459
        %vm2850 = vcmp.lt.s32.totalorder %v2786, 858993459
        %vm2851 = vcmp.lt.s32.totalorder %v2787, 858993459
        %vm2852 = vcmp.lt.s32.totalorder %v2788, 858993459
        %vm2853 = vcmp.lt.s32.totalorder %v2789, 858993459
        %vm2854 = vcmp.lt.s32.totalorder %v2790, 858993459
        %vm2855 = vcmp.lt.s32.totalorder %v2791, 858993459
        %vm2856 = vcmp.lt.s32.totalorder %v2792, 858993459
        %vm2857 = vcmp.lt.s32.totalorder %v2793, 858993459
        %vm2858 = vcmp.lt.s32.totalorder %v2794, 858993459
        %vm2859 = vcmp.lt.s32.totalorder %v2795, 858993459
        %v2860 = vmul.f32 %v1388, %v1708
        %v2861 = vmul.f32 %v1390, %v1710
        %v2862 = vmul.f32 %v1392, %v1712
        %v2863 = vmul.f32 %v1394, %v1714
        %v2864 = vmul.f32 %v1396, %v1716
        %v2865 = vmul.f32 %v1398, %v1718
        %v2866 = vmul.f32 %v1400, %v1720
        %v2867 = vmul.f32 %v1402, %v1722
        %v2868 = vmul.f32 %v1404, %v1724
        %v2869 = vmul.f32 %v1406, %v1726
        %v2870 = vmul.f32 %v1408, %v1728
        %v2871 = vmul.f32 %v1410, %v1730
        %v2872 = vmul.f32 %v1412, %v1732
        %v2873 = vmul.f32 %v1414, %v1734
        %v2874 = vmul.f32 %v1416, %v1736
        %v2875 = vmul.f32 %v1418, %v1738
        %v2876 = vmul.f32 %v1420, %v1740
        %v2877 = vmul.f32 %v1422, %v1742
        %v2878 = vmul.f32 %v1424, %v1744
        %v2879 = vmul.f32 %v1426, %v1746
        %v2880 = vmul.f32 %v1428, %v1748
        %v2881 = vmul.f32 %v1430, %v1750
        %v2882 = vmul.f32 %v1432, %v1752
        %v2883 = vmul.f32 %v1434, %v1754
        %v2884 = vmul.f32 %v1436, %v1756
        %v2885 = vmul.f32 %v1438, %v1758
        %v2886 = vmul.f32 %v1440, %v1760
        %v2887 = vmul.f32 %v1442, %v1762
        %v2888 = vmul.f32 %v1444, %v1764
        %v2889 = vmul.f32 %v1446, %v1766
        %v2890 = vmul.f32 %v1448, %v1768
        %v2891 = vmul.f32 %v1450, %v1770
        %v2892 = vmul.f32 %v1452, %v1772
        %v2893 = vmul.f32 %v1454, %v1774
        %v2894 = vmul.f32 %v1456, %v1776
        %v2895 = vmul.f32 %v1458, %v1778
        %v2896 = vmul.f32 %v1460, %v1780
        %v2897 = vmul.f32 %v1462, %v1782
        %v2898 = vmul.f32 %v1464, %v1784
        %v2899 = vmul.f32 %v1466, %v1786
        %v2900 = vmul.f32 %v1468, %v1788
        %v2901 = vmul.f32 %v1470, %v1790
        %v2902 = vmul.f32 %v1472, %v1792
        %v2903 = vmul.f32 %v1474, %v1794
        %v2904 = vmul.f32 %v1476, %v1796
        %v2905 = vmul.f32 %v1478, %v1798
        %v2906 = vmul.f32 %v1480, %v1800
        %v2907 = vmul.f32 %v1482, %v1802
        %v2908 = vmul.f32 %v1484, %v1804
        %v2909 = vmul.f32 %v1486, %v1806
        %v2910 = vmul.f32 %v1488, %v1808
        %v2911 = vmul.f32 %v1490, %v1810
        %v2912 = vmul.f32 %v1492, %v1812
        %v2913 = vmul.f32 %v1494, %v1814
        %v2914 = vmul.f32 %v1496, %v1816
        %v2915 = vmul.f32 %v1498, %v1818
        %v2916 = vmul.f32 %v1500, %v1820
        %v2917 = vmul.f32 %v1502, %v1822
        %v2918 = vmul.f32 %v1504, %v1824
        %v2919 = vmul.f32 %v1506, %v1826
        %v2920 = vmul.f32 %v1508, %v1828
        %v2921 = vmul.f32 %v1510, %v1830
        %v2922 = vmul.f32 %v1512, %v1832
        %v2923 = vmul.f32 %v1514, %v1834
        %v2924 = vsel %vm2796, %v2860, 0.0
        %v2925 = vsel %vm2797, %v2861, 0.0
        %v2926 = vsel %vm2798, %v2862, 0.0
        %v2927 = vsel %vm2799, %v2863, 0.0
        %v2928 = vsel %vm2800, %v2864, 0.0
        %v2929 = vsel %vm2801, %v2865, 0.0
        %v2930 = vsel %vm2802, %v2866, 0.0
        %v2931 = vsel %vm2803, %v2867, 0.0
        %v2932 = vsel %vm2804, %v2868, 0.0
        %v2933 = vsel %vm2805, %v2869, 0.0
        %v2934 = vsel %vm2806, %v2870, 0.0
        %v2935 = vsel %vm2807, %v2871, 0.0
        %v2936 = vsel %vm2808, %v2872, 0.0
        %v2937 = vsel %vm2809, %v2873, 0.0
        %v2938 = vsel %vm2810, %v2874, 0.0
        %v2939 = vsel %vm2811, %v2875, 0.0
        %v2940 = vsel %vm2812, %v2876, 0.0
        %v2941 = vsel %vm2813, %v2877, 0.0
        %v2942 = vsel %vm2814, %v2878, 0.0
        %v2943 = vsel %vm2815, %v2879, 0.0
        %v2944 = vsel %vm2816, %v2880, 0.0
        %v2945 = vsel %vm2817, %v2881, 0.0
        %v2946 = vsel %vm2818, %v2882, 0.0
        %v2947 = vsel %vm2819, %v2883, 0.0
        %v2948 = vsel %vm2820, %v2884, 0.0
        %v2949 = vsel %vm2821, %v2885, 0.0
        %v2950 = vsel %vm2822, %v2886, 0.0
        %v2951 = vsel %vm2823, %v2887, 0.0
        %v2952 = vsel %vm2824, %v2888, 0.0
        %v2953 = vsel %vm2825, %v2889, 0.0
        %v2954 = vsel %vm2826, %v2890, 0.0
        %v2955 = vsel %vm2827, %v2891, 0.0
        %v2956 = vsel %vm2828, %v2892, 0.0
        %v2957 = vsel %vm2829, %v2893, 0.0
        %v2958 = vsel %vm2830, %v2894, 0.0
        %v2959 = vsel %vm2831, %v2895, 0.0
        %v2960 = vsel %vm2832, %v2896, 0.0
        %v2961 = vsel %vm2833, %v2897, 0.0
        %v2962 = vsel %vm2834, %v2898, 0.0
        %v2963 = vsel %vm2835, %v2899, 0.0
        %v2964 = vsel %vm2836, %v2900, 0.0
        %v2965 = vsel %vm2837, %v2901, 0.0
        %v2966 = vsel %vm2838, %v2902, 0.0
        %v2967 = vsel %vm2839, %v2903, 0.0
        %v2968 = vsel %vm2840, %v2904, 0.0
        %v2969 = vsel %vm2841, %v2905, 0.0
        %v2970 = vsel %vm2842, %v2906, 0.0
        %v2971 = vsel %vm2843, %v2907, 0.0
        %v2972 = vsel %vm2844, %v2908, 0.0
        %v2973 = vsel %vm2845, %v2909, 0.0
        %v2974 = vsel %vm2846, %v2910, 0.0
        %v2975 = vsel %vm2847, %v2911, 0.0
        %v2976 = vsel %vm2848, %v2912, 0.0
        %v2977 = vsel %vm2849, %v2913, 0.0
        %v2978 = vsel %vm2850, %v2914, 0.0
        %v2979 = vsel %vm2851, %v2915, 0.0
        %v2980 = vsel %vm2852, %v2916, 0.0
        %v2981 = vsel %vm2853, %v2917, 0.0
        %v2982 = vsel %vm2854, %v2918, 0.0
        %v2983 = vsel %vm2855, %v2919, 0.0
        %v2984 = vsel %vm2856, %v2920, 0.0
        %v2985 = vsel %vm2857, %v2921, 0.0
        %v2986 = vsel %vm2858, %v2922, 0.0
        %v2987 = vsel %vm2859, %v2923, 0.0
        %2988 = vmatprep.subr.mxu0 0.0
        %2989 = vmatpush1.msra.mxu0 %v471
        %2990 = vmatprep.subr.mxu0 0.0
        %2991 = vmatpush1.msra.mxu0 %v472
        %2992 = vmatprep.subr.mxu0 0.0
        %2993 = vmatpush1.msra.mxu0 %v473
        %2994 = vmatprep.subr.mxu0 0.0
        %2995 = vmatpush1.msra.mxu0 %v474
        %2996 = vmatprep.subr.mxu0 0.0
        %2997 = vmatpush1.msra.mxu0 %v475
        %2998 = vmatprep.subr.mxu0 0.0
        %2999 = vmatpush1.msra.mxu0 %v476
        %3000 = vmatprep.subr.mxu0 0.0
        %3001 = vmatpush1.msra.mxu0 %v477
        %3002 = vmatprep.subr.mxu0 0.0
        %3003 = vmatpush1.msra.mxu0 %v478
        %3004 = vmatprep.subr.mxu0 0.0
        %3005 = vmatpush1.msra.mxu0 %v479
        %3006 = vmatprep.subr.mxu0 0.0
        %3007 = vmatpush1.msra.mxu0 %v480
        %3008 = vmatprep.subr.mxu0 0.0
        %3009 = vmatpush1.msra.mxu0 %v481
        %3010 = vmatprep.subr.mxu0 0.0
        %3011 = vmatpush1.msra.mxu0 %v482
        %3012 = vmatprep.subr.mxu0 0.0
        %3013 = vmatpush1.msra.mxu0 %v483
        %3014 = vmatprep.subr.mxu0 0.0
        %3015 = vmatpush1.msra.mxu0 %v484
        %3016 = vmatprep.subr.mxu0 0.0
        %3017 = vmatpush1.msra.mxu0 %v485
        %3018 = vmatprep.subr.mxu0 0.0
        %3019 = vmatpush1.msra.mxu0 %v486
        %3020 = vmatprep.subr.mxu0 0.0
        %3021 = vmatpush1.msra.mxu0 0.0
        %3022 = vmatprep.subr.mxu0 0.0
        %3023 = vmatpush1.msra.mxu0 0.0
        %3024 = vmatprep.subr.mxu0 0.0
        %3025 = vmatpush1.msra.mxu0 0.0
        %3026 = vmatprep.subr.mxu0 0.0
        %3027 = vmatpush1.msra.mxu0 0.0
        %3028 = vmatprep.subr.mxu0 0.0
        %3029 = vmatpush1.msra.mxu0 0.0
        %3030 = vmatprep.subr.mxu0 0.0
        %3031 = vmatpush1.msra.mxu0 0.0
        %3032 = vmatprep.subr.mxu0 0.0
        %3033 = vmatpush1.msra.mxu0 0.0
        %3034 = vmatprep.subr.mxu0 0.0
        %3035 = vmatpush1.msra.mxu0 0.0
        %3036 = vmatprep.subr.mxu0 0.0
        %3037 = vmatpush1.msra.mxu0 0.0
        %3038 = vmatprep.subr.mxu0 0.0
        %3039 = vmatpush1.msra.mxu0 0.0
        %3040 = vmatprep.subr.mxu0 0.0
        %3041 = vmatpush1.msra.mxu0 0.0
        %3042 = vmatprep.subr.mxu0 0.0
        %3043 = vmatpush1.msra.mxu0 0.0
        %3044 = vmatprep.subr.mxu0 0.0
        %3045 = vmatpush1.msra.mxu0 0.0
        %3046 = vmatprep.subr.mxu0 0.0
        %3047 = vmatpush1.msra.mxu0 0.0
        %3048 = vmatprep.subr.mxu0 0.0
        %3049 = vmatpush1.msra.mxu0 0.0
        %3050 = vmatprep.subr.mxu0 0.0
        %3051 = vmatpush1.msra.mxu0 0.0
        %3052 = vmatprep.mubr.f32.mxu0 0.0
        %3053 = vmatmul.mubr.f32.gmra.mrb[0].mxu0 %v2924
        %v3054 = vpop.f32.mrb[0].mxu0
        %v3055 = vadd.f32 0.0, %v3054
        %v3056 = vpop.f32.mrb[0].mxu0
        %3057 = vmatprep.mubr.f32.mxu0 0.0
        %3058 = vmatmul.mubr.f32.gmra.mrb[0].mxu0 %v2925
        %v3059 = vpop.f32.mrb[0].mxu0
        %v3060 = vadd.f32 0.0, %v3059
        %v3061 = vpop.f32.mrb[0].mxu0
        %3062 = vmatprep.mubr.f32.mxu0 0.0
        %3063 = vmatmul.mubr.f32.gmra.mrb[0].mxu0 %v2926
        %v3064 = vpop.f32.mrb[0].mxu0
        %v3065 = vadd.f32 0.0, %v3064
        %v3066 = vpop.f32.mrb[0].mxu0
        %3067 = vmatprep.mubr.f32.mxu0 0.0
        %3068 = vmatmul.mubr.f32.gmra.mrb[0].mxu0 %v2927
        %v3069 = vpop.f32.mrb[0].mxu0
        %v3070 = vadd.f32 0.0, %v3069
        %v3071 = vpop.f32.mrb[0].mxu0
        %3072 = vmatprep.mubr.f32.mxu0 0.0
        %3073 = vmatmul.mubr.f32.gmra.mrb[0].mxu0 %v2928
        %v3074 = vpop.f32.mrb[0].mxu0
        %v3075 = vadd.f32 0.0, %v3074
        %v3076 = vpop.f32.mrb[0].mxu0
        %3077 = vmatprep.mubr.f32.mxu0 0.0
        %3078 = vmatmul.mubr.f32.gmra.mrb[0].mxu0 %v2929
        %v3079 = vpop.f32.mrb[0].mxu0
        %v3080 = vadd.f32 0.0, %v3079
        %v3081 = vpop.f32.mrb[0].mxu0
        %3082 = vmatprep.mubr.f32.mxu0 0.0
        %3083 = vmatmul.mubr.f32.gmra.mrb[0].mxu0 %v2930
        %v3084 = vpop.f32.mrb[0].mxu0
        %v3085 = vadd.f32 0.0, %v3084
        %v3086 = vpop.f32.mrb[0].mxu0
        %3087 = vmatprep.mubr.f32.mxu0 0.0
        %3088 = vmatmul.mubr.f32.gmra.mrb[0].mxu0 %v2931
        %v3089 = vpop.f32.mrb[0].mxu0
        %v3090 = vadd.f32 0.0, %v3089
        %v3091 = vpop.f32.mrb[0].mxu0
        %3092 = vmatprep.mubr.f32.mxu0 0.0
        %3093 = vmatmul.mubr.f32.gmra.mrb[0].mxu0 %v2932
        %v3094 = vpop.f32.mrb[0].mxu0
        %v3095 = vadd.f32 0.0, %v3094
        %v3096 = vpop.f32.mrb[0].mxu0
        %3097 = vmatprep.mubr.f32.mxu0 0.0
        %3098 = vmatmul.mubr.f32.gmra.mrb[0].mxu0 %v2933
        %v3099 = vpop.f32.mrb[0].mxu0
        %v3100 = vadd.f32 0.0, %v3099
        %v3101 = vpop.f32.mrb[0].mxu0
        %3102 = vmatprep.mubr.f32.mxu0 0.0
        %3103 = vmatmul.mubr.f32.gmra.mrb[0].mxu0 %v2934
        %v3104 = vpop.f32.mrb[0].mxu0
        %v3105 = vadd.f32 0.0, %v3104
        %v3106 = vpop.f32.mrb[0].mxu0
        %3107 = vmatprep.mubr.f32.mxu0 0.0
        %3108 = vmatmul.mubr.f32.gmra.mrb[0].mxu0 %v2935
        %v3109 = vpop.f32.mrb[0].mxu0
        %v3110 = vadd.f32 0.0, %v3109
        %v3111 = vpop.f32.mrb[0].mxu0
        %3112 = vmatprep.mubr.f32.mxu0 0.0
        %3113 = vmatmul.mubr.f32.gmra.mrb[0].mxu0 %v2936
        %v3114 = vpop.f32.mrb[0].mxu0
        %v3115 = vadd.f32 0.0, %v3114
        %v3116 = vpop.f32.mrb[0].mxu0
        %3117 = vmatprep.mubr.f32.mxu0 0.0
        %3118 = vmatmul.mubr.f32.gmra.mrb[0].mxu0 %v2937
        %v3119 = vpop.f32.mrb[0].mxu0
        %v3120 = vadd.f32 0.0, %v3119
        %v3121 = vpop.f32.mrb[0].mxu0
        %3122 = vmatprep.mubr.f32.mxu0 0.0
        %3123 = vmatmul.mubr.f32.gmra.mrb[0].mxu0 %v2938
        %v3124 = vpop.f32.mrb[0].mxu0
        %v3125 = vadd.f32 0.0, %v3124
        %v3126 = vpop.f32.mrb[0].mxu0
        %3127 = vmatprep.mubr.f32.mxu0 0.0
        %3128 = vmatmul.mubr.f32.gmra.mrb[0].mxu0 %v2939
        %v3129 = vpop.f32.mrb[0].mxu0
        %v3130 = vadd.f32 0.0, %v3129
        %v3131 = vpop.f32.mrb[0].mxu0
        %3132 = vdwg.mxu0
        %3133 = vmatprep.subr.mxu0 0.0
        %3134 = vmatpush1.msra.mxu0 %v487
        %3135 = vmatprep.subr.mxu0 0.0
        %3136 = vmatpush1.msra.mxu0 %v488
        %3137 = vmatprep.subr.mxu0 0.0
        %3138 = vmatpush1.msra.mxu0 %v489
        %3139 = vmatprep.subr.mxu0 0.0
        %3140 = vmatpush1.msra.mxu0 %v490
        %3141 = vmatprep.subr.mxu0 0.0
        %3142 = vmatpush1.msra.mxu0 %v491
        %3143 = vmatprep.subr.mxu0 0.0
        %3144 = vmatpush1.msra.mxu0 %v492
        %3145 = vmatprep.subr.mxu0 0.0
        %3146 = vmatpush1.msra.mxu0 %v493
        %3147 = vmatprep.subr.mxu0 0.0
        %3148 = vmatpush1.msra.mxu0 %v494
        %3149 = vmatprep.subr.mxu0 0.0
        %3150 = vmatpush1.msra.mxu0 %v495
        %3151 = vmatprep.subr.mxu0 0.0
        %3152 = vmatpush1.msra.mxu0 %v496
        %3153 = vmatprep.subr.mxu0 0.0
        %3154 = vmatpush1.msra.mxu0 %v497
        %3155 = vmatprep.subr.mxu0 0.0
        %3156 = vmatpush1.msra.mxu0 %v498
        %3157 = vmatprep.subr.mxu0 0.0
        %3158 = vmatpush1.msra.mxu0 %v499
        %3159 = vmatprep.subr.mxu0 0.0
        %3160 = vmatpush1.msra.mxu0 %v500
        %3161 = vmatprep.subr.mxu0 0.0
        %3162 = vmatpush1.msra.mxu0 %v501
        %3163 = vmatprep.subr.mxu0 0.0
        %3164 = vmatpush1.msra.mxu0 %v502
        %3165 = vmatprep.subr.mxu0 0.0
        %3166 = vmatpush1.msra.mxu0 0.0
        %3167 = vmatprep.subr.mxu0 0.0
        %3168 = vmatpush1.msra.mxu0 0.0
        %3169 = vmatprep.subr.mxu0 0.0
        %3170 = vmatpush1.msra.mxu0 0.0
        %3171 = vmatprep.subr.mxu0 0.0
        %3172 = vmatpush1.msra.mxu0 0.0
        %3173 = vmatprep.subr.mxu0 0.0
        %3174 = vmatpush1.msra.mxu0 0.0
        %3175 = vmatprep.subr.mxu0 0.0
        %3176 = vmatpush1.msra.mxu0 0.0
        %3177 = vmatprep.subr.mxu0 0.0
        %3178 = vmatpush1.msra.mxu0 0.0
        %3179 = vmatprep.subr.mxu0 0.0
        %3180 = vmatpush1.msra.mxu0 0.0
        %3181 = vmatprep.subr.mxu0 0.0
        %3182 = vmatpush1.msra.mxu0 0.0
        %3183 = vmatprep.subr.mxu0 0.0
        %3184 = vmatpush1.msra.mxu0 0.0
        %3185 = vmatprep.subr.mxu0 0.0
        %3186 = vmatpush1.msra.mxu0 0.0
        %3187 = vmatprep.subr.mxu0 0.0
        %3188 = vmatpush1.msra.mxu0 0.0
        %3189 = vmatprep.subr.mxu0 0.0
        %3190 = vmatpush1.msra.mxu0 0.0
        %3191 = vmatprep.subr.mxu0 0.0
        %3192 = vmatpush1.msra.mxu0 0.0
        %3193 = vmatprep.subr.mxu0 0.0
        %3194 = vmatpush1.msra.mxu0 0.0
        %3195 = vmatprep.subr.mxu0 0.0
        %3196 = vmatpush1.msra.mxu0 0.0
        %3197 = vmatprep.mubr.f32.mxu0 0.0
        %3198 = vmatmul.mubr.f32.gmra.mrb[0].mxu0 %v2940
        %v3199 = vpop.f32.mrb[0].mxu0
        %v3200 = vadd.f32 0.0, %v3199
        %v3201 = vpop.f32.mrb[0].mxu0
        %3202 = vmatprep.mubr.f32.mxu0 0.0
        %3203 = vmatmul.mubr.f32.gmra.mrb[0].mxu0 %v2941
        %v3204 = vpop.f32.mrb[0].mxu0
        %v3205 = vadd.f32 0.0, %v3204
        %v3206 = vpop.f32.mrb[0].mxu0
        %3207 = vmatprep.mubr.f32.mxu0 0.0
        %3208 = vmatmul.mubr.f32.gmra.mrb[0].mxu0 %v2942
        %v3209 = vpop.f32.mrb[0].mxu0
        %v3210 = vadd.f32 0.0, %v3209
        %v3211 = vpop.f32.mrb[0].mxu0
        %3212 = vmatprep.mubr.f32.mxu0 0.0
        %3213 = vmatmul.mubr.f32.gmra.mrb[0].mxu0 %v2943
        %v3214 = vpop.f32.mrb[0].mxu0
        %v3215 = vadd.f32 0.0, %v3214
        %v3216 = vpop.f32.mrb[0].mxu0
        %3217 = vmatprep.mubr.f32.mxu0 0.0
        %3218 = vmatmul.mubr.f32.gmra.mrb[0].mxu0 %v2944
        %v3219 = vpop.f32.mrb[0].mxu0
        %v3220 = vadd.f32 0.0, %v3219
        %v3221 = vpop.f32.mrb[0].mxu0
        %3222 = vmatprep.mubr.f32.mxu0 0.0
        %3223 = vmatmul.mubr.f32.gmra.mrb[0].mxu0 %v2945
        %v3224 = vpop.f32.mrb[0].mxu0
        %v3225 = vadd.f32 0.0, %v3224
        %v3226 = vpop.f32.mrb[0].mxu0
        %3227 = vmatprep.mubr.f32.mxu0 0.0
        %3228 = vmatmul.mubr.f32.gmra.mrb[0].mxu0 %v2946
        %v3229 = vpop.f32.mrb[0].mxu0
        %v3230 = vadd.f32 0.0, %v3229
        %v3231 = vpop.f32.mrb[0].mxu0
        %3232 = vmatprep.mubr.f32.mxu0 0.0
        %3233 = vmatmul.mubr.f32.gmra.mrb[0].mxu0 %v2947
        %v3234 = vpop.f32.mrb[0].mxu0
        %v3235 = vadd.f32 0.0, %v3234
        %v3236 = vpop.f32.mrb[0].mxu0
        %3237 = vmatprep.mubr.f32.mxu0 0.0
        %3238 = vmatmul.mubr.f32.gmra.mrb[0].mxu0 %v2948
        %v3239 = vpop.f32.mrb[0].mxu0
        %v3240 = vadd.f32 0.0, %v3239
        %v3241 = vpop.f32.mrb[0].mxu0
        %3242 = vmatprep.mubr.f32.mxu0 0.0
        %3243 = vmatmul.mubr.f32.gmra.mrb[0].mxu0 %v2949
        %v3244 = vpop.f32.mrb[0].mxu0
        %v3245 = vadd.f32 0.0, %v3244
        %v3246 = vpop.f32.mrb[0].mxu0
        %3247 = vmatprep.mubr.f32.mxu0 0.0
        %3248 = vmatmul.mubr.f32.gmra.mrb[0].mxu0 %v2950
        %v3249 = vpop.f32.mrb[0].mxu0
        %v3250 = vadd.f32 0.0, %v3249
        %v3251 = vpop.f32.mrb[0].mxu0
        %3252 = vmatprep.mubr.f32.mxu0 0.0
        %3253 = vmatmul.mubr.f32.gmra.mrb[0].mxu0 %v2951
        %v3254 = vpop.f32.mrb[0].mxu0
        %v3255 = vadd.f32 0.0, %v3254
        %v3256 = vpop.f32.mrb[0].mxu0
        %3257 = vmatprep.mubr.f32.mxu0 0.0
        %3258 = vmatmul.mubr.f32.gmra.mrb[0].mxu0 %v2952
        %v3259 = vpop.f32.mrb[0].mxu0
        %v3260 = vadd.f32 0.0, %v3259
        %v3261 = vpop.f32.mrb[0].mxu0
        %3262 = vmatprep.mubr.f32.mxu0 0.0
        %3263 = vmatmul.mubr.f32.gmra.mrb[0].mxu0 %v2953
        %v3264 = vpop.f32.mrb[0].mxu0
        %v3265 = vadd.f32 0.0, %v3264
        %v3266 = vpop.f32.mrb[0].mxu0
        %3267 = vmatprep.mubr.f32.mxu0 0.0
        %3268 = vmatmul.mubr.f32.gmra.mrb[0].mxu0 %v2954
        %v3269 = vpop.f32.mrb[0].mxu0
        %v3270 = vadd.f32 0.0, %v3269
        %v3271 = vpop.f32.mrb[0].mxu0
        %3272 = vmatprep.mubr.f32.mxu0 0.0
        %3273 = vmatmul.mubr.f32.gmra.mrb[0].mxu0 %v2955
        %v3274 = vpop.f32.mrb[0].mxu0
        %v3275 = vadd.f32 0.0, %v3274
        %v3276 = vpop.f32.mrb[0].mxu0
        %3277 = vdwg.mxu0
        %3278 = vmatprep.subr.mxu0 0.0
        %3279 = vmatpush1.msra.mxu0 %v503
        %3280 = vmatprep.subr.mxu0 0.0
        %3281 = vmatpush1.msra.mxu0 %v504
        %3282 = vmatprep.subr.mxu0 0.0
        %3283 = vmatpush1.msra.mxu0 %v505
        %3284 = vmatprep.subr.mxu0 0.0
        %3285 = vmatpush1.msra.mxu0 %v506
        %3286 = vmatprep.subr.mxu0 0.0
        %3287 = vmatpush1.msra.mxu0 %v507
        %3288 = vmatprep.subr.mxu0 0.0
        %3289 = vmatpush1.msra.mxu0 %v508
        %3290 = vmatprep.subr.mxu0 0.0
        %3291 = vmatpush1.msra.mxu0 %v509
        %3292 = vmatprep.subr.mxu0 0.0
        %3293 = vmatpush1.msra.mxu0 %v510
        %3294 = vmatprep.subr.mxu0 0.0
        %3295 = vmatpush1.msra.mxu0 %v511
        %3296 = vmatprep.subr.mxu0 0.0
        %3297 = vmatpush1.msra.mxu0 %v512
        %3298 = vmatprep.subr.mxu0 0.0
        %3299 = vmatpush1.msra.mxu0 %v513
        %3300 = vmatprep.subr.mxu0 0.0
        %3301 = vmatpush1.msra.mxu0 %v514
        %3302 = vmatprep.subr.mxu0 0.0
        %3303 = vmatpush1.msra.mxu0 %v515
        %3304 = vmatprep.subr.mxu0 0.0
        %3305 = vmatpush1.msra.mxu0 %v516
        %3306 = vmatprep.subr.mxu0 0.0
        %3307 = vmatpush1.msra.mxu0 %v517
        %3308 = vmatprep.subr.mxu0 0.0
        %3309 = vmatpush1.msra.mxu0 %v518
        %3310 = vmatprep.subr.mxu0 0.0
        %3311 = vmatpush1.msra.mxu0 0.0
        %3312 = vmatprep.subr.mxu0 0.0
        %3313 = vmatpush1.msra.mxu0 0.0
        %3314 = vmatprep.subr.mxu0 0.0
        %3315 = vmatpush1.msra.mxu0 0.0
        %3316 = vmatprep.subr.mxu0 0.0
        %3317 = vmatpush1.msra.mxu0 0.0
        %3318 = vmatprep.subr.mxu0 0.0
        %3319 = vmatpush1.msra.mxu0 0.0
        %3320 = vmatprep.subr.mxu0 0.0
        %3321 = vmatpush1.msra.mxu0 0.0
        %3322 = vmatprep.subr.mxu0 0.0
        %3323 = vmatpush1.msra.mxu0 0.0
        %3324 = vmatprep.subr.mxu0 0.0
        %3325 = vmatpush1.msra.mxu0 0.0
        %3326 = vmatprep.subr.mxu0 0.0
        %3327 = vmatpush1.msra.mxu0 0.0
        %3328 = vmatprep.subr.mxu0 0.0
        %3329 = vmatpush1.msra.mxu0 0.0
        %3330 = vmatprep.subr.mxu0 0.0
        %3331 = vmatpush1.msra.mxu0 0.0
        %3332 = vmatprep.subr.mxu0 0.0
        %3333 = vmatpush1.msra.mxu0 0.0
        %3334 = vmatprep.subr.mxu0 0.0
        %3335 = vmatpush1.msra.mxu0 0.0
        %3336 = vmatprep.subr.mxu0 0.0
        %3337 = vmatpush1.msra.mxu0 0.0
        %3338 = vmatprep.subr.mxu0 0.0
        %3339 = vmatpush1.msra.mxu0 0.0
        %3340 = vmatprep.subr.mxu0 0.0
        %3341 = vmatpush1.msra.mxu0 0.0
        %3342 = vmatprep.mubr.f32.mxu0 0.0
        %3343 = vmatmul.mubr.f32.gmra.mrb[0].mxu0 %v2956
        %v3344 = vpop.f32.mrb[0].mxu0
        %v3345 = vadd.f32 0.0, %v3344
        %v3346 = vpop.f32.mrb[0].mxu0
        %3347 = vmatprep.mubr.f32.mxu0 0.0
        %3348 = vmatmul.mubr.f32.gmra.mrb[0].mxu0 %v2957
        %v3349 = vpop.f32.mrb[0].mxu0
        %v3350 = vadd.f32 0.0, %v3349
        %v3351 = vpop.f32.mrb[0].mxu0
        %3352 = vmatprep.mubr.f32.mxu0 0.0
        %3353 = vmatmul.mubr.f32.gmra.mrb[0].mxu0 %v2958
        %v3354 = vpop.f32.mrb[0].mxu0
        %v3355 = vadd.f32 0.0, %v3354
        %v3356 = vpop.f32.mrb[0].mxu0
        %3357 = vmatprep.mubr.f32.mxu0 0.0
        %3358 = vmatmul.mubr.f32.gmra.mrb[0].mxu0 %v2959
        %v3359 = vpop.f32.mrb[0].mxu0
        %v3360 = vadd.f32 0.0, %v3359
        %v3361 = vpop.f32.mrb[0].mxu0
        %3362 = vmatprep.mubr.f32.mxu0 0.0
        %3363 = vmatmul.mubr.f32.gmra.mrb[0].mxu0 %v2960
        %v3364 = vpop.f32.mrb[0].mxu0
        %v3365 = vadd.f32 0.0, %v3364
        %v3366 = vpop.f32.mrb[0].mxu0
        %3367 = vmatprep.mubr.f32.mxu0 0.0
        %3368 = vmatmul.mubr.f32.gmra.mrb[0].mxu0 %v2961
        %v3369 = vpop.f32.mrb[0].mxu0
        %v3370 = vadd.f32 0.0, %v3369
        %v3371 = vpop.f32.mrb[0].mxu0
        %3372 = vmatprep.mubr.f32.mxu0 0.0
        %3373 = vmatmul.mubr.f32.gmra.mrb[0].mxu0 %v2962
        %v3374 = vpop.f32.mrb[0].mxu0
        %v3375 = vadd.f32 0.0, %v3374
        %v3376 = vpop.f32.mrb[0].mxu0
        %3377 = vmatprep.mubr.f32.mxu0 0.0
        %3378 = vmatmul.mubr.f32.gmra.mrb[0].mxu0 %v2963
        %v3379 = vpop.f32.mrb[0].mxu0
        %v3380 = vadd.f32 0.0, %v3379
        %v3381 = vpop.f32.mrb[0].mxu0
        %3382 = vmatprep.mubr.f32.mxu0 0.0
        %3383 = vmatmul.mubr.f32.gmra.mrb[0].mxu0 %v2964
        %v3384 = vpop.f32.mrb[0].mxu0
        %v3385 = vadd.f32 0.0, %v3384
        %v3386 = vpop.f32.mrb[0].mxu0
        %3387 = vmatprep.mubr.f32.mxu0 0.0
        %3388 = vmatmul.mubr.f32.gmra.mrb[0].mxu0 %v2965
        %v3389 = vpop.f32.mrb[0].mxu0
        %v3390 = vadd.f32 0.0, %v3389
        %v3391 = vpop.f32.mrb[0].mxu0
        %3392 = vmatprep.mubr.f32.mxu0 0.0
        %3393 = vmatmul.mubr.f32.gmra.mrb[0].mxu0 %v2966
        %v3394 = vpop.f32.mrb[0].mxu0
        %v3395 = vadd.f32 0.0, %v3394
        %v3396 = vpop.f32.mrb[0].mxu0
        %3397 = vmatprep.mubr.f32.mxu0 0.0
        %3398 = vmatmul.mubr.f32.gmra.mrb[0].mxu0 %v2967
        %v3399 = vpop.f32.mrb[0].mxu0
        %v3400 = vadd.f32 0.0, %v3399
        %v3401 = vpop.f32.mrb[0].mxu0
        %3402 = vmatprep.mubr.f32.mxu0 0.0
        %3403 = vmatmul.mubr.f32.gmra.mrb[0].mxu0 %v2968
        %v3404 = vpop.f32.mrb[0].mxu0
        %v3405 = vadd.f32 0.0, %v3404
        %v3406 = vpop.f32.mrb[0].mxu0
        %3407 = vmatprep.mubr.f32.mxu0 0.0
        %3408 = vmatmul.mubr.f32.gmra.mrb[0].mxu0 %v2969
        %v3409 = vpop.f32.mrb[0].mxu0
        %v3410 = vadd.f32 0.0, %v3409
        %v3411 = vpop.f32.mrb[0].mxu0
        %3412 = vmatprep.mubr.f32.mxu0 0.0
        %3413 = vmatmul.mubr.f32.gmra.mrb[0].mxu0 %v2970
        %v3414 = vpop.f32.mrb[0].mxu0
        %v3415 = vadd.f32 0.0, %v3414
        %v3416 = vpop.f32.mrb[0].mxu0
        %3417 = vmatprep.mubr.f32.mxu0 0.0
        %3418 = vmatmul.mubr.f32.gmra.mrb[0].mxu0 %v2971
        %v3419 = vpop.f32.mrb[0].mxu0
        %v3420 = vadd.f32 0.0, %v3419
        %v3421 = vpop.f32.mrb[0].mxu0
        %3422 = vdwg.mxu0
        %3423 = vmatprep.subr.mxu0 0.0
        %3424 = vmatpush1.msra.mxu0 %v519
        %3425 = vmatprep.subr.mxu0 0.0
        %3426 = vmatpush1.msra.mxu0 %v520
        %3427 = vmatprep.subr.mxu0 0.0
        %3428 = vmatpush1.msra.mxu0 %v521
        %3429 = vmatprep.subr.mxu0 0.0
        %3430 = vmatpush1.msra.mxu0 %v522
        %3431 = vmatprep.subr.mxu0 0.0
        %3432 = vmatpush1.msra.mxu0 %v523
        %3433 = vmatprep.subr.mxu0 0.0
        %3434 = vmatpush1.msra.mxu0 %v524
        %3435 = vmatprep.subr.mxu0 0.0
        %3436 = vmatpush1.msra.mxu0 %v525
        %3437 = vmatprep.subr.mxu0 0.0
        %3438 = vmatpush1.msra.mxu0 %v526
        %3439 = vmatprep.subr.mxu0 0.0
        %3440 = vmatpush1.msra.mxu0 %v527
        %3441 = vmatprep.subr.mxu0 0.0
        %3442 = vmatpush1.msra.mxu0 %v528
        %3443 = vmatprep.subr.mxu0 0.0
        %3444 = vmatpush1.msra.mxu0 %v529
        %3445 = vmatprep.subr.mxu0 0.0
        %3446 = vmatpush1.msra.mxu0 %v530
        %3447 = vmatprep.subr.mxu0 0.0
        %3448 = vmatpush1.msra.mxu0 %v531
        %3449 = vmatprep.subr.mxu0 0.0
        %3450 = vmatpush1.msra.mxu0 %v532
        %3451 = vmatprep.subr.mxu0 0.0
        %3452 = vmatpush1.msra.mxu0 %v533
        %3453 = vmatprep.subr.mxu0 0.0
        %3454 = vmatpush1.msra.mxu0 %v534
        %3455 = vmatprep.subr.mxu0 0.0
        %3456 = vmatpush1.msra.mxu0 0.0
        %3457 = vmatprep.subr.mxu0 0.0
        %3458 = vmatpush1.msra.mxu0 0.0
        %3459 = vmatprep.subr.mxu0 0.0
        %3460 = vmatpush1.msra.mxu0 0.0
        %3461 = vmatprep.subr.mxu0 0.0
        %3462 = vmatpush1.msra.mxu0 0.0
        %3463 = vmatprep.subr.mxu0 0.0
        %3464 = vmatpush1.msra.mxu0 0.0
        %3465 = vmatprep.subr.mxu0 0.0
        %3466 = vmatpush1.msra.mxu0 0.0
        %3467 = vmatprep.subr.mxu0 0.0
        %3468 = vmatpush1.msra.mxu0 0.0
        %3469 = vmatprep.subr.mxu0 0.0
        %3470 = vmatpush1.msra.mxu0 0.0
        %3471 = vmatprep.subr.mxu0 0.0
        %3472 = vmatpush1.msra.mxu0 0.0
        %3473 = vmatprep.subr.mxu0 0.0
        %3474 = vmatpush1.msra.mxu0 0.0
        %3475 = vmatprep.subr.mxu0 0.0
        %3476 = vmatpush1.msra.mxu0 0.0
        %3477 = vmatprep.subr.mxu0 0.0
        %3478 = vmatpush1.msra.mxu0 0.0
        %3479 = vmatprep.subr.mxu0 0.0
        %3480 = vmatpush1.msra.mxu0 0.0
        %3481 = vmatprep.subr.mxu0 0.0
        %3482 = vmatpush1.msra.mxu0 0.0
        %3483 = vmatprep.subr.mxu0 0.0
        %3484 = vmatpush1.msra.mxu0 0.0
        %3485 = vmatprep.subr.mxu0 0.0
        %3486 = vmatpush1.msra.mxu0 0.0
        %3487 = vmatprep.mubr.f32.mxu0 0.0
        %3488 = vmatmul.mubr.f32.gmra.mrb[0].mxu0 %v2972
        %v3489 = vpop.f32.mrb[0].mxu0
        %v3490 = vadd.f32 0.0, %v3489
        %v3491 = vpop.f32.mrb[0].mxu0
        %3492 = vmatprep.mubr.f32.mxu0 0.0
        %3493 = vmatmul.mubr.f32.gmra.mrb[0].mxu0 %v2973
        %v3494 = vpop.f32.mrb[0].mxu0
        %v3495 = vadd.f32 0.0, %v3494
        %v3496 = vpop.f32.mrb[0].mxu0
        %3497 = vmatprep.mubr.f32.mxu0 0.0
        %3498 = vmatmul.mubr.f32.gmra.mrb[0].mxu0 %v2974
        %v3499 = vpop.f32.mrb[0].mxu0
        %v3500 = vadd.f32 0.0, %v3499
        %v3501 = vpop.f32.mrb[0].mxu0
        %3502 = vmatprep.mubr.f32.mxu0 0.0
        %3503 = vmatmul.mubr.f32.gmra.mrb[0].mxu0 %v2975
        %v3504 = vpop.f32.mrb[0].mxu0
        %v3505 = vadd.f32 0.0, %v3504
        %v3506 = vpop.f32.mrb[0].mxu0
        %3507 = vmatprep.mubr.f32.mxu0 0.0
        %3508 = vmatmul.mubr.f32.gmra.mrb[0].mxu0 %v2976
        %v3509 = vpop.f32.mrb[0].mxu0
        %v3510 = vadd.f32 0.0, %v3509
        %v3511 = vpop.f32.mrb[0].mxu0
        %3512 = vmatprep.mubr.f32.mxu0 0.0
        %3513 = vmatmul.mubr.f32.gmra.mrb[0].mxu0 %v2977
        %v3514 = vpop.f32.mrb[0].mxu0
        %v3515 = vadd.f32 0.0, %v3514
        %v3516 = vpop.f32.mrb[0].mxu0
        %3517 = vmatprep.mubr.f32.mxu0 0.0
        %3518 = vmatmul.mubr.f32.gmra.mrb[0].mxu0 %v2978
        %v3519 = vpop.f32.mrb[0].mxu0
        %v3520 = vadd.f32 0.0, %v3519
        %v3521 = vpop.f32.mrb[0].mxu0
        %3522 = vmatprep.mubr.f32.mxu0 0.0
        %3523 = vmatmul.mubr.f32.gmra.mrb[0].mxu0 %v2979
        %v3524 = vpop.f32.mrb[0].mxu0
        %v3525 = vadd.f32 0.0, %v3524
        %v3526 = vpop.f32.mrb[0].mxu0
        %3527 = vmatprep.mubr.f32.mxu0 0.0
        %3528 = vmatmul.mubr.f32.gmra.mrb[0].mxu0 %v2980
        %v3529 = vpop.f32.mrb[0].mxu0
        %v3530 = vadd.f32 0.0, %v3529
        %v3531 = vpop.f32.mrb[0].mxu0
        %3532 = vmatprep.mubr.f32.mxu0 0.0
        %3533 = vmatmul.mubr.f32.gmra.mrb[0].mxu0 %v2981
        %v3534 = vpop.f32.mrb[0].mxu0
        %v3535 = vadd.f32 0.0, %v3534
        %v3536 = vpop.f32.mrb[0].mxu0
        %3537 = vmatprep.mubr.f32.mxu0 0.0
        %3538 = vmatmul.mubr.f32.gmra.mrb[0].mxu0 %v2982
        %v3539 = vpop.f32.mrb[0].mxu0
        %v3540 = vadd.f32 0.0, %v3539
        %v3541 = vpop.f32.mrb[0].mxu0
        %3542 = vmatprep.mubr.f32.mxu0 0.0
        %3543 = vmatmul.mubr.f32.gmra.mrb[0].mxu0 %v2983
        %v3544 = vpop.f32.mrb[0].mxu0
        %v3545 = vadd.f32 0.0, %v3544
        %v3546 = vpop.f32.mrb[0].mxu0
        %3547 = vmatprep.mubr.f32.mxu0 0.0
        %3548 = vmatmul.mubr.f32.gmra.mrb[0].mxu0 %v2984
        %v3549 = vpop.f32.mrb[0].mxu0
        %v3550 = vadd.f32 0.0, %v3549
        %v3551 = vpop.f32.mrb[0].mxu0
        %3552 = vmatprep.mubr.f32.mxu0 0.0
        %3553 = vmatmul.mubr.f32.gmra.mrb[0].mxu0 %v2985
        %v3554 = vpop.f32.mrb[0].mxu0
        %v3555 = vadd.f32 0.0, %v3554
        %v3556 = vpop.f32.mrb[0].mxu0
        %3557 = vmatprep.mubr.f32.mxu0 0.0
        %3558 = vmatmul.mubr.f32.gmra.mrb[0].mxu0 %v2986
        %v3559 = vpop.f32.mrb[0].mxu0
        %v3560 = vadd.f32 0.0, %v3559
        %v3561 = vpop.f32.mrb[0].mxu0
        %3562 = vmatprep.mubr.f32.mxu0 0.0
        %3563 = vmatmul.mubr.f32.gmra.mrb[0].mxu0 %v2987
        %v3564 = vpop.f32.mrb[0].mxu0
        %v3565 = vadd.f32 0.0, %v3564
        %v3566 = vpop.f32.mrb[0].mxu0
        %3567 = vdwg.mxu0
        %3568 = vst [vmem:[%s338] sm:$0xff] %v3055
        %3569 = vst [vmem:[%s338 + $0x8] sm:$0xff] %v3060
        %3570 = vst [vmem:[%s338 + $0x10] sm:$0xff] %v3065
        %3571 = vst [vmem:[%s338 + $0x18] sm:$0xff] %v3070
        %3572 = vst [vmem:[%s338 + $0x20] sm:$0xff] %v3075
        %3573 = vst [vmem:[%s338 + $0x28] sm:$0xff] %v3080
        %3574 = vst [vmem:[%s338 + $0x30] sm:$0xff] %v3085
        %3575 = vst [vmem:[%s338 + $0x38] sm:$0xff] %v3090
        %3576 = vst [vmem:[%s338 + $0x40] sm:$0xff] %v3095
        %3577 = vst [vmem:[%s338 + $0x48] sm:$0xff] %v3100
        %3578 = vst [vmem:[%s338 + $0x50] sm:$0xff] %v3105
        %3579 = vst [vmem:[%s338 + $0x58] sm:$0xff] %v3110
        %3580 = vst [vmem:[%s338 + $0x60] sm:$0xff] %v3115
        %3581 = vst [vmem:[%s338 + $0x68] sm:$0xff] %v3120
        %3582 = vst [vmem:[%s338 + $0x70] sm:$0xff] %v3125
        %3583 = vst [vmem:[%s338 + $0x78] sm:$0xff] %v3130
        %3584 = vst [vmem:[%s338 + $0x80] sm:$0xff] %v3200
        %3585 = vst [vmem:[%s338 + $0x88] sm:$0xff] %v3205
        %3586 = vst [vmem:[%s338 + $0x90] sm:$0xff] %v3210
        %3587 = vst [vmem:[%s338 + $0x98] sm:$0xff] %v3215
        %3588 = vst [vmem:[%s338 + $0xa0] sm:$0xff] %v3220
        %3589 = vst [vmem:[%s338 + $0xa8] sm:$0xff] %v3225
        %3590 = vst [vmem:[%s338 + $0xb0] sm:$0xff] %v3230
        %3591 = vst [vmem:[%s338 + $0xb8] sm:$0xff] %v3235
        %3592 = vst [vmem:[%s338 + $0xc0] sm:$0xff] %v3240
        %3593 = vst [vmem:[%s338 + $0xc8] sm:$0xff] %v3245
        %3594 = vst [vmem:[%s338 + $0xd0] sm:$0xff] %v3250
        %3595 = vst [vmem:[%s338 + $0xd8] sm:$0xff] %v3255
        %3596 = vst [vmem:[%s338 + $0xe0] sm:$0xff] %v3260
        %3597 = vst [vmem:[%s338 + $0xe8] sm:$0xff] %v3265
        %3598 = vst [vmem:[%s338 + $0xf0] sm:$0xff] %v3270
        %3599 = vst [vmem:[%s338 + $0xf8] sm:$0xff] %v3275
        %3600 = vst [vmem:[%s338 + $0x100] sm:$0xff] %v3345
        %3601 = vst [vmem:[%s338 + $0x108] sm:$0xff] %v3350
        %3602 = vst [vmem:[%s338 + $0x110] sm:$0xff] %v3355
        %3603 = vst [vmem:[%s338 + $0x118] sm:$0xff] %v3360
        %3604 = vst [vmem:[%s338 + $0x120] sm:$0xff] %v3365
        %3605 = vst [vmem:[%s338 + $0x128] sm:$0xff] %v3370
        %3606 = vst [vmem:[%s338 + $0x130] sm:$0xff] %v3375
        %3607 = vst [vmem:[%s338 + $0x138] sm:$0xff] %v3380
        %3608 = vst [vmem:[%s338 + $0x140] sm:$0xff] %v3385
        %3609 = vst [vmem:[%s338 + $0x148] sm:$0xff] %v3390
        %3610 = vst [vmem:[%s338 + $0x150] sm:$0xff] %v3395
        %3611 = vst [vmem:[%s338 + $0x158] sm:$0xff] %v3400
        %3612 = vst [vmem:[%s338 + $0x160] sm:$0xff] %v3405
        %3613 = vst [vmem:[%s338 + $0x168] sm:$0xff] %v3410
        %3614 = vst [vmem:[%s338 + $0x170] sm:$0xff] %v3415
        %3615 = vst [vmem:[%s338 + $0x178] sm:$0xff] %v3420
        %3616 = vst [vmem:[%s338 + $0x180] sm:$0xff] %v3490
        %3617 = vst [vmem:[%s338 + $0x188] sm:$0xff] %v3495
        %3618 = vst [vmem:[%s338 + $0x190] sm:$0xff] %v3500
        %3619 = vst [vmem:[%s338 + $0x198] sm:$0xff] %v3505
        %3620 = vst [vmem:[%s338 + $0x1a0] sm:$0xff] %v3510
        %3621 = vst [vmem:[%s338 + $0x1a8] sm:$0xff] %v3515
        %3622 = vst [vmem:[%s338 + $0x1b0] sm:$0xff] %v3520
        %3623 = vst [vmem:[%s338 + $0x1b8] sm:$0xff] %v3525
        %3624 = vst [vmem:[%s338 + $0x1c0] sm:$0xff] %v3530
        %3625 = vst [vmem:[%s338 + $0x1c8] sm:$0xff] %v3535
        %3626 = vst [vmem:[%s338 + $0x1d0] sm:$0xff] %v3540
        %3627 = vst [vmem:[%s338 + $0x1d8] sm:$0xff] %v3545
        %3628 = vst [vmem:[%s338 + $0x1e0] sm:$0xff] %v3550
        %3629 = vst [vmem:[%s338 + $0x1e8] sm:$0xff] %v3555
        %3630 = vst [vmem:[%s338 + $0x1f0] sm:$0xff] %v3560
        %3631 = vst [vmem:[%s338 + $0x1f8] sm:$0xff] %v3565
        %s3632 = sand.u32 %s154, 1
        %s3633 = scalar_lea.sflag [#allocation6], %s3632
        %s3634 = sand.u32 %s154, 1
        %s3635 = smul.addr %s3634, 512
        %s3636 = scalar_lea.vmem [#allocation12], %s3635
        // Predicated region
        $region53: #{tpu_custom_call.1} parent=35 // pred_check
          %p3637 = pneg %p164
        $region54: #{tpu_custom_call.1} parent=35 // pred_check_branch
          %3639 = sbr.rel (%p3637) target = $region56
        $region55: #{tpu_custom_call.1} parent=35 // pred_region
          %s3640 = smul.u32 4, %s32
          %s3642 = ssub.s32 8192, 8192
          %3643 = vsyncadd %s3633, %s3642
          %s3644 = smul.addr %s3640, 16
          %s3645 = smul.addr %s31, 128
          %s3646 = sadd.s32 %s3644, %s3645
          %s3647 = smul.addr %s3646, 128
          %s3648 = scalar_lea.hbm %s5, %s3647
          %s3649 = sshll.u32 %s3636, 4
          %s3650 = int_to_ptr.vmem [resolvable:$true] %s3649
          %3655 = dma.vmem_to_hbm [thread:$0]  %s3650, 8192, %s3648, %s3633, 128, 128, 8
        $region56: #{tpu_custom_call.1} parent=35 // pred_fallthru
          _
      $region36: #{tpu_custom_call.1} parent=5 // pred_fallthru
        _
      %p3656 = scmp.le.s32.totalorder 2, %s22
      // Predicated region
      $region57: #{tpu_custom_call.1} parent=5 // pred_check
        %p3657 = pneg %p3656
      $region58: #{tpu_custom_call.1} parent=5 // pred_check_branch
        %3659 = sbr.rel (%p3657) target = $region60
      $region59: #{tpu_custom_call.1} parent=5 // pred_region
        %s3660 = ssub.s32 %s22, 2
        // Predicated region
        $region61: #{tpu_custom_call.1} parent=59 // pred_check
          %p3661 = pneg %p170
        $region62: #{tpu_custom_call.1} parent=59 // pred_check_branch
          %3663 = sbr.rel (%p3661) target = $region64
        $region63: #{tpu_custom_call.1} parent=59 // pred_region
          %s3664 = sand.u32 %s155, 1
          %s3665 = scalar_lea.sflag [#allocation6], %s3664
          %s3666 = sand.u32 %s155, 1
          %s3667 = smul.addr %s3666, 512
          %s3668 = scalar_lea.vmem [#allocation12], %s3667
          %3669 = dma.done %s3665, 8192
        $region64: #{tpu_custom_call.1} parent=59 // pred_fallthru
          _
      $region60: #{tpu_custom_call.1} parent=5 // pred_fallthru
        _
    $region6: #{tpu_custom_call.1} parent=1 // loop_footer
      %s26 = sadd.s32 1, %s22
    $region7: #{tpu_custom_call.1} parent=1 // loop_footer_branch
      %21 = sbr.rel target = $region3
    $region8: #{tpu_custom_call.1} parent=1 // loop_exit
      _
    %3670 = vsyncpa [#allocation5], 1
    %s3671 = scalar_lea.sflag [#allocation5], 1
    %3672 = vsyncpa %s3671, 1
    %3673 = vsyncpa [#allocation8], 1
    %s3674 = scalar_lea.sflag [#allocation8], 1
    %3675 = vsyncpa %s3674, 1
    %3676 = vsyncpa [#allocation11], 1
    %3677 = vsyncpa [#allocation6], 1
    %s3678 = scalar_lea.sflag [#allocation6], 1
    %3679 = vsyncpa %s3678, 1

</llo_original>
